<compile_context>
chip_gen: v5e
topology: v5e:2x2
jax: 0.10.0
libtpu: 0.0.40
codegen_flags: <defaults>
</compile_context>

<pallas_src>
import jax
import jax.numpy as jnp
from jax.experimental import pallas as pl
from jax.experimental.pallas import tpu as pltpu


# ---------------------------------------------------------------------------
# Pallas kernel (fused MLP forward for one batch row-tile)
# ---------------------------------------------------------------------------

def _make_mlp_kernel(num_hidden, apply_softmax, has_output_layer, approx_softmax):
    """Build a fused MLP kernel body.

    Ref order: x_ref, (w1, b1, ..., wH, bH, [wo_t, bo]), out_ref
    Hidden weights are bf16 (MXU operands); biases f32; the output-layer weight
    arrives pre-transposed as (1, d_in) f32 and is applied on the VPU/XLU.
    All intermediates stay VMEM/vreg resident.
    """

    def kernel(x_ref, *refs):
        out_ref = refs[-1]
        prm = refs[:-1]

        h = x_ref[...]                      # no unconditional f32 upcast of the input
        idx = 0
        for _ in range(num_hidden):
            w = prm[idx][...]
            b = prm[idx + 1][...]
            idx += 2
            # TODO(synk): training-mode nn.Dropout (random masking via
            # pltpu.prng_random_bits) not implemented; inference / p=0 => identity.
            lhs = h.astype(w.dtype)         # bf16 operands -> full MXU rate
            h = jnp.dot(lhs, w, preferred_element_type=jnp.float32) + b
            if apply_softmax:
                # elementwise softmax math kept in f32 (v5e VPU/EUP: no bf16)
                m = jnp.max(h, axis=-1, keepdims=True)
                e = jnp.exp(h - m)
                s = jnp.sum(e, axis=-1, keepdims=True)
                h = e * pl.reciprocal(s, approx=approx_softmax)   # EUP, not VALU divide

        if has_output_layer:
            # (d_in -> 1) projection on VPU + XLU row-reduce: an N=1 matmul would
            # use 1 of 256 MXU columns and drain a nearly empty result FIFO.
            w_t = prm[idx][...]             # (1, d_in), f32
            b = prm[idx + 1][...]           # (1, 1),   f32
            h = jnp.sum(h.astype(jnp.float32) * w_t, axis=-1, keepdims=True) + b
            # note: the (tm, 1) output tile necessarily produces masked partial
            # stores (out_dim=1 < 128 lanes); unavoidable given the (B, 1) output.

        out_ref[...] = h.astype(out_ref.dtype)

    return kernel


# ---------------------------------------------------------------------------
# Row-tile selection (VMEM-budgeted, >= 2 grid steps for megacore)
# ---------------------------------------------------------------------------

def _pick_row_tile(B, D0, out_dim, max_width, weight_bytes, io_itemsize,
                   budget_bytes):
    # candidates: divisors of B, multiples of 16 (safe sublane granularity for
    # f32 and bf16 inputs), capped at 1024 (>= ~85% of HBM roofline by 512).
    cand = [t for t in range(16, min(B, 1024) + 1, 16) if B % t == 0]
    if not cand:
        cand = [B]                          # full-array block is always legal

    best = None
    for tm in sorted(set(cand), reverse=True):
        fp = (weight_bytes                              # single-buffered params
              + 2 * tm * D0 * io_itemsize               # double-buffered x tile
              + 2 * tm * out_dim * io_itemsize          # double-buffered out tile
              + 3 * tm * max_width * 4)                 # f32 intermediates headroom
        if fp <= budget_bytes:
            best = tm
            break
    if best is None:
        best = min(cand)

    # Ensure >= 2 grid steps so the "parallel" axis shards across the two v7x
    # TensorCores and the pipeline actually overlaps DMA with compute.
    if best == B and B % 2 == 0 and (B // 2) % 16 == 0:
        best = B // 2
    return best


# ---------------------------------------------------------------------------
# Fused forward: one pallas_call over row tiles of the batch
# ---------------------------------------------------------------------------

def mlp_forward(x, weights, biases, *, apply_softmax, has_output_layer,
                approx_softmax=True, tm=None, single_buffer_weights=True):
    B, D0 = x.shape
    num_hidden = len(weights) - (1 if has_output_layer else 0)
    out_dim = 1 if has_output_layer else weights[-1].shape[-1]

    # Assemble parameters in kernel order. The output-layer weight is passed
    # transposed (1, d_in) and in f32 so it broadcasts lane-dense on the VPU.
    params = []
    for li, (w, b) in enumerate(zip(weights, biases)):
        if has_output_layer and li == len(weights) - 1:
            params += [w.reshape(1, -1).astype(jnp.float32), b.astype(jnp.float32)]
        else:
            params += [w, b]

    max_width = max([w.shape[-1] for w in weights[:num_hidden]] + [D0, out_dim])
    weight_bytes = sum(int(p.size) * p.dtype.itemsize for p in params)
    io_itemsize = x.dtype.itemsize

    if tm is None:
        tm = _pick_row_tile(B, D0, out_dim, max_width, weight_bytes, io_itemsize,
                            budget_bytes=24 * 1024 * 1024)
    assert B % tm == 0, "batch must be a multiple of the row tile"

    # VMEM footprint -> scoped limit (default is only 16/32 MiB; v7x physical is 64 MiB).
    wbuf = 1 if single_buffer_weights else 2
    footprint = (wbuf * weight_bytes
                 + 2 * tm * D0 * io_itemsize
                 + 2 * tm * out_dim * io_itemsize
                 + 3 * tm * max_width * 4)
    vmem_limit = int(min(48 * 2**20, max(16 * 2**20, 2 * footprint)))

    # Advisory cost estimate for XLA's scheduler.
    flops = 2 * B * sum(int(w.shape[0]) * int(w.shape[1]) for w in weights)
    transcendentals = (B * sum(int(w.shape[1]) for w in weights[:num_hidden])
                       if apply_softmax else 0)
    bytes_accessed = (int(x.size) * io_itemsize + B * out_dim * io_itemsize
                      + weight_bytes)
    cost = pl.CostEstimate(flops=flops, transcendentals=transcendentals,
                           bytes_accessed=bytes_accessed)

    kernel = _make_mlp_kernel(num_hidden, apply_softmax, has_output_layer,
                              approx_softmax)

    def build_and_run(single_buffer):
        # Constant-index weight/bias blocks: single pipeline buffer (never re-fetched).
        resident_kw = dict(pipeline_mode=pl.Buffered(1)) if single_buffer else {}
        in_specs = [pl.BlockSpec((tm, D0), lambda i: (i, 0))]      # row tile of x
        for p in params:
            in_specs.append(pl.BlockSpec(p.shape, lambda i: (0, 0), **resident_kw))

        call = pl.pallas_call(
            kernel,
            out_shape=jax.ShapeDtypeStruct((B, out_dim), x.dtype),
            grid_spec=pltpu.PrefetchScalarGridSpec(
                num_scalar_prefetch=0,
                grid=(B // tm,),
                in_specs=in_specs,
                out_specs=pl.BlockSpec((tm, out_dim), lambda i: (i, 0)),
            ),
            compiler_params=pltpu.CompilerParams(
                dimension_semantics=("parallel",),
                vmem_limit_bytes=vmem_limit),
            cost_estimate=cost,
        )
        return jax.block_until_ready(call(x, *params))

    if single_buffer_weights:
        try:
            return build_and_run(True)
        except Exception:
            # pipeline_mode=Buffered(1) unsupported on this build -> default buffering
            pass
    return build_and_run(False)


# ---------------------------------------------------------------------------
# MLP module (parameters + forward glue in plain JAX)
# ---------------------------------------------------------------------------

class MLP:
    """JAX/Pallas port of the PyTorch MLP. Per hidden dim:
    Dropout(p) -> Linear -> (Softmax(dim=1) only if activation=='softmax');
    optional final Linear(d, 1)."""

    def __init__(self, input_dim, output_layer=False, dims=None, dropout=0.0,
                 activation='relu', *, key, param_dtype=jnp.bfloat16):
        if dims is None:
            dims = []
        self.dims = list(dims)
        self.output_layer = output_layer
        self.dropout = dropout
        self.activation = activation

        layer_dims = list(dims) + ([1] if output_layer else [])
        self.weights, self.biases = [], []
        d_in = input_dim
        if layer_dims:
            keys = jax.random.split(key, len(layer_dims))
            for li, (k, d_out) in enumerate(zip(keys, layer_dims)):
                kw, kb = jax.random.split(k)
                bound = 1.0 / (d_in ** 0.5)       # PyTorch nn.Linear default init range
                w = jax.random.uniform(kw, (d_in, d_out), jnp.float32, -bound, bound)
                b = jax.random.uniform(kb, (1, d_out), jnp.float32, -bound, bound)
                is_out = output_layer and li == len(layer_dims) - 1
                # Hidden weights in bf16: full MXU rate + half the DMA/VMEM bytes.
                # The tiny (d, 1) output weight stays f32 (applied on the VPU).
                self.weights.append(w if is_out else w.astype(param_dtype))
                self.biases.append(b)             # biases stay f32 (VPU adds in f32)
                d_in = d_out
        self.out_dim = d_in

    def forward(self, x):
        if not self.weights:          # dims=[] and no output layer: identity Sequential
            return x
        return mlp_forward(
            x, self.weights, self.biases,
            apply_softmax=(self.activation == 'softmax'),
            has_output_layer=self.output_layer)

    def reference(self, x):
        """Pure-JAX reference with matching (bf16-operand, f32-accum) precision."""
        h = x
        n_hidden = len(self.dims)
        for idx, (w, b) in enumerate(zip(self.weights, self.biases)):
            h = jnp.dot(h.astype(w.dtype), w, preferred_element_type=jnp.float32) + b
            if idx < n_hidden and self.activation == 'softmax':
                h = jax.nn.softmax(h, axis=-1)
        return h


# ---------------------------------------------------------------------------
# main
# ---------------------------------------------------------------------------

if __name__ == "__main__":
    key = jax.random.PRNGKey(0)
    k_x, k_m1, k_m2 = jax.random.split(key, 3)

    # 256-multiple widths fill the 2x256x256 MXU on v6e/v7x; batch 512 gives a
    # multi-step "parallel" grid (megacore sharding + DMA/compute overlap).
    batch, input_dim = 512, 256
    dims = [256, 256]

    x = jax.random.normal(k_x, (batch, input_dim), jnp.float32)

    # Config 1: activation='relu' (reference inserts NO activation layer for
    # anything but 'softmax') + output_layer=True  -> output (batch, 1).
    mlp1 = MLP(input_dim, output_layer=True, dims=dims, dropout=0.0,
               activation='relu', key=k_m1)
    y1 = mlp1.forward(x)

    # Config 2: activation='softmax', no output layer -> output (batch, dims[-1]).
    mlp2 = MLP(input_dim, output_layer=False, dims=dims, dropout=0.0,
               activation='softmax', key=k_m2)
    y2 = mlp2.forward(x)

    jax.block_until_ready((y1, y2))

    # sanity checks against pure-JAX references (same bf16/f32 mixed precision)
    ref1 = mlp1.reference(x)
    ref2 = mlp2.reference(x)
    assert y1.shape == (batch, 1)
    assert y2.shape == (batch, dims[-1])
    assert jnp.allclose(y1, ref1, atol=2e-2, rtol=2e-2)
    assert jnp.allclose(y2, ref2, atol=2e-2, rtol=2e-2)

    print("KERNEL_OK")
</pallas_src>

<mosaic_0001>
module attributes {stable_mosaic.version = 11 : i64} {
  func.func @kernel(%arg0: i32, %arg1: memref<256x256xf32, #tpu.memory_space<vmem>>, %arg2: memref<256x256xbf16, #tpu.memory_space<vmem>>, %arg3: memref<1x256xf32, #tpu.memory_space<vmem>>, %arg4: memref<256x256xbf16, #tpu.memory_space<vmem>>, %arg5: memref<1x256xf32, #tpu.memory_space<vmem>>, %arg6: memref<1x256xf32, #tpu.memory_space<vmem>>, %arg7: memref<1x1xf32, #tpu.memory_space<vmem>>, %arg8: memref<256x1xf32, #tpu.memory_space<vmem>>) attributes {dimension_semantics = [#tpu.dimension_semantics<parallel>], iteration_bounds = array<i64: 2>, scalar_prefetch = 0 : i64, scratch_operands = 0 : i64, tpu.core_type = #tpu.core_type<tc>, window_params = [{transform_indices = @transform_0, window_bounds = array<i64: 256, 256>}, {pipeline_mode = #tpu.pipeline_mode<synchronous>, transform_indices = @transform_1, window_bounds = array<i64: 256, 256>}, {pipeline_mode = #tpu.pipeline_mode<synchronous>, transform_indices = @transform_2, window_bounds = array<i64: 1, 256>}, {pipeline_mode = #tpu.pipeline_mode<synchronous>, transform_indices = @transform_3, window_bounds = array<i64: 256, 256>}, {pipeline_mode = #tpu.pipeline_mode<synchronous>, transform_indices = @transform_4, window_bounds = array<i64: 1, 256>}, {pipeline_mode = #tpu.pipeline_mode<synchronous>, transform_indices = @transform_5, window_bounds = array<i64: 1, 256>}, {pipeline_mode = #tpu.pipeline_mode<synchronous>, transform_indices = @transform_6, window_bounds = array<i64: 1, 1>}, {transform_indices = @transform_7, window_bounds = array<i64: 256, 1>}]} {
    %c0 = arith.constant 0 : index
    %c0_0 = arith.constant 0 : index
    %0 = vector.load %arg1[%c0, %c0_0] : memref<256x256xf32, #tpu.memory_space<vmem>>, vector<256x256xf32>
    %c0_1 = arith.constant 0 : index
    %c0_2 = arith.constant 0 : index
    %1 = vector.load %arg2[%c0_1, %c0_2] : memref<256x256xbf16, #tpu.memory_space<vmem>>, vector<256x256xbf16>
    %c0_3 = arith.constant 0 : index
    %c0_4 = arith.constant 0 : index
    %2 = vector.load %arg3[%c0_3, %c0_4] : memref<1x256xf32, #tpu.memory_space<vmem>>, vector<1x256xf32>
    %3 = arith.truncf %0 : vector<256x256xf32> to vector<256x256xbf16>
    %cst = arith.constant dense<0.000000e+00> : vector<256x256xf32>
    %4 = tpu.matmul %3, %1, %cst {dimension_numbers = #tpu.dot_dimension_numbers<[1], [0], [0], [1], [0, 0, 1, 1], [], []>} : vector<256x256xbf16>, vector<256x256xbf16>, vector<256x256xf32> -> vector<256x256xf32>
    %5 = vector.broadcast %2 : vector<1x256xf32> to vector<256x256xf32>
    %6 = arith.addf %4, %5 : vector<256x256xf32>
    %c0_5 = arith.constant 0 : index
    %c0_6 = arith.constant 0 : index
    %7 = vector.load %arg4[%c0_5, %c0_6] : memref<256x256xbf16, #tpu.memory_space<vmem>>, vector<256x256xbf16>
    %c0_7 = arith.constant 0 : index
    %c0_8 = arith.constant 0 : index
    %8 = vector.load %arg5[%c0_7, %c0_8] : memref<1x256xf32, #tpu.memory_space<vmem>>, vector<1x256xf32>
    %9 = arith.truncf %6 : vector<256x256xf32> to vector<256x256xbf16>
    %cst_9 = arith.constant dense<0.000000e+00> : vector<256x256xf32>
    %10 = tpu.matmul %9, %7, %cst_9 {dimension_numbers = #tpu.dot_dimension_numbers<[1], [0], [0], [1], [0, 0, 1, 1], [], []>} : vector<256x256xbf16>, vector<256x256xbf16>, vector<256x256xf32> -> vector<256x256xf32>
    %11 = vector.broadcast %8 : vector<1x256xf32> to vector<256x256xf32>
    %12 = arith.addf %10, %11 : vector<256x256xf32>
    %c0_10 = arith.constant 0 : index
    %c0_11 = arith.constant 0 : index
    %13 = vector.load %arg6[%c0_10, %c0_11] : memref<1x256xf32, #tpu.memory_space<vmem>>, vector<1x256xf32>
    %c0_12 = arith.constant 0 : index
    %c0_13 = arith.constant 0 : index
    %14 = vector.load %arg7[%c0_12, %c0_13] : memref<1x1xf32, #tpu.memory_space<vmem>>, vector<1x1xf32>
    %15 = vector.broadcast %13 : vector<1x256xf32> to vector<256x256xf32>
    %16 = arith.mulf %12, %15 : vector<256x256xf32>
    %cst_14 = arith.constant dense<0.000000e+00> : vector<256xf32>
    %17 = vector.multi_reduction <add>, %16, %cst_14 [1] : vector<256x256xf32> to vector<256xf32>
    %18 = vector.shape_cast %17 : vector<256xf32> to vector<256x1xf32>
    %19 = vector.broadcast %14 : vector<1x1xf32> to vector<256x1xf32>
    %20 = arith.addf %18, %19 : vector<256x1xf32>
    %c0_15 = arith.constant 0 : index
    %c0_16 = arith.constant 0 : index
    %21 = vector.load %arg8[%c0_15, %c0_16] : memref<256x1xf32, #tpu.memory_space<vmem>>, vector<256x1xf32>
    tpu.vector_store %arg8[%c0_15, %c0_16], %20 {strides = array<i32>} : memref<256x1xf32, #tpu.memory_space<vmem>>, vector<256x1xf32>,
    return
  }
  func.func @transform_0(%arg0: i32) -> (i32, i32) {
    %c0_i32 = arith.constant 0 : i32
    %c0_i32_0 = arith.constant 0 : i32
    return %arg0, %c0_i32 : i32, i32
  }
  func.func @transform_1(%arg0: i32) -> (i32, i32) {
    %c0_i32 = arith.constant 0 : i32
    %c0_i32_0 = arith.constant 0 : i32
    %c0_i32_1 = arith.constant 0 : i32
    return %c0_i32, %c0_i32_0 : i32, i32
  }
  func.func @transform_2(%arg0: i32) -> (i32, i32) {
    %c0_i32 = arith.constant 0 : i32
    %c0_i32_0 = arith.constant 0 : i32
    %c0_i32_1 = arith.constant 0 : i32
    return %c0_i32, %c0_i32_0 : i32, i32
  }
  func.func @transform_3(%arg0: i32) -> (i32, i32) {
    %c0_i32 = arith.constant 0 : i32
    %c0_i32_0 = arith.constant 0 : i32
    %c0_i32_1 = arith.constant 0 : i32
    return %c0_i32, %c0_i32_0 : i32, i32
  }
  func.func @transform_4(%arg0: i32) -> (i32, i32) {
    %c0_i32 = arith.constant 0 : i32
    %c0_i32_0 = arith.constant 0 : i32
    %c0_i32_1 = arith.constant 0 : i32
    return %c0_i32, %c0_i32_0 : i32, i32
  }
  func.func @transform_5(%arg0: i32) -> (i32, i32) {
    %c0_i32 = arith.constant 0 : i32
    %c0_i32_0 = arith.constant 0 : i32
    %c0_i32_1 = arith.constant 0 : i32
    return %c0_i32, %c0_i32_0 : i32, i32
  }
  func.func @transform_6(%arg0: i32) -> (i32, i32) {
    %c0_i32 = arith.constant 0 : i32
    %c0_i32_0 = arith.constant 0 : i32
    %c0_i32_1 = arith.constant 0 : i32
    return %c0_i32, %c0_i32_0 : i32, i32
  }
  func.func @transform_7(%arg0: i32) -> (i32, i32) {
    %c0_i32 = arith.constant 0 : i32
    %c0_i32_0 = arith.constant 0 : i32
    return %arg0, %c0_i32 : i32, i32
  }
}

module attributes {stable_mosaic.version = 11 : i64} {
  func.func @kernel(%arg0: i32, %arg1: memref<256x256xf32, #tpu.memory_space<vmem>>, %arg2: memref<256x256xbf16, #tpu.memory_space<vmem>>, %arg3: memref<1x256xf32, #tpu.memory_space<vmem>>, %arg4: memref<256x256xbf16, #tpu.memory_space<vmem>>, %arg5: memref<1x256xf32, #tpu.memory_space<vmem>>, %arg6: memref<1x256xf32, #tpu.memory_space<vmem>>, %arg7: memref<1x1xf32, #tpu.memory_space<vmem>>, %arg8: memref<256x1xf32, #tpu.memory_space<vmem>>) attributes {dimension_semantics = [#tpu.dimension_semantics<parallel>], iteration_bounds = array<i64: 2>, scalar_prefetch = 0 : i64, scratch_operands = 0 : i64, tpu.core_type = #tpu.core_type<tc>, window_params = [{transform_indices = @transform_0, window_bounds = array<i64: 256, 256>}, {pipeline_mode = #tpu.pipeline_mode<synchronous>, transform_indices = @transform_1, window_bounds = array<i64: 256, 256>}, {pipeline_mode = #tpu.pipeline_mode<synchronous>, transform_indices = @transform_2, window_bounds = array<i64: 1, 256>}, {pipeline_mode = #tpu.pipeline_mode<synchronous>, transform_indices = @transform_3, window_bounds = array<i64: 256, 256>}, {pipeline_mode = #tpu.pipeline_mode<synchronous>, transform_indices = @transform_4, window_bounds = array<i64: 1, 256>}, {pipeline_mode = #tpu.pipeline_mode<synchronous>, transform_indices = @transform_5, window_bounds = array<i64: 1, 256>}, {pipeline_mode = #tpu.pipeline_mode<synchronous>, transform_indices = @transform_6, window_bounds = array<i64: 1, 1>}, {transform_indices = @transform_7, window_bounds = array<i64: 256, 1>}]} {
    %c0 = arith.constant 0 : index
    %c0_0 = arith.constant 0 : index
    %0 = vector.load %arg1[%c0, %c0_0] : memref<256x256xf32, #tpu.memory_space<vmem>>, vector<256x256xf32>
    %c0_1 = arith.constant 0 : index
    %c0_2 = arith.constant 0 : index
    %1 = vector.load %arg2[%c0_1, %c0_2] : memref<256x256xbf16, #tpu.memory_space<vmem>>, vector<256x256xbf16>
    %c0_3 = arith.constant 0 : index
    %c0_4 = arith.constant 0 : index
    %2 = vector.load %arg3[%c0_3, %c0_4] : memref<1x256xf32, #tpu.memory_space<vmem>>, vector<1x256xf32>
    %3 = arith.truncf %0 : vector<256x256xf32> to vector<256x256xbf16>
    %cst = arith.constant dense<0.000000e+00> : vector<256x256xf32>
    %4 = tpu.matmul %3, %1, %cst {dimension_numbers = #tpu.dot_dimension_numbers<[1], [0], [0], [1], [0, 0, 1, 1], [], []>} : vector<256x256xbf16>, vector<256x256xbf16>, vector<256x256xf32> -> vector<256x256xf32>
    %5 = vector.broadcast %2 : vector<1x256xf32> to vector<256x256xf32>
    %6 = arith.addf %4, %5 : vector<256x256xf32>
    %c0_5 = arith.constant 0 : index
    %c0_6 = arith.constant 0 : index
    %7 = vector.load %arg4[%c0_5, %c0_6] : memref<256x256xbf16, #tpu.memory_space<vmem>>, vector<256x256xbf16>
    %c0_7 = arith.constant 0 : index
    %c0_8 = arith.constant 0 : index
    %8 = vector.load %arg5[%c0_7, %c0_8] : memref<1x256xf32, #tpu.memory_space<vmem>>, vector<1x256xf32>
    %9 = arith.truncf %6 : vector<256x256xf32> to vector<256x256xbf16>
    %cst_9 = arith.constant dense<0.000000e+00> : vector<256x256xf32>
    %10 = tpu.matmul %9, %7, %cst_9 {dimension_numbers = #tpu.dot_dimension_numbers<[1], [0], [0], [1], [0, 0, 1, 1], [], []>} : vector<256x256xbf16>, vector<256x256xbf16>, vector<256x256xf32> -> vector<256x256xf32>
    %11 = vector.broadcast %8 : vector<1x256xf32> to vector<256x256xf32>
    %12 = arith.addf %10, %11 : vector<256x256xf32>
    %c0_10 = arith.constant 0 : index
    %c0_11 = arith.constant 0 : index
    %13 = vector.load %arg6[%c0_10, %c0_11] : memref<1x256xf32, #tpu.memory_space<vmem>>, vector<1x256xf32>
    %c0_12 = arith.constant 0 : index
    %c0_13 = arith.constant 0 : index
    %14 = vector.load %arg7[%c0_12, %c0_13] : memref<1x1xf32, #tpu.memory_space<vmem>>, vector<1x1xf32>
    %15 = vector.broadcast %13 : vector<1x256xf32> to vector<256x256xf32>
    %16 = arith.mulf %12, %15 : vector<256x256xf32>
    %cst_14 = arith.constant dense<0.000000e+00> : vector<256xf32>
    %17 = vector.multi_reduction <add>, %16, %cst_14 [1] : vector<256x256xf32> to vector<256xf32>
    %18 = vector.shape_cast %17 : vector<256xf32> to vector<256x1xf32>
    %19 = vector.broadcast %14 : vector<1x1xf32> to vector<256x1xf32>
    %20 = arith.addf %18, %19 : vector<256x1xf32>
    %c0_15 = arith.constant 0 : index
    %c0_16 = arith.constant 0 : index
    %21 = vector.load %arg8[%c0_15, %c0_16] : memref<256x1xf32, #tpu.memory_space<vmem>>, vector<256x1xf32>
    tpu.vector_store %arg8[%c0_15, %c0_16], %20 {strides = array<i32>} : memref<256x1xf32, #tpu.memory_space<vmem>>, vector<256x1xf32>,
    return
  }
  func.func @transform_0(%arg0: i32) -> (i32, i32) {
    %c0_i32 = arith.constant 0 : i32
    %c0_i32_0 = arith.constant 0 : i32
    return %arg0, %c0_i32 : i32, i32
  }
  func.func @transform_1(%arg0: i32) -> (i32, i32) {
    %c0_i32 = arith.constant 0 : i32
    %c0_i32_0 = arith.constant 0 : i32
    %c0_i32_1 = arith.constant 0 : i32
    return %c0_i32, %c0_i32_0 : i32, i32
  }
  func.func @transform_2(%arg0: i32) -> (i32, i32) {
    %c0_i32 = arith.constant 0 : i32
    %c0_i32_0 = arith.constant 0 : i32
    %c0_i32_1 = arith.constant 0 : i32
    return %c0_i32, %c0_i32_0 : i32, i32
  }
  func.func @transform_3(%arg0: i32) -> (i32, i32) {
    %c0_i32 = arith.constant 0 : i32
    %c0_i32_0 = arith.constant 0 : i32
    %c0_i32_1 = arith.constant 0 : i32
    return %c0_i32, %c0_i32_0 : i32, i32
  }
  func.func @transform_4(%arg0: i32) -> (i32, i32) {
    %c0_i32 = arith.constant 0 : i32
    %c0_i32_0 = arith.constant 0 : i32
    %c0_i32_1 = arith.constant 0 : i32
    return %c0_i32, %c0_i32_0 : i32, i32
  }
  func.func @transform_5(%arg0: i32) -> (i32, i32) {
    %c0_i32 = arith.constant 0 : i32
    %c0_i32_0 = arith.constant 0 : i32
    %c0_i32_1 = arith.constant 0 : i32
    return %c0_i32, %c0_i32_0 : i32, i32
  }
  func.func @transform_6(%arg0: i32) -> (i32, i32) {
    %c0_i32 = arith.constant 0 : i32
    %c0_i32_0 = arith.constant 0 : i32
    %c0_i32_1 = arith.constant 0 : i32
    return %c0_i32, %c0_i32_0 : i32, i32
  }
  func.func @transform_7(%arg0: i32) -> (i32, i32) {
    %c0_i32 = arith.constant 0 : i32
    %c0_i32_0 = arith.constant 0 : i32
    return %arg0, %c0_i32 : i32, i32
  }
}

</mosaic_0001>

<llo_original>
// kernel: tpu_custom_call.1
$region0: #{tpu_custom_call.1}
  #allocation0 [shape = 'u32[]', space=smem, size = 0x4, offset = 0x4, fixed_abs, tag = 'smem constant byte address 0x4 - core index']
  #allocation1 [shape = 'u32[72,128]{1,0:T(1,128)}', space=vmem, size = 0x9000, scoped, tag = 'internal scratch']
  #allocation2 [shape = 'f32[1,1]{1,0:T(1,128)S(1)}', space=vmem, size = 0x200, scoped, tag = 'scoped memory for tpu_custom_call.1']
  %s0 = inlined_call_operand.hbm [shape: f32[512,256], index: 0, kind: input, shape index: {}]
  %s1 = inlined_call_operand.hbm [shape: bf16[256,256], index: 1, kind: input, shape index: {}]
  %s2 = inlined_call_operand.vmem [shape: f32[1,256], index: 2, kind: input, shape index: {}]
  %s3 = inlined_call_operand.hbm [shape: bf16[256,256], index: 3, kind: input, shape index: {}]
  %s4 = inlined_call_operand.vmem [shape: f32[1,256], index: 4, kind: input, shape index: {}]
  %s5 = inlined_call_operand.vmem [shape: f32[1,256], index: 5, kind: input, shape index: {}]
  %s6 = inlined_call_operand.<no memory space> [shape: f32[1,1], index: 6, kind: input, shape index: {}]
  %s7 = inlined_call_operand.vmem [shape: f32[512,1], index: 7, kind: output, shape index: {}]
  %s8 = sld [smem:[#allocation0]]
  $region73: #{tpu_custom_call.1} parent=0
    _
  %s10 = ssub.s32 1, %s8
  %s11 = scalar_select 0, %s10, %s8
  %v12 = vstv %s6
  %13 = vst [vmem:[#allocation2] sm:$0x1] %v12
  $region1: #{tpu_custom_call.1} parent=0
    #allocation3 [shape = 'u8[524288]{0}', space=vmem, size = 0x80000, scoped, tag = 'input window, operand 0']
    #allocation4 [shape = 's32[2]{0}', space=sflag, size = 0x8, scoped, tag = 'scoped memory for tpu_custom_call.1']
    #allocation5 [shape = 'u8[131072]{0}', space=vmem, size = 0x20000, scoped, tag = 'input window, operand 1, single buffered']
    #allocation6 [shape = 's32[1]{0}', space=sflag, size = 0x4, scoped, tag = 'scoped memory for tpu_custom_call.1']
    #allocation7 [shape = 'u8[131072]{0}', space=vmem, size = 0x20000, scoped, tag = 'input window, operand 3, single buffered']
    %14 = vsyncpa [#allocation4], 0
    %s15 = scalar_lea.sflag [#allocation4], 1
    %16 = vsyncpa %s15, 0
    %17 = vsyncpa [#allocation6], 0
    loop: start=0, step=1, limit=4
    $region2: #{tpu_custom_call.1} parent=1 // loop_pre_header
      _
    $region3: #{tpu_custom_call.1} parent=1 // loop_header
      %s19 = sphi 0, %s23
      %p20 = scmp.ge.s32.totalorder %s19, 4
      %s29 = sphi 0, %s31
      %s32 = sphi 0, %s29
      %s33 = sphi 0, %s32
      %s49 = sphi 0, %s33
      %s53 = sphi 0, %s53
      %s55 = sphi 0, %s53
      %s56 = sphi 0, %s55
      %s70 = sphi 0, %s56
      %s74 = sphi 0, %s74
      %s76 = sphi 0, %s74
      %s77 = sphi 0, %s76
      %s91 = sphi 0, %s77
      %s95 = sphi 0, %s95
      %s97 = sphi 0, %s95
      %s98 = sphi 0, %s97
      %s112 = sphi 0, %s98
      %s116 = sphi 0, %s116
      %s118 = sphi 0, %s116
      %s119 = sphi 0, %s118
      %s133 = sphi 0, %s119
      %s137 = sphi 0, %s137
      %s139 = sphi 0, %s137
      %s140 = sphi 0, %s139
      %s154 = sphi 0, %s140
      %s158 = sphi 0, %s158
      %s160 = sphi 0, %s158
      %s161 = sphi 0, %s160
      %s175 = sphi 0, %s161
      %s181 = sphi 0, %s183
      %s184 = sphi 0, %s181
      %s185 = sphi 0, %s184
      %s201 = sphi 0, %s185
    $region4: #{tpu_custom_call.1} parent=1 // loop_header_branch
      %22 = sbr.rel (%p20) target = $region8
    $region5: #{tpu_custom_call.1} parent=1 // loop_body
      %s24 = ssub.s32 %s19, 1
      %s25 = ssub.s32 %s19, 2
      %s26 = sadd.s32 %s19, 1
      %s27 = ssub.s32 %s19, %s26
      %p28 = scmp.eq.s32.totalorder %s27, 0
      %s30 = sadd.s32 %s29, 1
      %s31 = scalar_select %p28, %s29, %s30
      %p34 = pneg %p28
      %p35 = scmp.eq.s32.totalorder %s19, 1
      %p36 = por %p34, %p35
      %p37 = scmp.ne.s32.totalorder %s29, %s32
      %p38 = scmp.eq.s32.totalorder %s19, 0
      %p39 = por %p37, %p38
      %p40 = scmp.ne.s32.totalorder %s29, %s32
      %p41 = scmp.eq.s32.totalorder %s24, 1
      %p42 = por %p40, %p41
      %p43 = scmp.ne.s32.totalorder %s32, %s33
      %p44 = scmp.eq.s32.totalorder %s24, 0
      %p45 = por %p43, %p44
      %p46 = scmp.ne.s32.totalorder %s32, %s33
      %p47 = scmp.eq.s32.totalorder %s25, 1
      %p48 = por %p46, %p47
      %p50 = scmp.ne.s32.totalorder %s33, %s49
      %p51 = scmp.eq.s32.totalorder %s25, 0
      %p52 = por %p50, %p51
      %s54 = sadd.s32 %s53, 1
      %p57 = scmp.eq.s32.totalorder %s19, 1
      %p58 = scmp.ne.s32.totalorder %s53, %s55
      %p59 = scmp.eq.s32.totalorder %s19, 0
      %p60 = por %p58, %p59
      %p61 = scmp.ne.s32.totalorder %s53, %s55
      %p62 = scmp.eq.s32.totalorder %s24, 1
      %p63 = por %p61, %p62
      %p64 = scmp.ne.s32.totalorder %s55, %s56
      %p65 = scmp.eq.s32.totalorder %s24, 0
      %p66 = por %p64, %p65
      %p67 = scmp.ne.s32.totalorder %s55, %s56
      %p68 = scmp.eq.s32.totalorder %s25, 1
      %p69 = por %p67, %p68
      %p71 = scmp.ne.s32.totalorder %s56, %s70
      %p72 = scmp.eq.s32.totalorder %s25, 0
      %p73 = por %p71, %p72
      %s75 = sadd.s32 %s74, 1
      %p78 = scmp.eq.s32.totalorder %s19, 1
      %p79 = scmp.ne.s32.totalorder %s74, %s76
      %p80 = scmp.eq.s32.totalorder %s19, 0
      %p81 = por %p79, %p80
      %p82 = scmp.ne.s32.totalorder %s74, %s76
      %p83 = scmp.eq.s32.totalorder %s24, 1
      %p84 = por %p82, %p83
      %p85 = scmp.ne.s32.totalorder %s76, %s77
      %p86 = scmp.eq.s32.totalorder %s24, 0
      %p87 = por %p85, %p86
      %p88 = scmp.ne.s32.totalorder %s76, %s77
      %p89 = scmp.eq.s32.totalorder %s25, 1
      %p90 = por %p88, %p89
      %p92 = scmp.ne.s32.totalorder %s77, %s91
      %p93 = scmp.eq.s32.totalorder %s25, 0
      %p94 = por %p92, %p93
      %s96 = sadd.s32 %s95, 1
      %p99 = scmp.eq.s32.totalorder %s19, 1
      %p100 = scmp.ne.s32.totalorder %s95, %s97
      %p101 = scmp.eq.s32.totalorder %s19, 0
      %p102 = por %p100, %p101
      %p103 = scmp.ne.s32.totalorder %s95, %s97
      %p104 = scmp.eq.s32.totalorder %s24, 1
      %p105 = por %p103, %p104
      %p106 = scmp.ne.s32.totalorder %s97, %s98
      %p107 = scmp.eq.s32.totalorder %s24, 0
      %p108 = por %p106, %p107
      %p109 = scmp.ne.s32.totalorder %s97, %s98
      %p110 = scmp.eq.s32.totalorder %s25, 1
      %p111 = por %p109, %p110
      %p113 = scmp.ne.s32.totalorder %s98, %s112
      %p114 = scmp.eq.s32.totalorder %s25, 0
      %p115 = por %p113, %p114
      %s117 = sadd.s32 %s116, 1
      %p120 = scmp.eq.s32.totalorder %s19, 1
      %p121 = scmp.ne.s32.totalorder %s116, %s118
      %p122 = scmp.eq.s32.totalorder %s19, 0
      %p123 = por %p121, %p122
      %p124 = scmp.ne.s32.totalorder %s116, %s118
      %p125 = scmp.eq.s32.totalorder %s24, 1
      %p126 = por %p124, %p125
      %p127 = scmp.ne.s32.totalorder %s118, %s119
      %p128 = scmp.eq.s32.totalorder %s24, 0
      %p129 = por %p127, %p128
      %p130 = scmp.ne.s32.totalorder %s118, %s119
      %p131 = scmp.eq.s32.totalorder %s25, 1
      %p132 = por %p130, %p131
      %p134 = scmp.ne.s32.totalorder %s119, %s133
      %p135 = scmp.eq.s32.totalorder %s25, 0
      %p136 = por %p134, %p135
      %s138 = sadd.s32 %s137, 1
      %p141 = scmp.eq.s32.totalorder %s19, 1
      %p142 = scmp.ne.s32.totalorder %s137, %s139
      %p143 = scmp.eq.s32.totalorder %s19, 0
      %p144 = por %p142, %p143
      %p145 = scmp.ne.s32.totalorder %s137, %s139
      %p146 = scmp.eq.s32.totalorder %s24, 1
      %p147 = por %p145, %p146
      %p148 = scmp.ne.s32.totalorder %s139, %s140
      %p149 = scmp.eq.s32.totalorder %s24, 0
      %p150 = por %p148, %p149
      %p151 = scmp.ne.s32.totalorder %s139, %s140
      %p152 = scmp.eq.s32.totalorder %s25, 1
      %p153 = por %p151, %p152
      %p155 = scmp.ne.s32.totalorder %s140, %s154
      %p156 = scmp.eq.s32.totalorder %s25, 0
      %p157 = por %p155, %p156
      %s159 = sadd.s32 %s158, 1
      %p162 = scmp.eq.s32.totalorder %s19, 1
      %p163 = scmp.ne.s32.totalorder %s158, %s160
      %p164 = scmp.eq.s32.totalorder %s19, 0
      %p165 = por %p163, %p164
      %p166 = scmp.ne.s32.totalorder %s158, %s160
      %p167 = scmp.eq.s32.totalorder %s24, 1
      %p168 = por %p166, %p167
      %p169 = scmp.ne.s32.totalorder %s160, %s161
      %p170 = scmp.eq.s32.totalorder %s24, 0
      %p171 = por %p169, %p170
      %p172 = scmp.ne.s32.totalorder %s160, %s161
      %p173 = scmp.eq.s32.totalorder %s25, 1
      %p174 = por %p172, %p173
      %p176 = scmp.ne.s32.totalorder %s161, %s175
      %p177 = scmp.eq.s32.totalorder %s25, 0
      %p178 = por %p176, %p177
      %s179 = ssub.s32 %s19, %s26
      %p180 = scmp.eq.s32.totalorder %s179, 0
      %s182 = sadd.s32 %s181, 1
      %s183 = scalar_select %p180, %s181, %s182
      %p186 = pneg %p180
      %p187 = scmp.eq.s32.totalorder %s19, 1
      %p188 = por %p186, %p187
      %p189 = scmp.ne.s32.totalorder %s181, %s184
      %p190 = scmp.eq.s32.totalorder %s19, 0
      %p191 = por %p189, %p190
      %p192 = scmp.ne.s32.totalorder %s181, %s184
      %p193 = scmp.eq.s32.totalorder %s24, 1
      %p194 = por %p192, %p193
      %p195 = scmp.ne.s32.totalorder %s184, %s185
      %p196 = scmp.eq.s32.totalorder %s24, 0
      %p197 = por %p195, %p196
      %p198 = scmp.ne.s32.totalorder %s184, %s185
      %p199 = scmp.eq.s32.totalorder %s25, 1
      %p200 = por %p198, %p199
      %p202 = scmp.ne.s32.totalorder %s185, %s201
      %p203 = scmp.eq.s32.totalorder %s25, 0
      %p204 = por %p202, %p203
      %p205 = scmp.le.s32.totalorder 1, %s19
      %p206 = scmp.lt.s32.totalorder %s19, 3
      %p207 = pnand %p205, %p206
      %p208 = pneg %p207
      // Predicated region
      $region9: #{tpu_custom_call.1} parent=5 // pred_check
        _
      $region10: #{tpu_custom_call.1} parent=5 // pred_check_branch
        %210 = sbr.rel (%p207) target = $region12
      $region11: #{tpu_custom_call.1} parent=5 // pred_region
        %s211 = ssub.s32 %s19, 1
        // Predicated region
        $region13: #{tpu_custom_call.1} parent=11 // pred_check
          %p212 = pneg %p66
        $region14: #{tpu_custom_call.1} parent=11 // pred_check_branch
          %214 = sbr.rel (%p212) target = $region16
        $region15: #{tpu_custom_call.1} parent=11 // pred_region
          %216 = vsyncadd [#allocation6], 0
          %s217 = sshll.u32 %s1, 4
          %s218 = int_to_ptr.hbm [resolvable:$true] %s217
          %s219 = sshll.u32 [#allocation5], 4
          %s220 = int_to_ptr.vmem [resolvable:$true] %s219
          %225 = dma.hbm_to_vmem [thread:$0]  %s218, 4096, %s220, [#allocation6], 128, 128, 8
        $region16: #{tpu_custom_call.1} parent=11 // pred_fallthru
          _
        // Predicated region
        $region17: #{tpu_custom_call.1} parent=11 // pred_check
          %p226 = pneg %p87
        $region18: #{tpu_custom_call.1} parent=11 // pred_check_branch
          %228 = sbr.rel (%p226) target = $region20
        $region19: #{tpu_custom_call.1} parent=11 // pred_region
          _
        $region20: #{tpu_custom_call.1} parent=11 // pred_fallthru
          _
        // Predicated region
        $region21: #{tpu_custom_call.1} parent=11 // pred_check
          %p229 = pneg %p108
        $region22: #{tpu_custom_call.1} parent=11 // pred_check_branch
          %231 = sbr.rel (%p229) target = $region24
        $region23: #{tpu_custom_call.1} parent=11 // pred_region
          %233 = vsyncadd [#allocation6], 0
          %s234 = sshll.u32 %s3, 4
          %s235 = int_to_ptr.hbm [resolvable:$true] %s234
          %s236 = sshll.u32 [#allocation7], 4
          %s237 = int_to_ptr.vmem [resolvable:$true] %s236
          %242 = dma.hbm_to_vmem [thread:$0]  %s235, 4096, %s237, [#allocation6], 128, 128, 8
        $region24: #{tpu_custom_call.1} parent=11 // pred_fallthru
          _
        // Predicated region
        $region25: #{tpu_custom_call.1} parent=11 // pred_check
          %p243 = pneg %p129
        $region26: #{tpu_custom_call.1} parent=11 // pred_check_branch
          %245 = sbr.rel (%p243) target = $region28
        $region27: #{tpu_custom_call.1} parent=11 // pred_region
          _
        $region28: #{tpu_custom_call.1} parent=11 // pred_fallthru
          _
        // Predicated region
        $region29: #{tpu_custom_call.1} parent=11 // pred_check
          %p246 = pneg %p150
        $region30: #{tpu_custom_call.1} parent=11 // pred_check_branch
          %248 = sbr.rel (%p246) target = $region32
        $region31: #{tpu_custom_call.1} parent=11 // pred_region
          _
        $region32: #{tpu_custom_call.1} parent=11 // pred_fallthru
          _
        // Predicated region
        $region33: #{tpu_custom_call.1} parent=11 // pred_check
          %p249 = pneg %p171
        $region34: #{tpu_custom_call.1} parent=11 // pred_check_branch
          %251 = sbr.rel (%p249) target = $region36
        $region35: #{tpu_custom_call.1} parent=11 // pred_region
          _
        $region36: #{tpu_custom_call.1} parent=11 // pred_fallthru
          _
      $region12: #{tpu_custom_call.1} parent=5 // pred_fallthru
        _
      %p252 = scmp.lt.s32.totalorder %s19, 2
      // Predicated region
      $region37: #{tpu_custom_call.1} parent=5 // pred_check
        %p253 = pneg %p252
      $region38: #{tpu_custom_call.1} parent=5 // pred_check_branch
        %255 = sbr.rel (%p253) target = $region40
      $region39: #{tpu_custom_call.1} parent=5 // pred_region
        // Predicated region
        $region41: #{tpu_custom_call.1} parent=39 // pred_check
          %p256 = pneg %p39
        $region42: #{tpu_custom_call.1} parent=39 // pred_check_branch
          %258 = sbr.rel (%p256) target = $region44
        $region43: #{tpu_custom_call.1} parent=39 // pred_region
          %s259 = sand.u32 %s29, 1
          %s260 = scalar_lea.sflag [#allocation4], %s259
          %s261 = sand.u32 %s29, 1
          %s262 = smul.addr %s261, 512
          %s263 = scalar_lea.vmem [#allocation3], %s262
          %s264 = smul.u32 32, %s19
          %266 = vsyncadd %s260, 0
          %s267 = smul.addr %s264, 2
          %s268 = smul.addr %s267, 8
          %s269 = scalar_lea.hbm %s0, %s268
          %s270 = sshll.u32 %s269, 4
          %s271 = int_to_ptr.hbm [resolvable:$true] %s270
          %s272 = sshll.u32 %s263, 4
          %s273 = int_to_ptr.vmem [resolvable:$true] %s272
          %278 = dma.hbm_to_vmem [thread:$0]  %s271, 8192, %s273, %s260, 256, 256, 16
        $region44: #{tpu_custom_call.1} parent=39 // pred_fallthru
          _
      $region40: #{tpu_custom_call.1} parent=5 // pred_fallthru
        _
      %p279 = scmp.le.s32.totalorder 1, %s19
      %p280 = scmp.lt.s32.totalorder %s19, 3
      %p281 = pnand %p279, %p280
      %p282 = pneg %p281
      // Predicated region
      $region45: #{tpu_custom_call.1} parent=5 // pred_check
        _
      $region46: #{tpu_custom_call.1} parent=5 // pred_check_branch
        %284 = sbr.rel (%p281) target = $region48
      $region47: #{tpu_custom_call.1} parent=5 // pred_region
        %s285 = ssub.s32 %s19, 1
        %s286 = sand.u32 %s32, 1
        %s287 = scalar_lea.sflag [#allocation4], %s286
        %s288 = sand.u32 %s32, 1
        %s289 = smul.addr %s288, 512
        %s290 = scalar_lea.vmem [#allocation3], %s289
        // Predicated region
        $region49: #{tpu_custom_call.1} parent=47 // pred_check
          %p291 = pneg %p45
        $region50: #{tpu_custom_call.1} parent=47 // pred_check_branch
          %293 = sbr.rel (%p291) target = $region52
        $region51: #{tpu_custom_call.1} parent=47 // pred_region
          %295 = dma.done %s287, 8192
        $region52: #{tpu_custom_call.1} parent=47 // pred_fallthru
          _
        // Predicated region
        $region53: #{tpu_custom_call.1} parent=47 // pred_check
          %p296 = pneg %p66
        $region54: #{tpu_custom_call.1} parent=47 // pred_check_branch
          %298 = sbr.rel (%p296) target = $region56
        $region55: #{tpu_custom_call.1} parent=47 // pred_region
          %300 = dma.done [#allocation6], 4096
        $region56: #{tpu_custom_call.1} parent=47 // pred_fallthru
          _
        // Predicated region
        $region57: #{tpu_custom_call.1} parent=47 // pred_check
          %p301 = pneg %p108
        $region58: #{tpu_custom_call.1} parent=47 // pred_check_branch
          %303 = sbr.rel (%p301) target = $region60
        $region59: #{tpu_custom_call.1} parent=47 // pred_region
          %305 = dma.done [#allocation6], 4096
        $region60: #{tpu_custom_call.1} parent=47 // pred_fallthru
          _
        %s306 = sand.u32 %s32, 1
        %s307 = scalar_lea.sflag [#allocation4], %s306
        %s308 = sand.u32 %s32, 1
        %s309 = smul.addr %s308, 512
        %s310 = scalar_lea.vmem [#allocation3], %s309
        %p311 = pneg %p45
        %p312 = pneg %p42
        %p313 = pneg %p66
        %p314 = pneg %p63
        %p315 = pneg %p87
        %p316 = pneg %p84
        %p317 = pneg %p108
        %p318 = pneg %p105
        %p319 = pneg %p129
        %p320 = pneg %p126
        %p321 = pneg %p150
        %p322 = pneg %p147
        %p323 = pneg %p171
        %p324 = pneg %p168
        %p325 = pneg %p197
        %p326 = pneg %p194
        %s327 = smul.u32 32, %s24
        %p328 = scmp.lt.s32.totalorder %s327, 63
        %s329 = scalar_select %p328, %s327, 63
        %s330 = smul.addr %s329, 8
        %s331 = scalar_lea.vmem %s7, %s330
        %s332 = smul.u32 32, %s24
        %s333 = smul.u32 32, %s24
        %p334 = scmp.lt.s32.totalorder %s333, 63
        %s335 = scalar_select %p334, %s333, 63
        %s336 = smul.addr %s335, 8
        %s337 = scalar_lea.vmem %s7, %s336
        %s338 = smul.u32 32, %s24
        %v339 = vld [vmem:[%s290] sm:$0xff]
        %v340 = vld [vmem:[%s290 + $0x8] sm:$0xff]
        %v341 = vld [vmem:[%s290 + $0x10] sm:$0xff]
        %v342 = vld [vmem:[%s290 + $0x18] sm:$0xff]
        %v343 = vld [vmem:[%s290 + $0x20] sm:$0xff]
        %v344 = vld [vmem:[%s290 + $0x28] sm:$0xff]
        %v345 = vld [vmem:[%s290 + $0x30] sm:$0xff]
        %v346 = vld [vmem:[%s290 + $0x38] sm:$0xff]
        %v347 = vld [vmem:[%s290 + $0x40] sm:$0xff]
        %v348 = vld [vmem:[%s290 + $0x48] sm:$0xff]
        %v349 = vld [vmem:[%s290 + $0x50] sm:$0xff]
        %v350 = vld [vmem:[%s290 + $0x58] sm:$0xff]
        %v351 = vld [vmem:[%s290 + $0x60] sm:$0xff]
        %v352 = vld [vmem:[%s290 + $0x68] sm:$0xff]
        %v353 = vld [vmem:[%s290 + $0x70] sm:$0xff]
        %v354 = vld [vmem:[%s290 + $0x78] sm:$0xff]
        %v355 = vld [vmem:[%s290 + $0x80] sm:$0xff]
        %v356 = vld [vmem:[%s290 + $0x88] sm:$0xff]
        %v357 = vld [vmem:[%s290 + $0x90] sm:$0xff]
        %v358 = vld [vmem:[%s290 + $0x98] sm:$0xff]
        %v359 = vld [vmem:[%s290 + $0xa0] sm:$0xff]
        %v360 = vld [vmem:[%s290 + $0xa8] sm:$0xff]
        %v361 = vld [vmem:[%s290 + $0xb0] sm:$0xff]
        %v362 = vld [vmem:[%s290 + $0xb8] sm:$0xff]
        %v363 = vld [vmem:[%s290 + $0xc0] sm:$0xff]
        %v364 = vld [vmem:[%s290 + $0xc8] sm:$0xff]
        %v365 = vld [vmem:[%s290 + $0xd0] sm:$0xff]
        %v366 = vld [vmem:[%s290 + $0xd8] sm:$0xff]
        %v367 = vld [vmem:[%s290 + $0xe0] sm:$0xff]
        %v368 = vld [vmem:[%s290 + $0xe8] sm:$0xff]
        %v369 = vld [vmem:[%s290 + $0xf0] sm:$0xff]
        %v370 = vld [vmem:[%s290 + $0xf8] sm:$0xff]
        %v371 = vld [vmem:[%s290 + $0x100] sm:$0xff]
        %v372 = vld [vmem:[%s290 + $0x108] sm:$0xff]
        %v373 = vld [vmem:[%s290 + $0x110] sm:$0xff]
        %v374 = vld [vmem:[%s290 + $0x118] sm:$0xff]
        %v375 = vld [vmem:[%s290 + $0x120] sm:$0xff]
        %v376 = vld [vmem:[%s290 + $0x128] sm:$0xff]
        %v377 = vld [vmem:[%s290 + $0x130] sm:$0xff]
        %v378 = vld [vmem:[%s290 + $0x138] sm:$0xff]
        %v379 = vld [vmem:[%s290 + $0x140] sm:$0xff]
        %v380 = vld [vmem:[%s290 + $0x148] sm:$0xff]
        %v381 = vld [vmem:[%s290 + $0x150] sm:$0xff]
        %v382 = vld [vmem:[%s290 + $0x158] sm:$0xff]
        %v383 = vld [vmem:[%s290 + $0x160] sm:$0xff]
        %v384 = vld [vmem:[%s290 + $0x168] sm:$0xff]
        %v385 = vld [vmem:[%s290 + $0x170] sm:$0xff]
        %v386 = vld [vmem:[%s290 + $0x178] sm:$0xff]
        %v387 = vld [vmem:[%s290 + $0x180] sm:$0xff]
        %v388 = vld [vmem:[%s290 + $0x188] sm:$0xff]
        %v389 = vld [vmem:[%s290 + $0x190] sm:$0xff]
        %v390 = vld [vmem:[%s290 + $0x198] sm:$0xff]
        %v391 = vld [vmem:[%s290 + $0x1a0] sm:$0xff]
        %v392 = vld [vmem:[%s290 + $0x1a8] sm:$0xff]
        %v393 = vld [vmem:[%s290 + $0x1b0] sm:$0xff]
        %v394 = vld [vmem:[%s290 + $0x1b8] sm:$0xff]
        %v395 = vld [vmem:[%s290 + $0x1c0] sm:$0xff]
        %v396 = vld [vmem:[%s290 + $0x1c8] sm:$0xff]
        %v397 = vld [vmem:[%s290 + $0x1d0] sm:$0xff]
        %v398 = vld [vmem:[%s290 + $0x1d8] sm:$0xff]
        %v399 = vld [vmem:[%s290 + $0x1e0] sm:$0xff]
        %v400 = vld [vmem:[%s290 + $0x1e8] sm:$0xff]
        %v401 = vld [vmem:[%s290 + $0x1f0] sm:$0xff]
        %v402 = vld [vmem:[%s290 + $0x1f8] sm:$0xff]
        %v403 = vld [vmem:[#allocation5] sm:$0xff]
        %v404 = vld [vmem:[#allocation5 + $0x8] sm:$0xff]
        %v405 = vld [vmem:[#allocation5 + $0x10] sm:$0xff]
        %v406 = vld [vmem:[#allocation5 + $0x18] sm:$0xff]
        %v407 = vld [vmem:[#allocation5 + $0x20] sm:$0xff]
        %v408 = vld [vmem:[#allocation5 + $0x28] sm:$0xff]
        %v409 = vld [vmem:[#allocation5 + $0x30] sm:$0xff]
        %v410 = vld [vmem:[#allocation5 + $0x38] sm:$0xff]
        %v411 = vld [vmem:[#allocation5 + $0x40] sm:$0xff]
        %v412 = vld [vmem:[#allocation5 + $0x48] sm:$0xff]
        %v413 = vld [vmem:[#allocation5 + $0x50] sm:$0xff]
        %v414 = vld [vmem:[#allocation5 + $0x58] sm:$0xff]
        %v415 = vld [vmem:[#allocation5 + $0x60] sm:$0xff]
        %v416 = vld [vmem:[#allocation5 + $0x68] sm:$0xff]
        %v417 = vld [vmem:[#allocation5 + $0x70] sm:$0xff]
        %v418 = vld [vmem:[#allocation5 + $0x78] sm:$0xff]
        %v419 = vld [vmem:[#allocation5 + $0x80] sm:$0xff]
        %v420 = vld [vmem:[#allocation5 + $0x88] sm:$0xff]
        %v421 = vld [vmem:[#allocation5 + $0x90] sm:$0xff]
        %v422 = vld [vmem:[#allocation5 + $0x98] sm:$0xff]
        %v423 = vld [vmem:[#allocation5 + $0xa0] sm:$0xff]
        %v424 = vld [vmem:[#allocation5 + $0xa8] sm:$0xff]
        %v425 = vld [vmem:[#allocation5 + $0xb0] sm:$0xff]
        %v426 = vld [vmem:[#allocation5 + $0xb8] sm:$0xff]
        %v427 = vld [vmem:[#allocation5 + $0xc0] sm:$0xff]
        %v428 = vld [vmem:[#allocation5 + $0xc8] sm:$0xff]
        %v429 = vld [vmem:[#allocation5 + $0xd0] sm:$0xff]
        %v430 = vld [vmem:[#allocation5 + $0xd8] sm:$0xff]
        %v431 = vld [vmem:[#allocation5 + $0xe0] sm:$0xff]
        %v432 = vld [vmem:[#allocation5 + $0xe8] sm:$0xff]
        %v433 = vld [vmem:[#allocation5 + $0xf0] sm:$0xff]
        %v434 = vld [vmem:[#allocation5 + $0xf8] sm:$0xff]
        %v435 = vld [vmem:[%s2] sm:$0x3]
        %v436 = vpack.c.bf16 %v341, %v339
        %v437 = vpack.c.bf16 %v342, %v340
        %v438 = vpack.c.bf16 %v345, %v343
        %v439 = vpack.c.bf16 %v346, %v344
        %v440 = vpack.c.bf16 %v349, %v347
        %v441 = vpack.c.bf16 %v350, %v348
        %v442 = vpack.c.bf16 %v353, %v351
        %v443 = vpack.c.bf16 %v354, %v352
        %v444 = vpack.c.bf16 %v357, %v355
        %v445 = vpack.c.bf16 %v358, %v356
        %v446 = vpack.c.bf16 %v361, %v359
        %v447 = vpack.c.bf16 %v362, %v360
        %v448 = vpack.c.bf16 %v365, %v363
        %v449 = vpack.c.bf16 %v366, %v364
        %v450 = vpack.c.bf16 %v369, %v367
        %v451 = vpack.c.bf16 %v370, %v368
        %v452 = vpack.c.bf16 %v373, %v371
        %v453 = vpack.c.bf16 %v374, %v372
        %v454 = vpack.c.bf16 %v377, %v375
        %v455 = vpack.c.bf16 %v378, %v376
        %v456 = vpack.c.bf16 %v381, %v379
        %v457 = vpack.c.bf16 %v382, %v380
        %v458 = vpack.c.bf16 %v385, %v383
        %v459 = vpack.c.bf16 %v386, %v384
        %v460 = vpack.c.bf16 %v389, %v387
        %v461 = vpack.c.bf16 %v390, %v388
        %v462 = vpack.c.bf16 %v393, %v391
        %v463 = vpack.c.bf16 %v394, %v392
        %v464 = vpack.c.bf16 %v397, %v395
        %v465 = vpack.c.bf16 %v398, %v396
        %v466 = vpack.c.bf16 %v401, %v399
        %v467 = vpack.c.bf16 %v402, %v400
        %v469 = vperm.slane %v435, 0
        %v470 = vperm.slane %v435, 1
        %v505 = vunpack.c.l.b16 %v403
        %v506 = vunpack.c.h.b16 %v403
        %v507 = vunpack.c.l.b16 %v404
        %v508 = vunpack.c.h.b16 %v404
        %v509 = vunpack.c.l.b16 %v405
        %v510 = vunpack.c.h.b16 %v405
        %v511 = vunpack.c.l.b16 %v406
        %v512 = vunpack.c.h.b16 %v406
        %v513 = vunpack.c.l.b16 %v407
        %v514 = vunpack.c.h.b16 %v407
        %v515 = vunpack.c.l.b16 %v408
        %v516 = vunpack.c.h.b16 %v408
        %v517 = vunpack.c.l.b16 %v409
        %v518 = vunpack.c.h.b16 %v409
        %v519 = vunpack.c.l.b16 %v410
        %v520 = vunpack.c.h.b16 %v410
        %v521 = vunpack.c.l.b16 %v411
        %v522 = vunpack.c.h.b16 %v411
        %v523 = vunpack.c.l.b16 %v412
        %v524 = vunpack.c.h.b16 %v412
        %v525 = vunpack.c.l.b16 %v413
        %v526 = vunpack.c.h.b16 %v413
        %v527 = vunpack.c.l.b16 %v414
        %v528 = vunpack.c.h.b16 %v414
        %v529 = vunpack.c.l.b16 %v415
        %v530 = vunpack.c.h.b16 %v415
        %v531 = vunpack.c.l.b16 %v416
        %v532 = vunpack.c.h.b16 %v416
        %v533 = vunpack.c.l.b16 %v417
        %v534 = vunpack.c.h.b16 %v417
        %v535 = vunpack.c.l.b16 %v418
        %v536 = vunpack.c.h.b16 %v418
        %v537 = vunpack.c.l.b16 %v419
        %v538 = vunpack.c.h.b16 %v419
        %v539 = vunpack.c.l.b16 %v420
        %v540 = vunpack.c.h.b16 %v420
        %v541 = vunpack.c.l.b16 %v421
        %v542 = vunpack.c.h.b16 %v421
        %v543 = vunpack.c.l.b16 %v422
        %v544 = vunpack.c.h.b16 %v422
        %v545 = vunpack.c.l.b16 %v423
        %v546 = vunpack.c.h.b16 %v423
        %v547 = vunpack.c.l.b16 %v424
        %v548 = vunpack.c.h.b16 %v424
        %v549 = vunpack.c.l.b16 %v425
        %v550 = vunpack.c.h.b16 %v425
        %v551 = vunpack.c.l.b16 %v426
        %v552 = vunpack.c.h.b16 %v426
        %v553 = vunpack.c.l.b16 %v427
        %v554 = vunpack.c.h.b16 %v427
        %v555 = vunpack.c.l.b16 %v428
        %v556 = vunpack.c.h.b16 %v428
        %v557 = vunpack.c.l.b16 %v429
        %v558 = vunpack.c.h.b16 %v429
        %v559 = vunpack.c.l.b16 %v430
        %v560 = vunpack.c.h.b16 %v430
        %v561 = vunpack.c.l.b16 %v431
        %v562 = vunpack.c.h.b16 %v431
        %v563 = vunpack.c.l.b16 %v432
        %v564 = vunpack.c.h.b16 %v432
        %v565 = vunpack.c.l.b16 %v433
        %v566 = vunpack.c.h.b16 %v433
        %v567 = vunpack.c.l.b16 %v434
        %v568 = vunpack.c.h.b16 %v434
        %v569 = vpack.c.b16 %v507, %v505
        %v570 = vpack.c.b16 %v508, %v506
        %v571 = vpack.c.b16 %v511, %v509
        %v572 = vpack.c.b16 %v512, %v510
        %v573 = vpack.c.b16 %v515, %v513
        %v574 = vpack.c.b16 %v516, %v514
        %v575 = vpack.c.b16 %v519, %v517
        %v576 = vpack.c.b16 %v520, %v518
        %v577 = vpack.c.b16 %v523, %v521
        %v578 = vpack.c.b16 %v524, %v522
        %v579 = vpack.c.b16 %v527, %v525
        %v580 = vpack.c.b16 %v528, %v526
        %v581 = vpack.c.b16 %v531, %v529
        %v582 = vpack.c.b16 %v532, %v530
        %v583 = vpack.c.b16 %v535, %v533
        %v584 = vpack.c.b16 %v536, %v534
        %v585 = vpack.c.b16 %v539, %v537
        %v586 = vpack.c.b16 %v540, %v538
        %v587 = vpack.c.b16 %v543, %v541
        %v588 = vpack.c.b16 %v544, %v542
        %v589 = vpack.c.b16 %v547, %v545
        %v590 = vpack.c.b16 %v548, %v546
        %v591 = vpack.c.b16 %v551, %v549
        %v592 = vpack.c.b16 %v552, %v550
        %v593 = vpack.c.b16 %v555, %v553
        %v594 = vpack.c.b16 %v556, %v554
        %v595 = vpack.c.b16 %v559, %v557
        %v596 = vpack.c.b16 %v560, %v558
        %v597 = vpack.c.b16 %v563, %v561
        %v598 = vpack.c.b16 %v564, %v562
        %v599 = vpack.c.b16 %v567, %v565
        %v600 = vpack.c.b16 %v568, %v566
        %633 = vmatpush.bf16.msra.mxu0 %v583
        %634 = vmatpush.bf16.msra.mxu0 %v581
        %635 = vmatpush.bf16.msra.mxu0 %v579
        %636 = vmatpush.bf16.msra.mxu0 %v577
        %637 = vmatpush.bf16.msra.mxu0 %v575
        %638 = vmatpush.bf16.msra.mxu0 %v573
        %639 = vmatpush.bf16.msra.mxu0 %v571
        %640 = vmatpush.bf16.msra.mxu0 %v569
        %641 = vmatmul.bf16.gmra.mxu0 %v436
        %v642 = vpop.f32.mrf.mxu0
        %v643 = vadd.f32 %v469, %v642
        %v644 = vpop.f32.mrf.mxu0
        %v645 = vadd.f32 %v469, %v644
        %646 = vmatmul.bf16.gmra.mxu0 %v438
        %v647 = vpop.f32.mrf.mxu0
        %v648 = vadd.f32 %v469, %v647
        %v649 = vpop.f32.mrf.mxu0
        %v650 = vadd.f32 %v469, %v649
        %651 = vmatmul.bf16.gmra.mxu0 %v440
        %v652 = vpop.f32.mrf.mxu0
        %v653 = vadd.f32 %v469, %v652
        %v654 = vpop.f32.mrf.mxu0
        %v655 = vadd.f32 %v469, %v654
        %656 = vmatmul.bf16.gmra.mxu0 %v442
        %v657 = vpop.f32.mrf.mxu0
        %v658 = vadd.f32 %v469, %v657
        %v659 = vpop.f32.mrf.mxu0
        %v660 = vadd.f32 %v469, %v659
        %661 = vmatmul.bf16.gmra.mxu0 %v444
        %v662 = vpop.f32.mrf.mxu0
        %v663 = vadd.f32 %v469, %v662
        %v664 = vpop.f32.mrf.mxu0
        %v665 = vadd.f32 %v469, %v664
        %666 = vmatmul.bf16.gmra.mxu0 %v446
        %v667 = vpop.f32.mrf.mxu0
        %v668 = vadd.f32 %v469, %v667
        %v669 = vpop.f32.mrf.mxu0
        %v670 = vadd.f32 %v469, %v669
        %671 = vmatmul.bf16.gmra.mxu0 %v448
        %v672 = vpop.f32.mrf.mxu0
        %v673 = vadd.f32 %v469, %v672
        %v674 = vpop.f32.mrf.mxu0
        %v675 = vadd.f32 %v469, %v674
        %676 = vmatmul.bf16.gmra.mxu0 %v450
        %v677 = vpop.f32.mrf.mxu0
        %v678 = vadd.f32 %v469, %v677
        %v679 = vpop.f32.mrf.mxu0
        %v680 = vadd.f32 %v469, %v679
        %681 = vmatmul.bf16.gmra.mxu0 %v452
        %v682 = vpop.f32.mrf.mxu0
        %v683 = vadd.f32 %v469, %v682
        %v684 = vpop.f32.mrf.mxu0
        %v685 = vadd.f32 %v469, %v684
        %686 = vmatmul.bf16.gmra.mxu0 %v454
        %v687 = vpop.f32.mrf.mxu0
        %v688 = vadd.f32 %v469, %v687
        %v689 = vpop.f32.mrf.mxu0
        %v690 = vadd.f32 %v469, %v689
        %691 = vmatmul.bf16.gmra.mxu0 %v456
        %v692 = vpop.f32.mrf.mxu0
        %v693 = vadd.f32 %v469, %v692
        %v694 = vpop.f32.mrf.mxu0
        %v695 = vadd.f32 %v469, %v694
        %696 = vmatmul.bf16.gmra.mxu0 %v458
        %v697 = vpop.f32.mrf.mxu0
        %v698 = vadd.f32 %v469, %v697
        %v699 = vpop.f32.mrf.mxu0
        %v700 = vadd.f32 %v469, %v699
        %701 = vmatmul.bf16.gmra.mxu0 %v460
        %v702 = vpop.f32.mrf.mxu0
        %v703 = vadd.f32 %v469, %v702
        %v704 = vpop.f32.mrf.mxu0
        %v705 = vadd.f32 %v469, %v704
        %706 = vmatmul.bf16.gmra.mxu0 %v462
        %v707 = vpop.f32.mrf.mxu0
        %v708 = vadd.f32 %v469, %v707
        %v709 = vpop.f32.mrf.mxu0
        %v710 = vadd.f32 %v469, %v709
        %711 = vmatmul.bf16.gmra.mxu0 %v464
        %v712 = vpop.f32.mrf.mxu0
        %v713 = vadd.f32 %v469, %v712
        %v714 = vpop.f32.mrf.mxu0
        %v715 = vadd.f32 %v469, %v714
        %716 = vmatmul.bf16.gmra.mxu0 %v466
        %v717 = vpop.f32.mrf.mxu0
        %v718 = vadd.f32 %v469, %v717
        %v719 = vpop.f32.mrf.mxu0
        %v720 = vadd.f32 %v469, %v719
        %721 = vdwg.mxu0
        %722 = vmatpush.bf16.msra.mxu0 %v599
        %723 = vmatpush.bf16.msra.mxu0 %v597
        %724 = vmatpush.bf16.msra.mxu0 %v595
        %725 = vmatpush.bf16.msra.mxu0 %v593
        %726 = vmatpush.bf16.msra.mxu0 %v591
        %727 = vmatpush.bf16.msra.mxu0 %v589
        %728 = vmatpush.bf16.msra.mxu0 %v587
        %729 = vmatpush.bf16.msra.mxu0 %v585
        %730 = vmatmul.bf16.gmra.mxu0 %v437
        %v731 = vpop.f32.mrf.mxu0
        %v732 = vadd.f32 %v643, %v731
        %v733 = vpop.f32.mrf.mxu0
        %v734 = vadd.f32 %v645, %v733
        %735 = vmatmul.bf16.gmra.mxu0 %v439
        %v736 = vpop.f32.mrf.mxu0
        %v737 = vadd.f32 %v648, %v736
        %v738 = vpop.f32.mrf.mxu0
        %v739 = vadd.f32 %v650, %v738
        %740 = vmatmul.bf16.gmra.mxu0 %v441
        %v741 = vpop.f32.mrf.mxu0
        %v742 = vadd.f32 %v653, %v741
        %v743 = vpop.f32.mrf.mxu0
        %v744 = vadd.f32 %v655, %v743
        %745 = vmatmul.bf16.gmra.mxu0 %v443
        %v746 = vpop.f32.mrf.mxu0
        %v747 = vadd.f32 %v658, %v746
        %v748 = vpop.f32.mrf.mxu0
        %v749 = vadd.f32 %v660, %v748
        %750 = vmatmul.bf16.gmra.mxu0 %v445
        %v751 = vpop.f32.mrf.mxu0
        %v752 = vadd.f32 %v663, %v751
        %v753 = vpop.f32.mrf.mxu0
        %v754 = vadd.f32 %v665, %v753
        %755 = vmatmul.bf16.gmra.mxu0 %v447
        %v756 = vpop.f32.mrf.mxu0
        %v757 = vadd.f32 %v668, %v756
        %v758 = vpop.f32.mrf.mxu0
        %v759 = vadd.f32 %v670, %v758
        %760 = vmatmul.bf16.gmra.mxu0 %v449
        %v761 = vpop.f32.mrf.mxu0
        %v762 = vadd.f32 %v673, %v761
        %v763 = vpop.f32.mrf.mxu0
        %v764 = vadd.f32 %v675, %v763
        %765 = vmatmul.bf16.gmra.mxu0 %v451
        %v766 = vpop.f32.mrf.mxu0
        %v767 = vadd.f32 %v678, %v766
        %v768 = vpop.f32.mrf.mxu0
        %v769 = vadd.f32 %v680, %v768
        %770 = vmatmul.bf16.gmra.mxu0 %v453
        %v771 = vpop.f32.mrf.mxu0
        %v772 = vadd.f32 %v683, %v771
        %v773 = vpop.f32.mrf.mxu0
        %v774 = vadd.f32 %v685, %v773
        %775 = vmatmul.bf16.gmra.mxu0 %v455
        %v776 = vpop.f32.mrf.mxu0
        %v777 = vadd.f32 %v688, %v776
        %v778 = vpop.f32.mrf.mxu0
        %v779 = vadd.f32 %v690, %v778
        %780 = vmatmul.bf16.gmra.mxu0 %v457
        %v781 = vpop.f32.mrf.mxu0
        %v782 = vadd.f32 %v693, %v781
        %v783 = vpop.f32.mrf.mxu0
        %v784 = vadd.f32 %v695, %v783
        %785 = vmatmul.bf16.gmra.mxu0 %v459
        %v786 = vpop.f32.mrf.mxu0
        %v787 = vadd.f32 %v698, %v786
        %v788 = vpop.f32.mrf.mxu0
        %v789 = vadd.f32 %v700, %v788
        %790 = vmatmul.bf16.gmra.mxu0 %v461
        %v791 = vpop.f32.mrf.mxu0
        %v792 = vadd.f32 %v703, %v791
        %v793 = vpop.f32.mrf.mxu0
        %v794 = vadd.f32 %v705, %v793
        %795 = vmatmul.bf16.gmra.mxu0 %v463
        %v796 = vpop.f32.mrf.mxu0
        %v797 = vadd.f32 %v708, %v796
        %v798 = vpop.f32.mrf.mxu0
        %v799 = vadd.f32 %v710, %v798
        %800 = vmatmul.bf16.gmra.mxu0 %v465
        %v801 = vpop.f32.mrf.mxu0
        %v802 = vadd.f32 %v713, %v801
        %v803 = vpop.f32.mrf.mxu0
        %v804 = vadd.f32 %v715, %v803
        %805 = vmatmul.bf16.gmra.mxu0 %v467
        %v806 = vpop.f32.mrf.mxu0
        %v807 = vadd.f32 %v718, %v806
        %v808 = vpop.f32.mrf.mxu0
        %v809 = vadd.f32 %v720, %v808
        %810 = vdwg.mxu0
        %811 = vmatpush.bf16.msra.mxu0 %v584
        %812 = vmatpush.bf16.msra.mxu0 %v582
        %813 = vmatpush.bf16.msra.mxu0 %v580
        %814 = vmatpush.bf16.msra.mxu0 %v578
        %815 = vmatpush.bf16.msra.mxu0 %v576
        %816 = vmatpush.bf16.msra.mxu0 %v574
        %817 = vmatpush.bf16.msra.mxu0 %v572
        %818 = vmatpush.bf16.msra.mxu0 %v570
        %819 = vmatmul.bf16.gmra.mxu0 %v436
        %v820 = vpop.f32.mrf.mxu0
        %v821 = vadd.f32 %v470, %v820
        %v822 = vpop.f32.mrf.mxu0
        %v823 = vadd.f32 %v470, %v822
        %824 = vmatmul.bf16.gmra.mxu0 %v438
        %v825 = vpop.f32.mrf.mxu0
        %v826 = vadd.f32 %v470, %v825
        %v827 = vpop.f32.mrf.mxu0
        %v828 = vadd.f32 %v470, %v827
        %829 = vmatmul.bf16.gmra.mxu0 %v440
        %v830 = vpop.f32.mrf.mxu0
        %v831 = vadd.f32 %v470, %v830
        %v832 = vpop.f32.mrf.mxu0
        %v833 = vadd.f32 %v470, %v832
        %834 = vmatmul.bf16.gmra.mxu0 %v442
        %v835 = vpop.f32.mrf.mxu0
        %v836 = vadd.f32 %v470, %v835
        %v837 = vpop.f32.mrf.mxu0
        %v838 = vadd.f32 %v470, %v837
        %839 = vmatmul.bf16.gmra.mxu0 %v444
        %v840 = vpop.f32.mrf.mxu0
        %v841 = vadd.f32 %v470, %v840
        %v842 = vpop.f32.mrf.mxu0
        %v843 = vadd.f32 %v470, %v842
        %844 = vmatmul.bf16.gmra.mxu0 %v446
        %v845 = vpop.f32.mrf.mxu0
        %v846 = vadd.f32 %v470, %v845
        %v847 = vpop.f32.mrf.mxu0
        %v848 = vadd.f32 %v470, %v847
        %849 = vmatmul.bf16.gmra.mxu0 %v448
        %v850 = vpop.f32.mrf.mxu0
        %v851 = vadd.f32 %v470, %v850
        %v852 = vpop.f32.mrf.mxu0
        %v853 = vadd.f32 %v470, %v852
        %854 = vmatmul.bf16.gmra.mxu0 %v450
        %v855 = vpop.f32.mrf.mxu0
        %v856 = vadd.f32 %v470, %v855
        %v857 = vpop.f32.mrf.mxu0
        %v858 = vadd.f32 %v470, %v857
        %859 = vmatmul.bf16.gmra.mxu0 %v452
        %v860 = vpop.f32.mrf.mxu0
        %v861 = vadd.f32 %v470, %v860
        %v862 = vpop.f32.mrf.mxu0
        %v863 = vadd.f32 %v470, %v862
        %864 = vmatmul.bf16.gmra.mxu0 %v454
        %v865 = vpop.f32.mrf.mxu0
        %v866 = vadd.f32 %v470, %v865
        %v867 = vpop.f32.mrf.mxu0
        %v868 = vadd.f32 %v470, %v867
        %869 = vmatmul.bf16.gmra.mxu0 %v456
        %v870 = vpop.f32.mrf.mxu0
        %v871 = vadd.f32 %v470, %v870
        %v872 = vpop.f32.mrf.mxu0
        %v873 = vadd.f32 %v470, %v872
        %874 = vmatmul.bf16.gmra.mxu0 %v458
        %v875 = vpop.f32.mrf.mxu0
        %v876 = vadd.f32 %v470, %v875
        %v877 = vpop.f32.mrf.mxu0
        %v878 = vadd.f32 %v470, %v877
        %879 = vmatmul.bf16.gmra.mxu0 %v460
        %v880 = vpop.f32.mrf.mxu0
        %v881 = vadd.f32 %v470, %v880
        %v882 = vpop.f32.mrf.mxu0
        %v883 = vadd.f32 %v470, %v882
        %884 = vmatmul.bf16.gmra.mxu0 %v462
        %v885 = vpop.f32.mrf.mxu0
        %v886 = vadd.f32 %v470, %v885
        %v887 = vpop.f32.mrf.mxu0
        %v888 = vadd.f32 %v470, %v887
        %889 = vmatmul.bf16.gmra.mxu0 %v464
        %v890 = vpop.f32.mrf.mxu0
        %v891 = vadd.f32 %v470, %v890
        %v892 = vpop.f32.mrf.mxu0
        %v893 = vadd.f32 %v470, %v892
        %894 = vmatmul.bf16.gmra.mxu0 %v466
        %v895 = vpop.f32.mrf.mxu0
        %v896 = vadd.f32 %v470, %v895
        %v897 = vpop.f32.mrf.mxu0
        %v898 = vadd.f32 %v470, %v897
        %899 = vdwg.mxu0
        %900 = vmatpush.bf16.msra.mxu0 %v600
        %901 = vmatpush.bf16.msra.mxu0 %v598
        %902 = vmatpush.bf16.msra.mxu0 %v596
        %903 = vmatpush.bf16.msra.mxu0 %v594
        %904 = vmatpush.bf16.msra.mxu0 %v592
        %905 = vmatpush.bf16.msra.mxu0 %v590
        %906 = vmatpush.bf16.msra.mxu0 %v588
        %907 = vmatpush.bf16.msra.mxu0 %v586
        %908 = vmatmul.bf16.gmra.mxu0 %v437
        %v909 = vpop.f32.mrf.mxu0
        %v910 = vadd.f32 %v821, %v909
        %v911 = vpop.f32.mrf.mxu0
        %v912 = vadd.f32 %v823, %v911
        %913 = vmatmul.bf16.gmra.mxu0 %v439
        %v914 = vpop.f32.mrf.mxu0
        %v915 = vadd.f32 %v826, %v914
        %v916 = vpop.f32.mrf.mxu0
        %v917 = vadd.f32 %v828, %v916
        %918 = vmatmul.bf16.gmra.mxu0 %v441
        %v919 = vpop.f32.mrf.mxu0
        %v920 = vadd.f32 %v831, %v919
        %v921 = vpop.f32.mrf.mxu0
        %v922 = vadd.f32 %v833, %v921
        %923 = vmatmul.bf16.gmra.mxu0 %v443
        %v924 = vpop.f32.mrf.mxu0
        %v925 = vadd.f32 %v836, %v924
        %v926 = vpop.f32.mrf.mxu0
        %v927 = vadd.f32 %v838, %v926
        %928 = vmatmul.bf16.gmra.mxu0 %v445
        %v929 = vpop.f32.mrf.mxu0
        %v930 = vadd.f32 %v841, %v929
        %v931 = vpop.f32.mrf.mxu0
        %v932 = vadd.f32 %v843, %v931
        %933 = vmatmul.bf16.gmra.mxu0 %v447
        %v934 = vpop.f32.mrf.mxu0
        %v935 = vadd.f32 %v846, %v934
        %v936 = vpop.f32.mrf.mxu0
        %v937 = vadd.f32 %v848, %v936
        %938 = vmatmul.bf16.gmra.mxu0 %v449
        %v939 = vpop.f32.mrf.mxu0
        %v940 = vadd.f32 %v851, %v939
        %v941 = vpop.f32.mrf.mxu0
        %v942 = vadd.f32 %v853, %v941
        %943 = vmatmul.bf16.gmra.mxu0 %v451
        %v944 = vpop.f32.mrf.mxu0
        %v945 = vadd.f32 %v856, %v944
        %v946 = vpop.f32.mrf.mxu0
        %v947 = vadd.f32 %v858, %v946
        %948 = vmatmul.bf16.gmra.mxu0 %v453
        %v949 = vpop.f32.mrf.mxu0
        %v950 = vadd.f32 %v861, %v949
        %v951 = vpop.f32.mrf.mxu0
        %v952 = vadd.f32 %v863, %v951
        %953 = vmatmul.bf16.gmra.mxu0 %v455
        %v954 = vpop.f32.mrf.mxu0
        %v955 = vadd.f32 %v866, %v954
        %v956 = vpop.f32.mrf.mxu0
        %v957 = vadd.f32 %v868, %v956
        %958 = vmatmul.bf16.gmra.mxu0 %v457
        %v959 = vpop.f32.mrf.mxu0
        %v960 = vadd.f32 %v871, %v959
        %v961 = vpop.f32.mrf.mxu0
        %v962 = vadd.f32 %v873, %v961
        %963 = vmatmul.bf16.gmra.mxu0 %v459
        %v964 = vpop.f32.mrf.mxu0
        %v965 = vadd.f32 %v876, %v964
        %v966 = vpop.f32.mrf.mxu0
        %v967 = vadd.f32 %v878, %v966
        %968 = vmatmul.bf16.gmra.mxu0 %v461
        %v969 = vpop.f32.mrf.mxu0
        %v970 = vadd.f32 %v881, %v969
        %v971 = vpop.f32.mrf.mxu0
        %v972 = vadd.f32 %v883, %v971
        %973 = vmatmul.bf16.gmra.mxu0 %v463
        %v974 = vpop.f32.mrf.mxu0
        %v975 = vadd.f32 %v886, %v974
        %v976 = vpop.f32.mrf.mxu0
        %v977 = vadd.f32 %v888, %v976
        %978 = vmatmul.bf16.gmra.mxu0 %v465
        %v979 = vpop.f32.mrf.mxu0
        %v980 = vadd.f32 %v891, %v979
        %v981 = vpop.f32.mrf.mxu0
        %v982 = vadd.f32 %v893, %v981
        %983 = vmatmul.bf16.gmra.mxu0 %v467
        %v984 = vpop.f32.mrf.mxu0
        %v985 = vadd.f32 %v896, %v984
        %v986 = vpop.f32.mrf.mxu0
        %v987 = vadd.f32 %v898, %v986
        %988 = vdwg.mxu0
        %v989 = vld [vmem:[#allocation7] sm:$0xff]
        %v990 = vld [vmem:[#allocation7 + $0x8] sm:$0xff]
        %v991 = vld [vmem:[#allocation7 + $0x10] sm:$0xff]
        %v992 = vld [vmem:[#allocation7 + $0x18] sm:$0xff]
        %v993 = vld [vmem:[#allocation7 + $0x20] sm:$0xff]
        %v994 = vld [vmem:[#allocation7 + $0x28] sm:$0xff]
        %v995 = vld [vmem:[#allocation7 + $0x30] sm:$0xff]
        %v996 = vld [vmem:[#allocation7 + $0x38] sm:$0xff]
        %v997 = vld [vmem:[#allocation7 + $0x40] sm:$0xff]
        %v998 = vld [vmem:[#allocation7 + $0x48] sm:$0xff]
        %v999 = vld [vmem:[#allocation7 + $0x50] sm:$0xff]
        %v1000 = vld [vmem:[#allocation7 + $0x58] sm:$0xff]
        %v1001 = vld [vmem:[#allocation7 + $0x60] sm:$0xff]
        %v1002 = vld [vmem:[#allocation7 + $0x68] sm:$0xff]
        %v1003 = vld [vmem:[#allocation7 + $0x70] sm:$0xff]
        %v1004 = vld [vmem:[#allocation7 + $0x78] sm:$0xff]
        %v1005 = vld [vmem:[#allocation7 + $0x80] sm:$0xff]
        %v1006 = vld [vmem:[#allocation7 + $0x88] sm:$0xff]
        %v1007 = vld [vmem:[#allocation7 + $0x90] sm:$0xff]
        %v1008 = vld [vmem:[#allocation7 + $0x98] sm:$0xff]
        %v1009 = vld [vmem:[#allocation7 + $0xa0] sm:$0xff]
        %v1010 = vld [vmem:[#allocation7 + $0xa8] sm:$0xff]
        %v1011 = vld [vmem:[#allocation7 + $0xb0] sm:$0xff]
        %v1012 = vld [vmem:[#allocation7 + $0xb8] sm:$0xff]
        %v1013 = vld [vmem:[#allocation7 + $0xc0] sm:$0xff]
        %v1014 = vld [vmem:[#allocation7 + $0xc8] sm:$0xff]
        %v1015 = vld [vmem:[#allocation7 + $0xd0] sm:$0xff]
        %v1016 = vld [vmem:[#allocation7 + $0xd8] sm:$0xff]
        %v1017 = vld [vmem:[#allocation7 + $0xe0] sm:$0xff]
        %v1018 = vld [vmem:[#allocation7 + $0xe8] sm:$0xff]
        %v1019 = vld [vmem:[#allocation7 + $0xf0] sm:$0xff]
        %v1020 = vld [vmem:[#allocation7 + $0xf8] sm:$0xff]
        %v1021 = vld [vmem:[%s4] sm:$0x3]
        %v1022 = vpack.c.bf16 %v734, %v732
        %v1023 = vpack.c.bf16 %v912, %v910
        %v1024 = vpack.c.bf16 %v739, %v737
        %v1025 = vpack.c.bf16 %v917, %v915
        %v1026 = vpack.c.bf16 %v744, %v742
        %v1027 = vpack.c.bf16 %v922, %v920
        %v1028 = vpack.c.bf16 %v749, %v747
        %v1029 = vpack.c.bf16 %v927, %v925
        %v1030 = vpack.c.bf16 %v754, %v752
        %v1031 = vpack.c.bf16 %v932, %v930
        %v1032 = vpack.c.bf16 %v759, %v757
        %v1033 = vpack.c.bf16 %v937, %v935
        %v1034 = vpack.c.bf16 %v764, %v762
        %v1035 = vpack.c.bf16 %v942, %v940
        %v1036 = vpack.c.bf16 %v769, %v767
        %v1037 = vpack.c.bf16 %v947, %v945
        %v1038 = vpack.c.bf16 %v774, %v772
        %v1039 = vpack.c.bf16 %v952, %v950
        %v1040 = vpack.c.bf16 %v779, %v777
        %v1041 = vpack.c.bf16 %v957, %v955
        %v1042 = vpack.c.bf16 %v784, %v782
        %v1043 = vpack.c.bf16 %v962, %v960
        %v1044 = vpack.c.bf16 %v789, %v787
        %v1045 = vpack.c.bf16 %v967, %v965
        %v1046 = vpack.c.bf16 %v794, %v792
        %v1047 = vpack.c.bf16 %v972, %v970
        %v1048 = vpack.c.bf16 %v799, %v797
        %v1049 = vpack.c.bf16 %v977, %v975
        %v1050 = vpack.c.bf16 %v804, %v802
        %v1051 = vpack.c.bf16 %v982, %v980
        %v1052 = vpack.c.bf16 %v809, %v807
        %v1053 = vpack.c.bf16 %v987, %v985
        %v1055 = vperm.slane %v1021, 0
        %v1056 = vperm.slane %v1021, 1
        %v1091 = vunpack.c.l.b16 %v989
        %v1092 = vunpack.c.h.b16 %v989
        %v1093 = vunpack.c.l.b16 %v990
        %v1094 = vunpack.c.h.b16 %v990
        %v1095 = vunpack.c.l.b16 %v991
        %v1096 = vunpack.c.h.b16 %v991
        %v1097 = vunpack.c.l.b16 %v992
        %v1098 = vunpack.c.h.b16 %v992
        %v1099 = vunpack.c.l.b16 %v993
        %v1100 = vunpack.c.h.b16 %v993
        %v1101 = vunpack.c.l.b16 %v994
        %v1102 = vunpack.c.h.b16 %v994
        %v1103 = vunpack.c.l.b16 %v995
        %v1104 = vunpack.c.h.b16 %v995
        %v1105 = vunpack.c.l.b16 %v996
        %v1106 = vunpack.c.h.b16 %v996
        %v1107 = vunpack.c.l.b16 %v997
        %v1108 = vunpack.c.h.b16 %v997
        %v1109 = vunpack.c.l.b16 %v998
        %v1110 = vunpack.c.h.b16 %v998
        %v1111 = vunpack.c.l.b16 %v999
        %v1112 = vunpack.c.h.b16 %v999
        %v1113 = vunpack.c.l.b16 %v1000
        %v1114 = vunpack.c.h.b16 %v1000
        %v1115 = vunpack.c.l.b16 %v1001
        %v1116 = vunpack.c.h.b16 %v1001
        %v1117 = vunpack.c.l.b16 %v1002
        %v1118 = vunpack.c.h.b16 %v1002
        %v1119 = vunpack.c.l.b16 %v1003
        %v1120 = vunpack.c.h.b16 %v1003
        %v1121 = vunpack.c.l.b16 %v1004
        %v1122 = vunpack.c.h.b16 %v1004
        %v1123 = vunpack.c.l.b16 %v1005
        %v1124 = vunpack.c.h.b16 %v1005
        %v1125 = vunpack.c.l.b16 %v1006
        %v1126 = vunpack.c.h.b16 %v1006
        %v1127 = vunpack.c.l.b16 %v1007
        %v1128 = vunpack.c.h.b16 %v1007
        %v1129 = vunpack.c.l.b16 %v1008
        %v1130 = vunpack.c.h.b16 %v1008
        %v1131 = vunpack.c.l.b16 %v1009
        %v1132 = vunpack.c.h.b16 %v1009
        %v1133 = vunpack.c.l.b16 %v1010
        %v1134 = vunpack.c.h.b16 %v1010
        %v1135 = vunpack.c.l.b16 %v1011
        %v1136 = vunpack.c.h.b16 %v1011
        %v1137 = vunpack.c.l.b16 %v1012
        %v1138 = vunpack.c.h.b16 %v1012
        %v1139 = vunpack.c.l.b16 %v1013
        %v1140 = vunpack.c.h.b16 %v1013
        %v1141 = vunpack.c.l.b16 %v1014
        %v1142 = vunpack.c.h.b16 %v1014
        %v1143 = vunpack.c.l.b16 %v1015
        %v1144 = vunpack.c.h.b16 %v1015
        %v1145 = vunpack.c.l.b16 %v1016
        %v1146 = vunpack.c.h.b16 %v1016
        %v1147 = vunpack.c.l.b16 %v1017
        %v1148 = vunpack.c.h.b16 %v1017
        %v1149 = vunpack.c.l.b16 %v1018
        %v1150 = vunpack.c.h.b16 %v1018
        %v1151 = vunpack.c.l.b16 %v1019
        %v1152 = vunpack.c.h.b16 %v1019
        %v1153 = vunpack.c.l.b16 %v1020
        %v1154 = vunpack.c.h.b16 %v1020
        %v1155 = vpack.c.b16 %v1093, %v1091
        %v1156 = vpack.c.b16 %v1094, %v1092
        %v1157 = vpack.c.b16 %v1097, %v1095
        %v1158 = vpack.c.b16 %v1098, %v1096
        %v1159 = vpack.c.b16 %v1101, %v1099
        %v1160 = vpack.c.b16 %v1102, %v1100
        %v1161 = vpack.c.b16 %v1105, %v1103
        %v1162 = vpack.c.b16 %v1106, %v1104
        %v1163 = vpack.c.b16 %v1109, %v1107
        %v1164 = vpack.c.b16 %v1110, %v1108
        %v1165 = vpack.c.b16 %v1113, %v1111
        %v1166 = vpack.c.b16 %v1114, %v1112
        %v1167 = vpack.c.b16 %v1117, %v1115
        %v1168 = vpack.c.b16 %v1118, %v1116
        %v1169 = vpack.c.b16 %v1121, %v1119
        %v1170 = vpack.c.b16 %v1122, %v1120
        %v1171 = vpack.c.b16 %v1125, %v1123
        %v1172 = vpack.c.b16 %v1126, %v1124
        %v1173 = vpack.c.b16 %v1129, %v1127
        %v1174 = vpack.c.b16 %v1130, %v1128
        %v1175 = vpack.c.b16 %v1133, %v1131
        %v1176 = vpack.c.b16 %v1134, %v1132
        %v1177 = vpack.c.b16 %v1137, %v1135
        %v1178 = vpack.c.b16 %v1138, %v1136
        %v1179 = vpack.c.b16 %v1141, %v1139
        %v1180 = vpack.c.b16 %v1142, %v1140
        %v1181 = vpack.c.b16 %v1145, %v1143
        %v1182 = vpack.c.b16 %v1146, %v1144
        %v1183 = vpack.c.b16 %v1149, %v1147
        %v1184 = vpack.c.b16 %v1150, %v1148
        %v1185 = vpack.c.b16 %v1153, %v1151
        %v1186 = vpack.c.b16 %v1154, %v1152
        %1219 = vmatpush.bf16.msra.mxu0 %v1169
        %1220 = vmatpush.bf16.msra.mxu0 %v1167
        %1221 = vmatpush.bf16.msra.mxu0 %v1165
        %1222 = vmatpush.bf16.msra.mxu0 %v1163
        %1223 = vmatpush.bf16.msra.mxu0 %v1161
        %1224 = vmatpush.bf16.msra.mxu0 %v1159
        %1225 = vmatpush.bf16.msra.mxu0 %v1157
        %1226 = vmatpush.bf16.msra.mxu0 %v1155
        %1227 = vmatmul.bf16.gmra.mxu0 %v1022
        %v1228 = vpop.f32.mrf.mxu0
        %v1229 = vadd.f32 %v1055, %v1228
        %v1230 = vpop.f32.mrf.mxu0
        %v1231 = vadd.f32 %v1055, %v1230
        %1232 = vmatmul.bf16.gmra.mxu0 %v1024
        %v1233 = vpop.f32.mrf.mxu0
        %v1234 = vadd.f32 %v1055, %v1233
        %v1235 = vpop.f32.mrf.mxu0
        %v1236 = vadd.f32 %v1055, %v1235
        %1237 = vmatmul.bf16.gmra.mxu0 %v1026
        %v1238 = vpop.f32.mrf.mxu0
        %v1239 = vadd.f32 %v1055, %v1238
        %v1240 = vpop.f32.mrf.mxu0
        %v1241 = vadd.f32 %v1055, %v1240
        %1242 = vmatmul.bf16.gmra.mxu0 %v1028
        %v1243 = vpop.f32.mrf.mxu0
        %v1244 = vadd.f32 %v1055, %v1243
        %v1245 = vpop.f32.mrf.mxu0
        %v1246 = vadd.f32 %v1055, %v1245
        %1247 = vmatmul.bf16.gmra.mxu0 %v1030
        %v1248 = vpop.f32.mrf.mxu0
        %v1249 = vadd.f32 %v1055, %v1248
        %v1250 = vpop.f32.mrf.mxu0
        %v1251 = vadd.f32 %v1055, %v1250
        %1252 = vmatmul.bf16.gmra.mxu0 %v1032
        %v1253 = vpop.f32.mrf.mxu0
        %v1254 = vadd.f32 %v1055, %v1253
        %v1255 = vpop.f32.mrf.mxu0
        %v1256 = vadd.f32 %v1055, %v1255
        %1257 = vmatmul.bf16.gmra.mxu0 %v1034
        %v1258 = vpop.f32.mrf.mxu0
        %v1259 = vadd.f32 %v1055, %v1258
        %v1260 = vpop.f32.mrf.mxu0
        %v1261 = vadd.f32 %v1055, %v1260
        %1262 = vmatmul.bf16.gmra.mxu0 %v1036
        %v1263 = vpop.f32.mrf.mxu0
        %v1264 = vadd.f32 %v1055, %v1263
        %v1265 = vpop.f32.mrf.mxu0
        %v1266 = vadd.f32 %v1055, %v1265
        %1267 = vmatmul.bf16.gmra.mxu0 %v1038
        %v1268 = vpop.f32.mrf.mxu0
        %v1269 = vadd.f32 %v1055, %v1268
        %v1270 = vpop.f32.mrf.mxu0
        %v1271 = vadd.f32 %v1055, %v1270
        %1272 = vmatmul.bf16.gmra.mxu0 %v1040
        %v1273 = vpop.f32.mrf.mxu0
        %v1274 = vadd.f32 %v1055, %v1273
        %v1275 = vpop.f32.mrf.mxu0
        %v1276 = vadd.f32 %v1055, %v1275
        %1277 = vmatmul.bf16.gmra.mxu0 %v1042
        %v1278 = vpop.f32.mrf.mxu0
        %v1279 = vadd.f32 %v1055, %v1278
        %v1280 = vpop.f32.mrf.mxu0
        %v1281 = vadd.f32 %v1055, %v1280
        %1282 = vmatmul.bf16.gmra.mxu0 %v1044
        %v1283 = vpop.f32.mrf.mxu0
        %v1284 = vadd.f32 %v1055, %v1283
        %v1285 = vpop.f32.mrf.mxu0
        %v1286 = vadd.f32 %v1055, %v1285
        %1287 = vmatmul.bf16.gmra.mxu0 %v1046
        %v1288 = vpop.f32.mrf.mxu0
        %v1289 = vadd.f32 %v1055, %v1288
        %v1290 = vpop.f32.mrf.mxu0
        %v1291 = vadd.f32 %v1055, %v1290
        %1292 = vmatmul.bf16.gmra.mxu0 %v1048
        %v1293 = vpop.f32.mrf.mxu0
        %v1294 = vadd.f32 %v1055, %v1293
        %v1295 = vpop.f32.mrf.mxu0
        %v1296 = vadd.f32 %v1055, %v1295
        %1297 = vmatmul.bf16.gmra.mxu0 %v1050
        %v1298 = vpop.f32.mrf.mxu0
        %v1299 = vadd.f32 %v1055, %v1298
        %v1300 = vpop.f32.mrf.mxu0
        %v1301 = vadd.f32 %v1055, %v1300
        %1302 = vmatmul.bf16.gmra.mxu0 %v1052
        %v1303 = vpop.f32.mrf.mxu0
        %v1304 = vadd.f32 %v1055, %v1303
        %v1305 = vpop.f32.mrf.mxu0
        %v1306 = vadd.f32 %v1055, %v1305
        %1307 = vdwg.mxu0
        %1308 = vmatpush.bf16.msra.mxu0 %v1185
        %1309 = vmatpush.bf16.msra.mxu0 %v1183
        %1310 = vmatpush.bf16.msra.mxu0 %v1181
        %1311 = vmatpush.bf16.msra.mxu0 %v1179
        %1312 = vmatpush.bf16.msra.mxu0 %v1177
        %1313 = vmatpush.bf16.msra.mxu0 %v1175
        %1314 = vmatpush.bf16.msra.mxu0 %v1173
        %1315 = vmatpush.bf16.msra.mxu0 %v1171
        %1316 = vmatmul.bf16.gmra.mxu0 %v1023
        %v1317 = vpop.f32.mrf.mxu0
        %v1318 = vadd.f32 %v1229, %v1317
        %v1319 = vpop.f32.mrf.mxu0
        %v1320 = vadd.f32 %v1231, %v1319
        %1321 = vmatmul.bf16.gmra.mxu0 %v1025
        %v1322 = vpop.f32.mrf.mxu0
        %v1323 = vadd.f32 %v1234, %v1322
        %v1324 = vpop.f32.mrf.mxu0
        %v1325 = vadd.f32 %v1236, %v1324
        %1326 = vmatmul.bf16.gmra.mxu0 %v1027
        %v1327 = vpop.f32.mrf.mxu0
        %v1328 = vadd.f32 %v1239, %v1327
        %v1329 = vpop.f32.mrf.mxu0
        %v1330 = vadd.f32 %v1241, %v1329
        %1331 = vmatmul.bf16.gmra.mxu0 %v1029
        %v1332 = vpop.f32.mrf.mxu0
        %v1333 = vadd.f32 %v1244, %v1332
        %v1334 = vpop.f32.mrf.mxu0
        %v1335 = vadd.f32 %v1246, %v1334
        %1336 = vmatmul.bf16.gmra.mxu0 %v1031
        %v1337 = vpop.f32.mrf.mxu0
        %v1338 = vadd.f32 %v1249, %v1337
        %v1339 = vpop.f32.mrf.mxu0
        %v1340 = vadd.f32 %v1251, %v1339
        %1341 = vmatmul.bf16.gmra.mxu0 %v1033
        %v1342 = vpop.f32.mrf.mxu0
        %v1343 = vadd.f32 %v1254, %v1342
        %v1344 = vpop.f32.mrf.mxu0
        %v1345 = vadd.f32 %v1256, %v1344
        %1346 = vmatmul.bf16.gmra.mxu0 %v1035
        %v1347 = vpop.f32.mrf.mxu0
        %v1348 = vadd.f32 %v1259, %v1347
        %v1349 = vpop.f32.mrf.mxu0
        %v1350 = vadd.f32 %v1261, %v1349
        %1351 = vmatmul.bf16.gmra.mxu0 %v1037
        %v1352 = vpop.f32.mrf.mxu0
        %v1353 = vadd.f32 %v1264, %v1352
        %v1354 = vpop.f32.mrf.mxu0
        %v1355 = vadd.f32 %v1266, %v1354
        %1356 = vmatmul.bf16.gmra.mxu0 %v1039
        %v1357 = vpop.f32.mrf.mxu0
        %v1358 = vadd.f32 %v1269, %v1357
        %v1359 = vpop.f32.mrf.mxu0
        %v1360 = vadd.f32 %v1271, %v1359
        %1361 = vmatmul.bf16.gmra.mxu0 %v1041
        %v1362 = vpop.f32.mrf.mxu0
        %v1363 = vadd.f32 %v1274, %v1362
        %v1364 = vpop.f32.mrf.mxu0
        %v1365 = vadd.f32 %v1276, %v1364
        %1366 = vmatmul.bf16.gmra.mxu0 %v1043
        %v1367 = vpop.f32.mrf.mxu0
        %v1368 = vadd.f32 %v1279, %v1367
        %v1369 = vpop.f32.mrf.mxu0
        %v1370 = vadd.f32 %v1281, %v1369
        %1371 = vmatmul.bf16.gmra.mxu0 %v1045
        %v1372 = vpop.f32.mrf.mxu0
        %v1373 = vadd.f32 %v1284, %v1372
        %v1374 = vpop.f32.mrf.mxu0
        %v1375 = vadd.f32 %v1286, %v1374
        %1376 = vmatmul.bf16.gmra.mxu0 %v1047
        %v1377 = vpop.f32.mrf.mxu0
        %v1378 = vadd.f32 %v1289, %v1377
        %v1379 = vpop.f32.mrf.mxu0
        %v1380 = vadd.f32 %v1291, %v1379
        %1381 = vmatmul.bf16.gmra.mxu0 %v1049
        %v1382 = vpop.f32.mrf.mxu0
        %v1383 = vadd.f32 %v1294, %v1382
        %v1384 = vpop.f32.mrf.mxu0
        %v1385 = vadd.f32 %v1296, %v1384
        %1386 = vmatmul.bf16.gmra.mxu0 %v1051
        %v1387 = vpop.f32.mrf.mxu0
        %v1388 = vadd.f32 %v1299, %v1387
        %v1389 = vpop.f32.mrf.mxu0
        %v1390 = vadd.f32 %v1301, %v1389
        %1391 = vmatmul.bf16.gmra.mxu0 %v1053
        %v1392 = vpop.f32.mrf.mxu0
        %v1393 = vadd.f32 %v1304, %v1392
        %v1394 = vpop.f32.mrf.mxu0
        %v1395 = vadd.f32 %v1306, %v1394
        %1396 = vdwg.mxu0
        %1397 = vmatpush.bf16.msra.mxu0 %v1170
        %1398 = vmatpush.bf16.msra.mxu0 %v1168
        %1399 = vmatpush.bf16.msra.mxu0 %v1166
        %1400 = vmatpush.bf16.msra.mxu0 %v1164
        %1401 = vmatpush.bf16.msra.mxu0 %v1162
        %1402 = vmatpush.bf16.msra.mxu0 %v1160
        %1403 = vmatpush.bf16.msra.mxu0 %v1158
        %1404 = vmatpush.bf16.msra.mxu0 %v1156
        %1405 = vmatmul.bf16.gmra.mxu0 %v1022
        %v1406 = vpop.f32.mrf.mxu0
        %v1407 = vadd.f32 %v1056, %v1406
        %v1408 = vpop.f32.mrf.mxu0
        %v1409 = vadd.f32 %v1056, %v1408
        %1410 = vmatmul.bf16.gmra.mxu0 %v1024
        %v1411 = vpop.f32.mrf.mxu0
        %v1412 = vadd.f32 %v1056, %v1411
        %v1413 = vpop.f32.mrf.mxu0
        %v1414 = vadd.f32 %v1056, %v1413
        %1415 = vmatmul.bf16.gmra.mxu0 %v1026
        %v1416 = vpop.f32.mrf.mxu0
        %v1417 = vadd.f32 %v1056, %v1416
        %v1418 = vpop.f32.mrf.mxu0
        %v1419 = vadd.f32 %v1056, %v1418
        %1420 = vmatmul.bf16.gmra.mxu0 %v1028
        %v1421 = vpop.f32.mrf.mxu0
        %v1422 = vadd.f32 %v1056, %v1421
        %v1423 = vpop.f32.mrf.mxu0
        %v1424 = vadd.f32 %v1056, %v1423
        %1425 = vmatmul.bf16.gmra.mxu0 %v1030
        %v1426 = vpop.f32.mrf.mxu0
        %v1427 = vadd.f32 %v1056, %v1426
        %v1428 = vpop.f32.mrf.mxu0
        %v1429 = vadd.f32 %v1056, %v1428
        %1430 = vmatmul.bf16.gmra.mxu0 %v1032
        %v1431 = vpop.f32.mrf.mxu0
        %v1432 = vadd.f32 %v1056, %v1431
        %v1433 = vpop.f32.mrf.mxu0
        %v1434 = vadd.f32 %v1056, %v1433
        %1435 = vmatmul.bf16.gmra.mxu0 %v1034
        %v1436 = vpop.f32.mrf.mxu0
        %v1437 = vadd.f32 %v1056, %v1436
        %v1438 = vpop.f32.mrf.mxu0
        %v1439 = vadd.f32 %v1056, %v1438
        %1440 = vmatmul.bf16.gmra.mxu0 %v1036
        %v1441 = vpop.f32.mrf.mxu0
        %v1442 = vadd.f32 %v1056, %v1441
        %v1443 = vpop.f32.mrf.mxu0
        %v1444 = vadd.f32 %v1056, %v1443
        %1445 = vmatmul.bf16.gmra.mxu0 %v1038
        %v1446 = vpop.f32.mrf.mxu0
        %v1447 = vadd.f32 %v1056, %v1446
        %v1448 = vpop.f32.mrf.mxu0
        %v1449 = vadd.f32 %v1056, %v1448
        %1450 = vmatmul.bf16.gmra.mxu0 %v1040
        %v1451 = vpop.f32.mrf.mxu0
        %v1452 = vadd.f32 %v1056, %v1451
        %v1453 = vpop.f32.mrf.mxu0
        %v1454 = vadd.f32 %v1056, %v1453
        %1455 = vmatmul.bf16.gmra.mxu0 %v1042
        %v1456 = vpop.f32.mrf.mxu0
        %v1457 = vadd.f32 %v1056, %v1456
        %v1458 = vpop.f32.mrf.mxu0
        %v1459 = vadd.f32 %v1056, %v1458
        %1460 = vmatmul.bf16.gmra.mxu0 %v1044
        %v1461 = vpop.f32.mrf.mxu0
        %v1462 = vadd.f32 %v1056, %v1461
        %v1463 = vpop.f32.mrf.mxu0
        %v1464 = vadd.f32 %v1056, %v1463
        %1465 = vmatmul.bf16.gmra.mxu0 %v1046
        %v1466 = vpop.f32.mrf.mxu0
        %v1467 = vadd.f32 %v1056, %v1466
        %v1468 = vpop.f32.mrf.mxu0
        %v1469 = vadd.f32 %v1056, %v1468
        %1470 = vmatmul.bf16.gmra.mxu0 %v1048
        %v1471 = vpop.f32.mrf.mxu0
        %v1472 = vadd.f32 %v1056, %v1471
        %v1473 = vpop.f32.mrf.mxu0
        %v1474 = vadd.f32 %v1056, %v1473
        %1475 = vmatmul.bf16.gmra.mxu0 %v1050
        %v1476 = vpop.f32.mrf.mxu0
        %v1477 = vadd.f32 %v1056, %v1476
        %v1478 = vpop.f32.mrf.mxu0
        %v1479 = vadd.f32 %v1056, %v1478
        %1480 = vmatmul.bf16.gmra.mxu0 %v1052
        %v1481 = vpop.f32.mrf.mxu0
        %v1482 = vadd.f32 %v1056, %v1481
        %v1483 = vpop.f32.mrf.mxu0
        %v1484 = vadd.f32 %v1056, %v1483
        %1485 = vdwg.mxu0
        %1486 = vmatpush.bf16.msra.mxu0 %v1186
        %1487 = vmatpush.bf16.msra.mxu0 %v1184
        %1488 = vmatpush.bf16.msra.mxu0 %v1182
        %1489 = vmatpush.bf16.msra.mxu0 %v1180
        %1490 = vmatpush.bf16.msra.mxu0 %v1178
        %1491 = vmatpush.bf16.msra.mxu0 %v1176
        %1492 = vmatpush.bf16.msra.mxu0 %v1174
        %1493 = vmatpush.bf16.msra.mxu0 %v1172
        %1494 = vmatmul.bf16.gmra.mxu0 %v1023
        %v1495 = vpop.f32.mrf.mxu0
        %v1496 = vadd.f32 %v1407, %v1495
        %v1497 = vpop.f32.mrf.mxu0
        %v1498 = vadd.f32 %v1409, %v1497
        %1499 = vmatmul.bf16.gmra.mxu0 %v1025
        %v1500 = vpop.f32.mrf.mxu0
        %v1501 = vadd.f32 %v1412, %v1500
        %v1502 = vpop.f32.mrf.mxu0
        %v1503 = vadd.f32 %v1414, %v1502
        %1504 = vmatmul.bf16.gmra.mxu0 %v1027
        %v1505 = vpop.f32.mrf.mxu0
        %v1506 = vadd.f32 %v1417, %v1505
        %v1507 = vpop.f32.mrf.mxu0
        %v1508 = vadd.f32 %v1419, %v1507
        %1509 = vmatmul.bf16.gmra.mxu0 %v1029
        %v1510 = vpop.f32.mrf.mxu0
        %v1511 = vadd.f32 %v1422, %v1510
        %v1512 = vpop.f32.mrf.mxu0
        %v1513 = vadd.f32 %v1424, %v1512
        %1514 = vmatmul.bf16.gmra.mxu0 %v1031
        %v1515 = vpop.f32.mrf.mxu0
        %v1516 = vadd.f32 %v1427, %v1515
        %v1517 = vpop.f32.mrf.mxu0
        %v1518 = vadd.f32 %v1429, %v1517
        %1519 = vmatmul.bf16.gmra.mxu0 %v1033
        %v1520 = vpop.f32.mrf.mxu0
        %v1521 = vadd.f32 %v1432, %v1520
        %v1522 = vpop.f32.mrf.mxu0
        %v1523 = vadd.f32 %v1434, %v1522
        %1524 = vmatmul.bf16.gmra.mxu0 %v1035
        %v1525 = vpop.f32.mrf.mxu0
        %v1526 = vadd.f32 %v1437, %v1525
        %v1527 = vpop.f32.mrf.mxu0
        %v1528 = vadd.f32 %v1439, %v1527
        %1529 = vmatmul.bf16.gmra.mxu0 %v1037
        %v1530 = vpop.f32.mrf.mxu0
        %v1531 = vadd.f32 %v1442, %v1530
        %v1532 = vpop.f32.mrf.mxu0
        %v1533 = vadd.f32 %v1444, %v1532
        %1534 = vmatmul.bf16.gmra.mxu0 %v1039
        %v1535 = vpop.f32.mrf.mxu0
        %v1536 = vadd.f32 %v1447, %v1535
        %v1537 = vpop.f32.mrf.mxu0
        %v1538 = vadd.f32 %v1449, %v1537
        %1539 = vmatmul.bf16.gmra.mxu0 %v1041
        %v1540 = vpop.f32.mrf.mxu0
        %v1541 = vadd.f32 %v1452, %v1540
        %v1542 = vpop.f32.mrf.mxu0
        %v1543 = vadd.f32 %v1454, %v1542
        %1544 = vmatmul.bf16.gmra.mxu0 %v1043
        %v1545 = vpop.f32.mrf.mxu0
        %v1546 = vadd.f32 %v1457, %v1545
        %v1547 = vpop.f32.mrf.mxu0
        %v1548 = vadd.f32 %v1459, %v1547
        %1549 = vmatmul.bf16.gmra.mxu0 %v1045
        %v1550 = vpop.f32.mrf.mxu0
        %v1551 = vadd.f32 %v1462, %v1550
        %v1552 = vpop.f32.mrf.mxu0
        %v1553 = vadd.f32 %v1464, %v1552
        %1554 = vmatmul.bf16.gmra.mxu0 %v1047
        %v1555 = vpop.f32.mrf.mxu0
        %v1556 = vadd.f32 %v1467, %v1555
        %v1557 = vpop.f32.mrf.mxu0
        %v1558 = vadd.f32 %v1469, %v1557
        %1559 = vmatmul.bf16.gmra.mxu0 %v1049
        %v1560 = vpop.f32.mrf.mxu0
        %v1561 = vadd.f32 %v1472, %v1560
        %v1562 = vpop.f32.mrf.mxu0
        %v1563 = vadd.f32 %v1474, %v1562
        %1564 = vmatmul.bf16.gmra.mxu0 %v1051
        %v1565 = vpop.f32.mrf.mxu0
        %v1566 = vadd.f32 %v1477, %v1565
        %v1567 = vpop.f32.mrf.mxu0
        %v1568 = vadd.f32 %v1479, %v1567
        %1569 = vmatmul.bf16.gmra.mxu0 %v1053
        %v1570 = vpop.f32.mrf.mxu0
        %v1571 = vadd.f32 %v1482, %v1570
        %v1572 = vpop.f32.mrf.mxu0
        %v1573 = vadd.f32 %v1484, %v1572
        %1574 = vdwg.mxu0
        %v1575 = vld [vmem:[%s5] sm:$0x3]
        %v1576 = vld [vmem:[#allocation2] sm:$0x1]
        %v1578 = vperm.slane %v1575, 0
        %v1579 = vperm.slane %v1575, 1
        %v1582 = vmul.f32 %v1318, %v1578
        %v1583 = vmul.f32 %v1496, %v1579
        %v1584 = vmul.f32 %v1320, %v1578
        %v1585 = vmul.f32 %v1498, %v1579
        %v1586 = vmul.f32 %v1323, %v1578
        %v1587 = vmul.f32 %v1501, %v1579
        %v1588 = vmul.f32 %v1325, %v1578
        %v1589 = vmul.f32 %v1503, %v1579
        %v1590 = vmul.f32 %v1328, %v1578
        %v1591 = vmul.f32 %v1506, %v1579
        %v1592 = vmul.f32 %v1330, %v1578
        %v1593 = vmul.f32 %v1508, %v1579
        %v1594 = vmul.f32 %v1333, %v1578
        %v1595 = vmul.f32 %v1511, %v1579
        %v1596 = vmul.f32 %v1335, %v1578
        %v1597 = vmul.f32 %v1513, %v1579
        %v1598 = vmul.f32 %v1338, %v1578
        %v1599 = vmul.f32 %v1516, %v1579
        %v1600 = vmul.f32 %v1340, %v1578
        %v1601 = vmul.f32 %v1518, %v1579
        %v1602 = vmul.f32 %v1343, %v1578
        %v1603 = vmul.f32 %v1521, %v1579
        %v1604 = vmul.f32 %v1345, %v1578
        %v1605 = vmul.f32 %v1523, %v1579
        %v1606 = vmul.f32 %v1348, %v1578
        %v1607 = vmul.f32 %v1526, %v1579
        %v1608 = vmul.f32 %v1350, %v1578
        %v1609 = vmul.f32 %v1528, %v1579
        %v1610 = vmul.f32 %v1353, %v1578
        %v1611 = vmul.f32 %v1531, %v1579
        %v1612 = vmul.f32 %v1355, %v1578
        %v1613 = vmul.f32 %v1533, %v1579
        %v1614 = vmul.f32 %v1358, %v1578
        %v1615 = vmul.f32 %v1536, %v1579
        %v1616 = vmul.f32 %v1360, %v1578
        %v1617 = vmul.f32 %v1538, %v1579
        %v1618 = vmul.f32 %v1363, %v1578
        %v1619 = vmul.f32 %v1541, %v1579
        %v1620 = vmul.f32 %v1365, %v1578
        %v1621 = vmul.f32 %v1543, %v1579
        %v1622 = vmul.f32 %v1368, %v1578
        %v1623 = vmul.f32 %v1546, %v1579
        %v1624 = vmul.f32 %v1370, %v1578
        %v1625 = vmul.f32 %v1548, %v1579
        %v1626 = vmul.f32 %v1373, %v1578
        %v1627 = vmul.f32 %v1551, %v1579
        %v1628 = vmul.f32 %v1375, %v1578
        %v1629 = vmul.f32 %v1553, %v1579
        %v1630 = vmul.f32 %v1378, %v1578
        %v1631 = vmul.f32 %v1556, %v1579
        %v1632 = vmul.f32 %v1380, %v1578
        %v1633 = vmul.f32 %v1558, %v1579
        %v1634 = vmul.f32 %v1383, %v1578
        %v1635 = vmul.f32 %v1561, %v1579
        %v1636 = vmul.f32 %v1385, %v1578
        %v1637 = vmul.f32 %v1563, %v1579
        %v1638 = vmul.f32 %v1388, %v1578
        %v1639 = vmul.f32 %v1566, %v1579
        %v1640 = vmul.f32 %v1390, %v1578
        %v1641 = vmul.f32 %v1568, %v1579
        %v1642 = vmul.f32 %v1393, %v1578
        %v1643 = vmul.f32 %v1571, %v1579
        %v1644 = vmul.f32 %v1395, %v1578
        %v1645 = vmul.f32 %v1573, %v1579
        %v1646 = vadd.f32 %v1582, %v1583
        %1647 = vadd.xlane.f32.xlu0 %v1646
        %v1648 = vpop.xlane.xlu0 %1647
        %v1649 = vadd.f32 %v1584, %v1585
        %1650 = vadd.xlane.f32.xlu0 %v1649
        %v1651 = vpop.xlane.xlu0 %1650
        %v1652 = vadd.f32 %v1586, %v1587
        %1653 = vadd.xlane.f32.xlu0 %v1652
        %v1654 = vpop.xlane.xlu0 %1653
        %v1655 = vadd.f32 %v1588, %v1589
        %1656 = vadd.xlane.f32.xlu0 %v1655
        %v1657 = vpop.xlane.xlu0 %1656
        %v1658 = vadd.f32 %v1590, %v1591
        %1659 = vadd.xlane.f32.xlu0 %v1658
        %v1660 = vpop.xlane.xlu0 %1659
        %v1661 = vadd.f32 %v1592, %v1593
        %1662 = vadd.xlane.f32.xlu0 %v1661
        %v1663 = vpop.xlane.xlu0 %1662
        %v1664 = vadd.f32 %v1594, %v1595
        %1665 = vadd.xlane.f32.xlu0 %v1664
        %v1666 = vpop.xlane.xlu0 %1665
        %v1667 = vadd.f32 %v1596, %v1597
        %1668 = vadd.xlane.f32.xlu0 %v1667
        %v1669 = vpop.xlane.xlu0 %1668
        %v1670 = vadd.f32 %v1598, %v1599
        %1671 = vadd.xlane.f32.xlu0 %v1670
        %v1672 = vpop.xlane.xlu0 %1671
        %v1673 = vadd.f32 %v1600, %v1601
        %1674 = vadd.xlane.f32.xlu0 %v1673
        %v1675 = vpop.xlane.xlu0 %1674
        %v1676 = vadd.f32 %v1602, %v1603
        %1677 = vadd.xlane.f32.xlu0 %v1676
        %v1678 = vpop.xlane.xlu0 %1677
        %v1679 = vadd.f32 %v1604, %v1605
        %1680 = vadd.xlane.f32.xlu0 %v1679
        %v1681 = vpop.xlane.xlu0 %1680
        %v1682 = vadd.f32 %v1606, %v1607
        %1683 = vadd.xlane.f32.xlu0 %v1682
        %v1684 = vpop.xlane.xlu0 %1683
        %v1685 = vadd.f32 %v1608, %v1609
        %1686 = vadd.xlane.f32.xlu0 %v1685
        %v1687 = vpop.xlane.xlu0 %1686
        %v1688 = vadd.f32 %v1610, %v1611
        %1689 = vadd.xlane.f32.xlu0 %v1688
        %v1690 = vpop.xlane.xlu0 %1689
        %v1691 = vadd.f32 %v1612, %v1613
        %1692 = vadd.xlane.f32.xlu0 %v1691
        %v1693 = vpop.xlane.xlu0 %1692
        %v1694 = vadd.f32 %v1614, %v1615
        %1695 = vadd.xlane.f32.xlu0 %v1694
        %v1696 = vpop.xlane.xlu0 %1695
        %v1697 = vadd.f32 %v1616, %v1617
        %1698 = vadd.xlane.f32.xlu0 %v1697
        %v1699 = vpop.xlane.xlu0 %1698
        %v1700 = vadd.f32 %v1618, %v1619
        %1701 = vadd.xlane.f32.xlu0 %v1700
        %v1702 = vpop.xlane.xlu0 %1701
        %v1703 = vadd.f32 %v1620, %v1621
        %1704 = vadd.xlane.f32.xlu0 %v1703
        %v1705 = vpop.xlane.xlu0 %1704
        %v1706 = vadd.f32 %v1622, %v1623
        %1707 = vadd.xlane.f32.xlu0 %v1706
        %v1708 = vpop.xlane.xlu0 %1707
        %v1709 = vadd.f32 %v1624, %v1625
        %1710 = vadd.xlane.f32.xlu0 %v1709
        %v1711 = vpop.xlane.xlu0 %1710
        %v1712 = vadd.f32 %v1626, %v1627
        %1713 = vadd.xlane.f32.xlu0 %v1712
        %v1714 = vpop.xlane.xlu0 %1713
        %v1715 = vadd.f32 %v1628, %v1629
        %1716 = vadd.xlane.f32.xlu0 %v1715
        %v1717 = vpop.xlane.xlu0 %1716
        %v1718 = vadd.f32 %v1630, %v1631
        %1719 = vadd.xlane.f32.xlu0 %v1718
        %v1720 = vpop.xlane.xlu0 %1719
        %v1721 = vadd.f32 %v1632, %v1633
        %1722 = vadd.xlane.f32.xlu0 %v1721
        %v1723 = vpop.xlane.xlu0 %1722
        %v1724 = vadd.f32 %v1634, %v1635
        %1725 = vadd.xlane.f32.xlu0 %v1724
        %v1726 = vpop.xlane.xlu0 %1725
        %v1727 = vadd.f32 %v1636, %v1637
        %1728 = vadd.xlane.f32.xlu0 %v1727
        %v1729 = vpop.xlane.xlu0 %1728
        %v1730 = vadd.f32 %v1638, %v1639
        %1731 = vadd.xlane.f32.xlu0 %v1730
        %v1732 = vpop.xlane.xlu0 %1731
        %v1733 = vadd.f32 %v1640, %v1641
        %1734 = vadd.xlane.f32.xlu0 %v1733
        %v1735 = vpop.xlane.xlu0 %1734
        %v1736 = vadd.f32 %v1642, %v1643
        %1737 = vadd.xlane.f32.xlu0 %v1736
        %v1738 = vpop.xlane.xlu0 %1737
        %v1739 = vadd.f32 %v1644, %v1645
        %1740 = vadd.xlane.f32.xlu0 %v1739
        %v1741 = vpop.xlane.xlu0 %1740
        %v1743 = vperm.slane %v1576, 0
        %v1745 = vadd.f32 %v1648, %v1743
        %v1746 = vadd.f32 %v1651, %v1743
        %v1747 = vadd.f32 %v1654, %v1743
        %v1748 = vadd.f32 %v1657, %v1743
        %v1749 = vadd.f32 %v1660, %v1743
        %v1750 = vadd.f32 %v1663, %v1743
        %v1751 = vadd.f32 %v1666, %v1743
        %v1752 = vadd.f32 %v1669, %v1743
        %v1753 = vadd.f32 %v1672, %v1743
        %v1754 = vadd.f32 %v1675, %v1743
        %v1755 = vadd.f32 %v1678, %v1743
        %v1756 = vadd.f32 %v1681, %v1743
        %v1757 = vadd.f32 %v1684, %v1743
        %v1758 = vadd.f32 %v1687, %v1743
        %v1759 = vadd.f32 %v1690, %v1743
        %v1760 = vadd.f32 %v1693, %v1743
        %v1761 = vadd.f32 %v1696, %v1743
        %v1762 = vadd.f32 %v1699, %v1743
        %v1763 = vadd.f32 %v1702, %v1743
        %v1764 = vadd.f32 %v1705, %v1743
        %v1765 = vadd.f32 %v1708, %v1743
        %v1766 = vadd.f32 %v1711, %v1743
        %v1767 = vadd.f32 %v1714, %v1743
        %v1768 = vadd.f32 %v1717, %v1743
        %v1769 = vadd.f32 %v1720, %v1743
        %v1770 = vadd.f32 %v1723, %v1743
        %v1771 = vadd.f32 %v1726, %v1743
        %v1772 = vadd.f32 %v1729, %v1743
        %v1773 = vadd.f32 %v1732, %v1743
        %v1774 = vadd.f32 %v1735, %v1743
        %v1775 = vadd.f32 %v1738, %v1743
        %v1776 = vadd.f32 %v1741, %v1743
        %vm1777 = vcmask 7168
        %1778 = vst.msk [vmem:[%s337] sm:$0xff] %vm1777, %v1745
        %1779 = vst.msk [vmem:[%s337 + $0x8] sm:$0xff] %vm1777, %v1746
        %1780 = vst.msk [vmem:[%s337 + $0x10] sm:$0xff] %vm1777, %v1747
        %1781 = vst.msk [vmem:[%s337 + $0x18] sm:$0xff] %vm1777, %v1748
        %1782 = vst.msk [vmem:[%s337 + $0x20] sm:$0xff] %vm1777, %v1749
        %1783 = vst.msk [vmem:[%s337 + $0x28] sm:$0xff] %vm1777, %v1750
        %1784 = vst.msk [vmem:[%s337 + $0x30] sm:$0xff] %vm1777, %v1751
        %1785 = vst.msk [vmem:[%s337 + $0x38] sm:$0xff] %vm1777, %v1752
        %1786 = vst.msk [vmem:[%s337 + $0x40] sm:$0xff] %vm1777, %v1753
        %1787 = vst.msk [vmem:[%s337 + $0x48] sm:$0xff] %vm1777, %v1754
        %1788 = vst.msk [vmem:[%s337 + $0x50] sm:$0xff] %vm1777, %v1755
        %1789 = vst.msk [vmem:[%s337 + $0x58] sm:$0xff] %vm1777, %v1756
        %1790 = vst.msk [vmem:[%s337 + $0x60] sm:$0xff] %vm1777, %v1757
        %1791 = vst.msk [vmem:[%s337 + $0x68] sm:$0xff] %vm1777, %v1758
        %1792 = vst.msk [vmem:[%s337 + $0x70] sm:$0xff] %vm1777, %v1759
        %1793 = vst.msk [vmem:[%s337 + $0x78] sm:$0xff] %vm1777, %v1760
        %1794 = vst.msk [vmem:[%s337 + $0x80] sm:$0xff] %vm1777, %v1761
        %1795 = vst.msk [vmem:[%s337 + $0x88] sm:$0xff] %vm1777, %v1762
        %1796 = vst.msk [vmem:[%s337 + $0x90] sm:$0xff] %vm1777, %v1763
        %1797 = vst.msk [vmem:[%s337 + $0x98] sm:$0xff] %vm1777, %v1764
        %1798 = vst.msk [vmem:[%s337 + $0xa0] sm:$0xff] %vm1777, %v1765
        %1799 = vst.msk [vmem:[%s337 + $0xa8] sm:$0xff] %vm1777, %v1766
        %1800 = vst.msk [vmem:[%s337 + $0xb0] sm:$0xff] %vm1777, %v1767
        %1801 = vst.msk [vmem:[%s337 + $0xb8] sm:$0xff] %vm1777, %v1768
        %1802 = vst.msk [vmem:[%s337 + $0xc0] sm:$0xff] %vm1777, %v1769
        %1803 = vst.msk [vmem:[%s337 + $0xc8] sm:$0xff] %vm1777, %v1770
        %1804 = vst.msk [vmem:[%s337 + $0xd0] sm:$0xff] %vm1777, %v1771
        %1805 = vst.msk [vmem:[%s337 + $0xd8] sm:$0xff] %vm1777, %v1772
        %1806 = vst.msk [vmem:[%s337 + $0xe0] sm:$0xff] %vm1777, %v1773
        %1807 = vst.msk [vmem:[%s337 + $0xe8] sm:$0xff] %vm1777, %v1774
        %1808 = vst.msk [vmem:[%s337 + $0xf0] sm:$0xff] %vm1777, %v1775
        %1809 = vst.msk [vmem:[%s337 + $0xf8] sm:$0xff] %vm1777, %v1776
        %s1810 = smul.u32 32, %s24
        %p1811 = scmp.lt.s32.totalorder %s1810, 63
        %s1812 = scalar_select %p1811, %s1810, 63
        %s1813 = smul.addr %s1812, 8
        %s1814 = scalar_lea.vmem %s7, %s1813
        // Predicated region
        $region61: #{tpu_custom_call.1} parent=47 // pred_check
          %p1815 = pneg %p194
        $region62: #{tpu_custom_call.1} parent=47 // pred_check_branch
          %1817 = sbr.rel (%p1815) target = $region64
        $region63: #{tpu_custom_call.1} parent=47 // pred_region
          %s1818 = smul.u32 32, %s24
        $region64: #{tpu_custom_call.1} parent=47 // pred_fallthru
          _
      $region48: #{tpu_custom_call.1} parent=5 // pred_fallthru
        _
      %p1819 = scmp.le.s32.totalorder 2, %s19
      // Predicated region
      $region65: #{tpu_custom_call.1} parent=5 // pred_check
        %p1820 = pneg %p1819
      $region66: #{tpu_custom_call.1} parent=5 // pred_check_branch
        %1822 = sbr.rel (%p1820) target = $region68
      $region67: #{tpu_custom_call.1} parent=5 // pred_region
        %s1823 = ssub.s32 %s19, 2
        // Predicated region
        $region69: #{tpu_custom_call.1} parent=67 // pred_check
          %p1824 = pneg %p200
        $region70: #{tpu_custom_call.1} parent=67 // pred_check_branch
          %1826 = sbr.rel (%p1824) target = $region72
        $region71: #{tpu_custom_call.1} parent=67 // pred_region
          %s1827 = smul.u32 32, %s25
          %p1828 = scmp.lt.s32.totalorder %s1827, 63
          %s1829 = scalar_select %p1828, %s1827, 63
          %s1830 = smul.addr %s1829, 8
          %s1831 = scalar_lea.vmem %s7, %s1830
        $region72: #{tpu_custom_call.1} parent=67 // pred_fallthru
          _
      $region68: #{tpu_custom_call.1} parent=5 // pred_fallthru
        _
    $region6: #{tpu_custom_call.1} parent=1 // loop_footer
      %s23 = sadd.s32 1, %s19
    $region7: #{tpu_custom_call.1} parent=1 // loop_footer_branch
      %18 = sbr.rel target = $region3
    $region8: #{tpu_custom_call.1} parent=1 // loop_exit
      _
    %1832 = vsyncpa [#allocation4], 1
    %s1833 = scalar_lea.sflag [#allocation4], 1
    %1834 = vsyncpa %s1833, 1
    %1835 = vsyncpa [#allocation6], 1

// kernel: tpu_custom_call.1
$region0: #{tpu_custom_call.1}
  #allocation0 [shape = 'u32[]', space=smem, size = 0x4, offset = 0x4, fixed_abs, tag = 'smem constant byte address 0x4 - core index']
  #allocation1 [shape = 'u32[72,128]{1,0:T(1,128)}', space=vmem, size = 0x9000, scoped, tag = 'internal scratch']
  #allocation2 [shape = 'f32[1,1]{1,0:T(1,128)S(1)}', space=vmem, size = 0x200, scoped, tag = 'scoped memory for tpu_custom_call.1']
  %s0 = inlined_call_operand.hbm [shape: f32[512,256], index: 0, kind: input, shape index: {}]
  %s1 = inlined_call_operand.hbm [shape: bf16[256,256], index: 1, kind: input, shape index: {}]
  %s2 = inlined_call_operand.vmem [shape: f32[1,256], index: 2, kind: input, shape index: {}]
  %s3 = inlined_call_operand.hbm [shape: bf16[256,256], index: 3, kind: input, shape index: {}]
  %s4 = inlined_call_operand.vmem [shape: f32[1,256], index: 4, kind: input, shape index: {}]
  %s5 = inlined_call_operand.vmem [shape: f32[1,256], index: 5, kind: input, shape index: {}]
  %s6 = inlined_call_operand.<no memory space> [shape: f32[1,1], index: 6, kind: input, shape index: {}]
  %s7 = inlined_call_operand.vmem [shape: f32[512,1], index: 7, kind: output, shape index: {}]
  %s8 = sld [smem:[#allocation0]]
  $region73: #{tpu_custom_call.1} parent=0
    _
  %s10 = ssub.s32 1, %s8
  %s11 = scalar_select 0, %s10, %s8
  %v12 = vstv %s6
  %13 = vst [vmem:[#allocation2] sm:$0x1] %v12
  $region1: #{tpu_custom_call.1} parent=0
    #allocation3 [shape = 'u8[524288]{0}', space=vmem, size = 0x80000, scoped, tag = 'input window, operand 0']
    #allocation4 [shape = 's32[2]{0}', space=sflag, size = 0x8, scoped, tag = 'scoped memory for tpu_custom_call.1']
    #allocation5 [shape = 'u8[131072]{0}', space=vmem, size = 0x20000, scoped, tag = 'input window, operand 1, single buffered']
    #allocation6 [shape = 's32[1]{0}', space=sflag, size = 0x4, scoped, tag = 'scoped memory for tpu_custom_call.1']
    #allocation7 [shape = 'u8[131072]{0}', space=vmem, size = 0x20000, scoped, tag = 'input window, operand 3, single buffered']
    %14 = vsyncpa [#allocation4], 0
    %s15 = scalar_lea.sflag [#allocation4], 1
    %16 = vsyncpa %s15, 0
    %17 = vsyncpa [#allocation6], 0
    loop: start=0, step=1, limit=4
    $region2: #{tpu_custom_call.1} parent=1 // loop_pre_header
      _
    $region3: #{tpu_custom_call.1} parent=1 // loop_header
      %s19 = sphi 0, %s23
      %p20 = scmp.ge.s32.totalorder %s19, 4
      %s29 = sphi 0, %s31
      %s32 = sphi 0, %s29
      %s33 = sphi 0, %s32
      %s49 = sphi 0, %s33
      %s53 = sphi 0, %s53
      %s55 = sphi 0, %s53
      %s56 = sphi 0, %s55
      %s70 = sphi 0, %s56
      %s74 = sphi 0, %s74
      %s76 = sphi 0, %s74
      %s77 = sphi 0, %s76
      %s91 = sphi 0, %s77
      %s95 = sphi 0, %s95
      %s97 = sphi 0, %s95
      %s98 = sphi 0, %s97
      %s112 = sphi 0, %s98
      %s116 = sphi 0, %s116
      %s118 = sphi 0, %s116
      %s119 = sphi 0, %s118
      %s133 = sphi 0, %s119
      %s137 = sphi 0, %s137
      %s139 = sphi 0, %s137
      %s140 = sphi 0, %s139
      %s154 = sphi 0, %s140
      %s158 = sphi 0, %s158
      %s160 = sphi 0, %s158
      %s161 = sphi 0, %s160
      %s175 = sphi 0, %s161
      %s181 = sphi 0, %s183
      %s184 = sphi 0, %s181
      %s185 = sphi 0, %s184
      %s201 = sphi 0, %s185
    $region4: #{tpu_custom_call.1} parent=1 // loop_header_branch
      %22 = sbr.rel (%p20) target = $region8
    $region5: #{tpu_custom_call.1} parent=1 // loop_body
      %s24 = ssub.s32 %s19, 1
      %s25 = ssub.s32 %s19, 2
      %s26 = sadd.s32 %s19, 1
      %s27 = ssub.s32 %s19, %s26
      %p28 = scmp.eq.s32.totalorder %s27, 0
      %s30 = sadd.s32 %s29, 1
      %s31 = scalar_select %p28, %s29, %s30
      %p34 = pneg %p28
      %p35 = scmp.eq.s32.totalorder %s19, 1
      %p36 = por %p34, %p35
      %p37 = scmp.ne.s32.totalorder %s29, %s32
      %p38 = scmp.eq.s32.totalorder %s19, 0
      %p39 = por %p37, %p38
      %p40 = scmp.ne.s32.totalorder %s29, %s32
      %p41 = scmp.eq.s32.totalorder %s24, 1
      %p42 = por %p40, %p41
      %p43 = scmp.ne.s32.totalorder %s32, %s33
      %p44 = scmp.eq.s32.totalorder %s24, 0
      %p45 = por %p43, %p44
      %p46 = scmp.ne.s32.totalorder %s32, %s33
      %p47 = scmp.eq.s32.totalorder %s25, 1
      %p48 = por %p46, %p47
      %p50 = scmp.ne.s32.totalorder %s33, %s49
      %p51 = scmp.eq.s32.totalorder %s25, 0
      %p52 = por %p50, %p51
      %s54 = sadd.s32 %s53, 1
      %p57 = scmp.eq.s32.totalorder %s19, 1
      %p58 = scmp.ne.s32.totalorder %s53, %s55
      %p59 = scmp.eq.s32.totalorder %s19, 0
      %p60 = por %p58, %p59
      %p61 = scmp.ne.s32.totalorder %s53, %s55
      %p62 = scmp.eq.s32.totalorder %s24, 1
      %p63 = por %p61, %p62
      %p64 = scmp.ne.s32.totalorder %s55, %s56
      %p65 = scmp.eq.s32.totalorder %s24, 0
      %p66 = por %p64, %p65
      %p67 = scmp.ne.s32.totalorder %s55, %s56
      %p68 = scmp.eq.s32.totalorder %s25, 1
      %p69 = por %p67, %p68
      %p71 = scmp.ne.s32.totalorder %s56, %s70
      %p72 = scmp.eq.s32.totalorder %s25, 0
      %p73 = por %p71, %p72
      %s75 = sadd.s32 %s74, 1
      %p78 = scmp.eq.s32.totalorder %s19, 1
      %p79 = scmp.ne.s32.totalorder %s74, %s76
      %p80 = scmp.eq.s32.totalorder %s19, 0
      %p81 = por %p79, %p80
      %p82 = scmp.ne.s32.totalorder %s74, %s76
      %p83 = scmp.eq.s32.totalorder %s24, 1
      %p84 = por %p82, %p83
      %p85 = scmp.ne.s32.totalorder %s76, %s77
      %p86 = scmp.eq.s32.totalorder %s24, 0
      %p87 = por %p85, %p86
      %p88 = scmp.ne.s32.totalorder %s76, %s77
      %p89 = scmp.eq.s32.totalorder %s25, 1
      %p90 = por %p88, %p89
      %p92 = scmp.ne.s32.totalorder %s77, %s91
      %p93 = scmp.eq.s32.totalorder %s25, 0
      %p94 = por %p92, %p93
      %s96 = sadd.s32 %s95, 1
      %p99 = scmp.eq.s32.totalorder %s19, 1
      %p100 = scmp.ne.s32.totalorder %s95, %s97
      %p101 = scmp.eq.s32.totalorder %s19, 0
      %p102 = por %p100, %p101
      %p103 = scmp.ne.s32.totalorder %s95, %s97
      %p104 = scmp.eq.s32.totalorder %s24, 1
      %p105 = por %p103, %p104
      %p106 = scmp.ne.s32.totalorder %s97, %s98
      %p107 = scmp.eq.s32.totalorder %s24, 0
      %p108 = por %p106, %p107
      %p109 = scmp.ne.s32.totalorder %s97, %s98
      %p110 = scmp.eq.s32.totalorder %s25, 1
      %p111 = por %p109, %p110
      %p113 = scmp.ne.s32.totalorder %s98, %s112
      %p114 = scmp.eq.s32.totalorder %s25, 0
      %p115 = por %p113, %p114
      %s117 = sadd.s32 %s116, 1
      %p120 = scmp.eq.s32.totalorder %s19, 1
      %p121 = scmp.ne.s32.totalorder %s116, %s118
      %p122 = scmp.eq.s32.totalorder %s19, 0
      %p123 = por %p121, %p122
      %p124 = scmp.ne.s32.totalorder %s116, %s118
      %p125 = scmp.eq.s32.totalorder %s24, 1
      %p126 = por %p124, %p125
      %p127 = scmp.ne.s32.totalorder %s118, %s119
      %p128 = scmp.eq.s32.totalorder %s24, 0
      %p129 = por %p127, %p128
      %p130 = scmp.ne.s32.totalorder %s118, %s119
      %p131 = scmp.eq.s32.totalorder %s25, 1
      %p132 = por %p130, %p131
      %p134 = scmp.ne.s32.totalorder %s119, %s133
      %p135 = scmp.eq.s32.totalorder %s25, 0
      %p136 = por %p134, %p135
      %s138 = sadd.s32 %s137, 1
      %p141 = scmp.eq.s32.totalorder %s19, 1
      %p142 = scmp.ne.s32.totalorder %s137, %s139
      %p143 = scmp.eq.s32.totalorder %s19, 0
      %p144 = por %p142, %p143
      %p145 = scmp.ne.s32.totalorder %s137, %s139
      %p146 = scmp.eq.s32.totalorder %s24, 1
      %p147 = por %p145, %p146
      %p148 = scmp.ne.s32.totalorder %s139, %s140
      %p149 = scmp.eq.s32.totalorder %s24, 0
      %p150 = por %p148, %p149
      %p151 = scmp.ne.s32.totalorder %s139, %s140
      %p152 = scmp.eq.s32.totalorder %s25, 1
      %p153 = por %p151, %p152
      %p155 = scmp.ne.s32.totalorder %s140, %s154
      %p156 = scmp.eq.s32.totalorder %s25, 0
      %p157 = por %p155, %p156
      %s159 = sadd.s32 %s158, 1
      %p162 = scmp.eq.s32.totalorder %s19, 1
      %p163 = scmp.ne.s32.totalorder %s158, %s160
      %p164 = scmp.eq.s32.totalorder %s19, 0
      %p165 = por %p163, %p164
      %p166 = scmp.ne.s32.totalorder %s158, %s160
      %p167 = scmp.eq.s32.totalorder %s24, 1
      %p168 = por %p166, %p167
      %p169 = scmp.ne.s32.totalorder %s160, %s161
      %p170 = scmp.eq.s32.totalorder %s24, 0
      %p171 = por %p169, %p170
      %p172 = scmp.ne.s32.totalorder %s160, %s161
      %p173 = scmp.eq.s32.totalorder %s25, 1
      %p174 = por %p172, %p173
      %p176 = scmp.ne.s32.totalorder %s161, %s175
      %p177 = scmp.eq.s32.totalorder %s25, 0
      %p178 = por %p176, %p177
      %s179 = ssub.s32 %s19, %s26
      %p180 = scmp.eq.s32.totalorder %s179, 0
      %s182 = sadd.s32 %s181, 1
      %s183 = scalar_select %p180, %s181, %s182
      %p186 = pneg %p180
      %p187 = scmp.eq.s32.totalorder %s19, 1
      %p188 = por %p186, %p187
      %p189 = scmp.ne.s32.totalorder %s181, %s184
      %p190 = scmp.eq.s32.totalorder %s19, 0
      %p191 = por %p189, %p190
      %p192 = scmp.ne.s32.totalorder %s181, %s184
      %p193 = scmp.eq.s32.totalorder %s24, 1
      %p194 = por %p192, %p193
      %p195 = scmp.ne.s32.totalorder %s184, %s185
      %p196 = scmp.eq.s32.totalorder %s24, 0
      %p197 = por %p195, %p196
      %p198 = scmp.ne.s32.totalorder %s184, %s185
      %p199 = scmp.eq.s32.totalorder %s25, 1
      %p200 = por %p198, %p199
      %p202 = scmp.ne.s32.totalorder %s185, %s201
      %p203 = scmp.eq.s32.totalorder %s25, 0
      %p204 = por %p202, %p203
      %p205 = scmp.le.s32.totalorder 1, %s19
      %p206 = scmp.lt.s32.totalorder %s19, 3
      %p207 = pnand %p205, %p206
      %p208 = pneg %p207
      // Predicated region
      $region9: #{tpu_custom_call.1} parent=5 // pred_check
        _
      $region10: #{tpu_custom_call.1} parent=5 // pred_check_branch
        %210 = sbr.rel (%p207) target = $region12
      $region11: #{tpu_custom_call.1} parent=5 // pred_region
        %s211 = ssub.s32 %s19, 1
        // Predicated region
        $region13: #{tpu_custom_call.1} parent=11 // pred_check
          %p212 = pneg %p66
        $region14: #{tpu_custom_call.1} parent=11 // pred_check_branch
          %214 = sbr.rel (%p212) target = $region16
        $region15: #{tpu_custom_call.1} parent=11 // pred_region
          %216 = vsyncadd [#allocation6], 0
          %s217 = sshll.u32 %s1, 4
          %s218 = int_to_ptr.hbm [resolvable:$true] %s217
          %s219 = sshll.u32 [#allocation5], 4
          %s220 = int_to_ptr.vmem [resolvable:$true] %s219
          %225 = dma.hbm_to_vmem [thread:$0]  %s218, 4096, %s220, [#allocation6], 128, 128, 8
        $region16: #{tpu_custom_call.1} parent=11 // pred_fallthru
          _
        // Predicated region
        $region17: #{tpu_custom_call.1} parent=11 // pred_check
          %p226 = pneg %p87
        $region18: #{tpu_custom_call.1} parent=11 // pred_check_branch
          %228 = sbr.rel (%p226) target = $region20
        $region19: #{tpu_custom_call.1} parent=11 // pred_region
          _
        $region20: #{tpu_custom_call.1} parent=11 // pred_fallthru
          _
        // Predicated region
        $region21: #{tpu_custom_call.1} parent=11 // pred_check
          %p229 = pneg %p108
        $region22: #{tpu_custom_call.1} parent=11 // pred_check_branch
          %231 = sbr.rel (%p229) target = $region24
        $region23: #{tpu_custom_call.1} parent=11 // pred_region
          %233 = vsyncadd [#allocation6], 0
          %s234 = sshll.u32 %s3, 4
          %s235 = int_to_ptr.hbm [resolvable:$true] %s234
          %s236 = sshll.u32 [#allocation7], 4
          %s237 = int_to_ptr.vmem [resolvable:$true] %s236
          %242 = dma.hbm_to_vmem [thread:$0]  %s235, 4096, %s237, [#allocation6], 128, 128, 8
        $region24: #{tpu_custom_call.1} parent=11 // pred_fallthru
          _
        // Predicated region
        $region25: #{tpu_custom_call.1} parent=11 // pred_check
          %p243 = pneg %p129
        $region26: #{tpu_custom_call.1} parent=11 // pred_check_branch
          %245 = sbr.rel (%p243) target = $region28
        $region27: #{tpu_custom_call.1} parent=11 // pred_region
          _
        $region28: #{tpu_custom_call.1} parent=11 // pred_fallthru
          _
        // Predicated region
        $region29: #{tpu_custom_call.1} parent=11 // pred_check
          %p246 = pneg %p150
        $region30: #{tpu_custom_call.1} parent=11 // pred_check_branch
          %248 = sbr.rel (%p246) target = $region32
        $region31: #{tpu_custom_call.1} parent=11 // pred_region
          _
        $region32: #{tpu_custom_call.1} parent=11 // pred_fallthru
          _
        // Predicated region
        $region33: #{tpu_custom_call.1} parent=11 // pred_check
          %p249 = pneg %p171
        $region34: #{tpu_custom_call.1} parent=11 // pred_check_branch
          %251 = sbr.rel (%p249) target = $region36
        $region35: #{tpu_custom_call.1} parent=11 // pred_region
          _
        $region36: #{tpu_custom_call.1} parent=11 // pred_fallthru
          _
      $region12: #{tpu_custom_call.1} parent=5 // pred_fallthru
        _
      %p252 = scmp.lt.s32.totalorder %s19, 2
      // Predicated region
      $region37: #{tpu_custom_call.1} parent=5 // pred_check
        %p253 = pneg %p252
      $region38: #{tpu_custom_call.1} parent=5 // pred_check_branch
        %255 = sbr.rel (%p253) target = $region40
      $region39: #{tpu_custom_call.1} parent=5 // pred_region
        // Predicated region
        $region41: #{tpu_custom_call.1} parent=39 // pred_check
          %p256 = pneg %p39
        $region42: #{tpu_custom_call.1} parent=39 // pred_check_branch
          %258 = sbr.rel (%p256) target = $region44
        $region43: #{tpu_custom_call.1} parent=39 // pred_region
          %s259 = sand.u32 %s29, 1
          %s260 = scalar_lea.sflag [#allocation4], %s259
          %s261 = sand.u32 %s29, 1
          %s262 = smul.addr %s261, 512
          %s263 = scalar_lea.vmem [#allocation3], %s262
          %s264 = smul.u32 32, %s19
          %266 = vsyncadd %s260, 0
          %s267 = smul.addr %s264, 2
          %s268 = smul.addr %s267, 8
          %s269 = scalar_lea.hbm %s0, %s268
          %s270 = sshll.u32 %s269, 4
          %s271 = int_to_ptr.hbm [resolvable:$true] %s270
          %s272 = sshll.u32 %s263, 4
          %s273 = int_to_ptr.vmem [resolvable:$true] %s272
          %278 = dma.hbm_to_vmem [thread:$0]  %s271, 8192, %s273, %s260, 256, 256, 16
        $region44: #{tpu_custom_call.1} parent=39 // pred_fallthru
          _
      $region40: #{tpu_custom_call.1} parent=5 // pred_fallthru
        _
      %p279 = scmp.le.s32.totalorder 1, %s19
      %p280 = scmp.lt.s32.totalorder %s19, 3
      %p281 = pnand %p279, %p280
      %p282 = pneg %p281
      // Predicated region
      $region45: #{tpu_custom_call.1} parent=5 // pred_check
        _
      $region46: #{tpu_custom_call.1} parent=5 // pred_check_branch
        %284 = sbr.rel (%p281) target = $region48
      $region47: #{tpu_custom_call.1} parent=5 // pred_region
        %s285 = ssub.s32 %s19, 1
        %s286 = sand.u32 %s32, 1
        %s287 = scalar_lea.sflag [#allocation4], %s286
        %s288 = sand.u32 %s32, 1
        %s289 = smul.addr %s288, 512
        %s290 = scalar_lea.vmem [#allocation3], %s289
        // Predicated region
        $region49: #{tpu_custom_call.1} parent=47 // pred_check
          %p291 = pneg %p45
        $region50: #{tpu_custom_call.1} parent=47 // pred_check_branch
          %293 = sbr.rel (%p291) target = $region52
        $region51: #{tpu_custom_call.1} parent=47 // pred_region
          %295 = dma.done %s287, 8192
        $region52: #{tpu_custom_call.1} parent=47 // pred_fallthru
          _
        // Predicated region
        $region53: #{tpu_custom_call.1} parent=47 // pred_check
          %p296 = pneg %p66
        $region54: #{tpu_custom_call.1} parent=47 // pred_check_branch
          %298 = sbr.rel (%p296) target = $region56
        $region55: #{tpu_custom_call.1} parent=47 // pred_region
          %300 = dma.done [#allocation6], 4096
        $region56: #{tpu_custom_call.1} parent=47 // pred_fallthru
          _
        // Predicated region
        $region57: #{tpu_custom_call.1} parent=47 // pred_check
          %p301 = pneg %p108
        $region58: #{tpu_custom_call.1} parent=47 // pred_check_branch
          %303 = sbr.rel (%p301) target = $region60
        $region59: #{tpu_custom_call.1} parent=47 // pred_region
          %305 = dma.done [#allocation6], 4096
        $region60: #{tpu_custom_call.1} parent=47 // pred_fallthru
          _
        %s306 = sand.u32 %s32, 1
        %s307 = scalar_lea.sflag [#allocation4], %s306
        %s308 = sand.u32 %s32, 1
        %s309 = smul.addr %s308, 512
        %s310 = scalar_lea.vmem [#allocation3], %s309
        %p311 = pneg %p45
        %p312 = pneg %p42
        %p313 = pneg %p66
        %p314 = pneg %p63
        %p315 = pneg %p87
        %p316 = pneg %p84
        %p317 = pneg %p108
        %p318 = pneg %p105
        %p319 = pneg %p129
        %p320 = pneg %p126
        %p321 = pneg %p150
        %p322 = pneg %p147
        %p323 = pneg %p171
        %p324 = pneg %p168
        %p325 = pneg %p197
        %p326 = pneg %p194
        %s327 = smul.u32 32, %s24
        %p328 = scmp.lt.s32.totalorder %s327, 63
        %s329 = scalar_select %p328, %s327, 63
        %s330 = smul.addr %s329, 8
        %s331 = scalar_lea.vmem %s7, %s330
        %s332 = smul.u32 32, %s24
        %s333 = smul.u32 32, %s24
        %p334 = scmp.lt.s32.totalorder %s333, 63
        %s335 = scalar_select %p334, %s333, 63
        %s336 = smul.addr %s335, 8
        %s337 = scalar_lea.vmem %s7, %s336
        %s338 = smul.u32 32, %s24
        %v339 = vld [vmem:[%s290] sm:$0xff]
        %v340 = vld [vmem:[%s290 + $0x8] sm:$0xff]
        %v341 = vld [vmem:[%s290 + $0x10] sm:$0xff]
        %v342 = vld [vmem:[%s290 + $0x18] sm:$0xff]
        %v343 = vld [vmem:[%s290 + $0x20] sm:$0xff]
        %v344 = vld [vmem:[%s290 + $0x28] sm:$0xff]
        %v345 = vld [vmem:[%s290 + $0x30] sm:$0xff]
        %v346 = vld [vmem:[%s290 + $0x38] sm:$0xff]
        %v347 = vld [vmem:[%s290 + $0x40] sm:$0xff]
        %v348 = vld [vmem:[%s290 + $0x48] sm:$0xff]
        %v349 = vld [vmem:[%s290 + $0x50] sm:$0xff]
        %v350 = vld [vmem:[%s290 + $0x58] sm:$0xff]
        %v351 = vld [vmem:[%s290 + $0x60] sm:$0xff]
        %v352 = vld [vmem:[%s290 + $0x68] sm:$0xff]
        %v353 = vld [vmem:[%s290 + $0x70] sm:$0xff]
        %v354 = vld [vmem:[%s290 + $0x78] sm:$0xff]
        %v355 = vld [vmem:[%s290 + $0x80] sm:$0xff]
        %v356 = vld [vmem:[%s290 + $0x88] sm:$0xff]
        %v357 = vld [vmem:[%s290 + $0x90] sm:$0xff]
        %v358 = vld [vmem:[%s290 + $0x98] sm:$0xff]
        %v359 = vld [vmem:[%s290 + $0xa0] sm:$0xff]
        %v360 = vld [vmem:[%s290 + $0xa8] sm:$0xff]
        %v361 = vld [vmem:[%s290 + $0xb0] sm:$0xff]
        %v362 = vld [vmem:[%s290 + $0xb8] sm:$0xff]
        %v363 = vld [vmem:[%s290 + $0xc0] sm:$0xff]
        %v364 = vld [vmem:[%s290 + $0xc8] sm:$0xff]
        %v365 = vld [vmem:[%s290 + $0xd0] sm:$0xff]
        %v366 = vld [vmem:[%s290 + $0xd8] sm:$0xff]
        %v367 = vld [vmem:[%s290 + $0xe0] sm:$0xff]
        %v368 = vld [vmem:[%s290 + $0xe8] sm:$0xff]
        %v369 = vld [vmem:[%s290 + $0xf0] sm:$0xff]
        %v370 = vld [vmem:[%s290 + $0xf8] sm:$0xff]
        %v371 = vld [vmem:[%s290 + $0x100] sm:$0xff]
        %v372 = vld [vmem:[%s290 + $0x108] sm:$0xff]
        %v373 = vld [vmem:[%s290 + $0x110] sm:$0xff]
        %v374 = vld [vmem:[%s290 + $0x118] sm:$0xff]
        %v375 = vld [vmem:[%s290 + $0x120] sm:$0xff]
        %v376 = vld [vmem:[%s290 + $0x128] sm:$0xff]
        %v377 = vld [vmem:[%s290 + $0x130] sm:$0xff]
        %v378 = vld [vmem:[%s290 + $0x138] sm:$0xff]
        %v379 = vld [vmem:[%s290 + $0x140] sm:$0xff]
        %v380 = vld [vmem:[%s290 + $0x148] sm:$0xff]
        %v381 = vld [vmem:[%s290 + $0x150] sm:$0xff]
        %v382 = vld [vmem:[%s290 + $0x158] sm:$0xff]
        %v383 = vld [vmem:[%s290 + $0x160] sm:$0xff]
        %v384 = vld [vmem:[%s290 + $0x168] sm:$0xff]
        %v385 = vld [vmem:[%s290 + $0x170] sm:$0xff]
        %v386 = vld [vmem:[%s290 + $0x178] sm:$0xff]
        %v387 = vld [vmem:[%s290 + $0x180] sm:$0xff]
        %v388 = vld [vmem:[%s290 + $0x188] sm:$0xff]
        %v389 = vld [vmem:[%s290 + $0x190] sm:$0xff]
        %v390 = vld [vmem:[%s290 + $0x198] sm:$0xff]
        %v391 = vld [vmem:[%s290 + $0x1a0] sm:$0xff]
        %v392 = vld [vmem:[%s290 + $0x1a8] sm:$0xff]
        %v393 = vld [vmem:[%s290 + $0x1b0] sm:$0xff]
        %v394 = vld [vmem:[%s290 + $0x1b8] sm:$0xff]
        %v395 = vld [vmem:[%s290 + $0x1c0] sm:$0xff]
        %v396 = vld [vmem:[%s290 + $0x1c8] sm:$0xff]
        %v397 = vld [vmem:[%s290 + $0x1d0] sm:$0xff]
        %v398 = vld [vmem:[%s290 + $0x1d8] sm:$0xff]
        %v399 = vld [vmem:[%s290 + $0x1e0] sm:$0xff]
        %v400 = vld [vmem:[%s290 + $0x1e8] sm:$0xff]
        %v401 = vld [vmem:[%s290 + $0x1f0] sm:$0xff]
        %v402 = vld [vmem:[%s290 + $0x1f8] sm:$0xff]
        %v403 = vld [vmem:[#allocation5] sm:$0xff]
        %v404 = vld [vmem:[#allocation5 + $0x8] sm:$0xff]
        %v405 = vld [vmem:[#allocation5 + $0x10] sm:$0xff]
        %v406 = vld [vmem:[#allocation5 + $0x18] sm:$0xff]
        %v407 = vld [vmem:[#allocation5 + $0x20] sm:$0xff]
        %v408 = vld [vmem:[#allocation5 + $0x28] sm:$0xff]
        %v409 = vld [vmem:[#allocation5 + $0x30] sm:$0xff]
        %v410 = vld [vmem:[#allocation5 + $0x38] sm:$0xff]
        %v411 = vld [vmem:[#allocation5 + $0x40] sm:$0xff]
        %v412 = vld [vmem:[#allocation5 + $0x48] sm:$0xff]
        %v413 = vld [vmem:[#allocation5 + $0x50] sm:$0xff]
        %v414 = vld [vmem:[#allocation5 + $0x58] sm:$0xff]
        %v415 = vld [vmem:[#allocation5 + $0x60] sm:$0xff]
        %v416 = vld [vmem:[#allocation5 + $0x68] sm:$0xff]
        %v417 = vld [vmem:[#allocation5 + $0x70] sm:$0xff]
        %v418 = vld [vmem:[#allocation5 + $0x78] sm:$0xff]
        %v419 = vld [vmem:[#allocation5 + $0x80] sm:$0xff]
        %v420 = vld [vmem:[#allocation5 + $0x88] sm:$0xff]
        %v421 = vld [vmem:[#allocation5 + $0x90] sm:$0xff]
        %v422 = vld [vmem:[#allocation5 + $0x98] sm:$0xff]
        %v423 = vld [vmem:[#allocation5 + $0xa0] sm:$0xff]
        %v424 = vld [vmem:[#allocation5 + $0xa8] sm:$0xff]
        %v425 = vld [vmem:[#allocation5 + $0xb0] sm:$0xff]
        %v426 = vld [vmem:[#allocation5 + $0xb8] sm:$0xff]
        %v427 = vld [vmem:[#allocation5 + $0xc0] sm:$0xff]
        %v428 = vld [vmem:[#allocation5 + $0xc8] sm:$0xff]
        %v429 = vld [vmem:[#allocation5 + $0xd0] sm:$0xff]
        %v430 = vld [vmem:[#allocation5 + $0xd8] sm:$0xff]
        %v431 = vld [vmem:[#allocation5 + $0xe0] sm:$0xff]
        %v432 = vld [vmem:[#allocation5 + $0xe8] sm:$0xff]
        %v433 = vld [vmem:[#allocation5 + $0xf0] sm:$0xff]
        %v434 = vld [vmem:[#allocation5 + $0xf8] sm:$0xff]
        %v435 = vld [vmem:[%s2] sm:$0x3]
        %v436 = vpack.c.bf16 %v341, %v339
        %v437 = vpack.c.bf16 %v342, %v340
        %v438 = vpack.c.bf16 %v345, %v343
        %v439 = vpack.c.bf16 %v346, %v344
        %v440 = vpack.c.bf16 %v349, %v347
        %v441 = vpack.c.bf16 %v350, %v348
        %v442 = vpack.c.bf16 %v353, %v351
        %v443 = vpack.c.bf16 %v354, %v352
        %v444 = vpack.c.bf16 %v357, %v355
        %v445 = vpack.c.bf16 %v358, %v356
        %v446 = vpack.c.bf16 %v361, %v359
        %v447 = vpack.c.bf16 %v362, %v360
        %v448 = vpack.c.bf16 %v365, %v363
        %v449 = vpack.c.bf16 %v366, %v364
        %v450 = vpack.c.bf16 %v369, %v367
        %v451 = vpack.c.bf16 %v370, %v368
        %v452 = vpack.c.bf16 %v373, %v371
        %v453 = vpack.c.bf16 %v374, %v372
        %v454 = vpack.c.bf16 %v377, %v375
        %v455 = vpack.c.bf16 %v378, %v376
        %v456 = vpack.c.bf16 %v381, %v379
        %v457 = vpack.c.bf16 %v382, %v380
        %v458 = vpack.c.bf16 %v385, %v383
        %v459 = vpack.c.bf16 %v386, %v384
        %v460 = vpack.c.bf16 %v389, %v387
        %v461 = vpack.c.bf16 %v390, %v388
        %v462 = vpack.c.bf16 %v393, %v391
        %v463 = vpack.c.bf16 %v394, %v392
        %v464 = vpack.c.bf16 %v397, %v395
        %v465 = vpack.c.bf16 %v398, %v396
        %v466 = vpack.c.bf16 %v401, %v399
        %v467 = vpack.c.bf16 %v402, %v400
        %v469 = vperm.slane %v435, 0
        %v470 = vperm.slane %v435, 1
        %v505 = vunpack.c.l.b16 %v403
        %v506 = vunpack.c.h.b16 %v403
        %v507 = vunpack.c.l.b16 %v404
        %v508 = vunpack.c.h.b16 %v404
        %v509 = vunpack.c.l.b16 %v405
        %v510 = vunpack.c.h.b16 %v405
        %v511 = vunpack.c.l.b16 %v406
        %v512 = vunpack.c.h.b16 %v406
        %v513 = vunpack.c.l.b16 %v407
        %v514 = vunpack.c.h.b16 %v407
        %v515 = vunpack.c.l.b16 %v408
        %v516 = vunpack.c.h.b16 %v408
        %v517 = vunpack.c.l.b16 %v409
        %v518 = vunpack.c.h.b16 %v409
        %v519 = vunpack.c.l.b16 %v410
        %v520 = vunpack.c.h.b16 %v410
        %v521 = vunpack.c.l.b16 %v411
        %v522 = vunpack.c.h.b16 %v411
        %v523 = vunpack.c.l.b16 %v412
        %v524 = vunpack.c.h.b16 %v412
        %v525 = vunpack.c.l.b16 %v413
        %v526 = vunpack.c.h.b16 %v413
        %v527 = vunpack.c.l.b16 %v414
        %v528 = vunpack.c.h.b16 %v414
        %v529 = vunpack.c.l.b16 %v415
        %v530 = vunpack.c.h.b16 %v415
        %v531 = vunpack.c.l.b16 %v416
        %v532 = vunpack.c.h.b16 %v416
        %v533 = vunpack.c.l.b16 %v417
        %v534 = vunpack.c.h.b16 %v417
        %v535 = vunpack.c.l.b16 %v418
        %v536 = vunpack.c.h.b16 %v418
        %v537 = vunpack.c.l.b16 %v419
        %v538 = vunpack.c.h.b16 %v419
        %v539 = vunpack.c.l.b16 %v420
        %v540 = vunpack.c.h.b16 %v420
        %v541 = vunpack.c.l.b16 %v421
        %v542 = vunpack.c.h.b16 %v421
        %v543 = vunpack.c.l.b16 %v422
        %v544 = vunpack.c.h.b16 %v422
        %v545 = vunpack.c.l.b16 %v423
        %v546 = vunpack.c.h.b16 %v423
        %v547 = vunpack.c.l.b16 %v424
        %v548 = vunpack.c.h.b16 %v424
        %v549 = vunpack.c.l.b16 %v425
        %v550 = vunpack.c.h.b16 %v425
        %v551 = vunpack.c.l.b16 %v426
        %v552 = vunpack.c.h.b16 %v426
        %v553 = vunpack.c.l.b16 %v427
        %v554 = vunpack.c.h.b16 %v427
        %v555 = vunpack.c.l.b16 %v428
        %v556 = vunpack.c.h.b16 %v428
        %v557 = vunpack.c.l.b16 %v429
        %v558 = vunpack.c.h.b16 %v429
        %v559 = vunpack.c.l.b16 %v430
        %v560 = vunpack.c.h.b16 %v430
        %v561 = vunpack.c.l.b16 %v431
        %v562 = vunpack.c.h.b16 %v431
        %v563 = vunpack.c.l.b16 %v432
        %v564 = vunpack.c.h.b16 %v432
        %v565 = vunpack.c.l.b16 %v433
        %v566 = vunpack.c.h.b16 %v433
        %v567 = vunpack.c.l.b16 %v434
        %v568 = vunpack.c.h.b16 %v434
        %v569 = vpack.c.b16 %v507, %v505
        %v570 = vpack.c.b16 %v508, %v506
        %v571 = vpack.c.b16 %v511, %v509
        %v572 = vpack.c.b16 %v512, %v510
        %v573 = vpack.c.b16 %v515, %v513
        %v574 = vpack.c.b16 %v516, %v514
        %v575 = vpack.c.b16 %v519, %v517
        %v576 = vpack.c.b16 %v520, %v518
        %v577 = vpack.c.b16 %v523, %v521
        %v578 = vpack.c.b16 %v524, %v522
        %v579 = vpack.c.b16 %v527, %v525
        %v580 = vpack.c.b16 %v528, %v526
        %v581 = vpack.c.b16 %v531, %v529
        %v582 = vpack.c.b16 %v532, %v530
        %v583 = vpack.c.b16 %v535, %v533
        %v584 = vpack.c.b16 %v536, %v534
        %v585 = vpack.c.b16 %v539, %v537
        %v586 = vpack.c.b16 %v540, %v538
        %v587 = vpack.c.b16 %v543, %v541
        %v588 = vpack.c.b16 %v544, %v542
        %v589 = vpack.c.b16 %v547, %v545
        %v590 = vpack.c.b16 %v548, %v546
        %v591 = vpack.c.b16 %v551, %v549
        %v592 = vpack.c.b16 %v552, %v550
        %v593 = vpack.c.b16 %v555, %v553
        %v594 = vpack.c.b16 %v556, %v554
        %v595 = vpack.c.b16 %v559, %v557
        %v596 = vpack.c.b16 %v560, %v558
        %v597 = vpack.c.b16 %v563, %v561
        %v598 = vpack.c.b16 %v564, %v562
        %v599 = vpack.c.b16 %v567, %v565
        %v600 = vpack.c.b16 %v568, %v566
        %633 = vmatpush.bf16.msra.mxu0 %v583
        %634 = vmatpush.bf16.msra.mxu0 %v581
        %635 = vmatpush.bf16.msra.mxu0 %v579
        %636 = vmatpush.bf16.msra.mxu0 %v577
        %637 = vmatpush.bf16.msra.mxu0 %v575
        %638 = vmatpush.bf16.msra.mxu0 %v573
        %639 = vmatpush.bf16.msra.mxu0 %v571
        %640 = vmatpush.bf16.msra.mxu0 %v569
        %641 = vmatmul.bf16.gmra.mxu0 %v436
        %v642 = vpop.f32.mrf.mxu0
        %v643 = vadd.f32 %v469, %v642
        %v644 = vpop.f32.mrf.mxu0
        %v645 = vadd.f32 %v469, %v644
        %646 = vmatmul.bf16.gmra.mxu0 %v438
        %v647 = vpop.f32.mrf.mxu0
        %v648 = vadd.f32 %v469, %v647
        %v649 = vpop.f32.mrf.mxu0
        %v650 = vadd.f32 %v469, %v649
        %651 = vmatmul.bf16.gmra.mxu0 %v440
        %v652 = vpop.f32.mrf.mxu0
        %v653 = vadd.f32 %v469, %v652
        %v654 = vpop.f32.mrf.mxu0
        %v655 = vadd.f32 %v469, %v654
        %656 = vmatmul.bf16.gmra.mxu0 %v442
        %v657 = vpop.f32.mrf.mxu0
        %v658 = vadd.f32 %v469, %v657
        %v659 = vpop.f32.mrf.mxu0
        %v660 = vadd.f32 %v469, %v659
        %661 = vmatmul.bf16.gmra.mxu0 %v444
        %v662 = vpop.f32.mrf.mxu0
        %v663 = vadd.f32 %v469, %v662
        %v664 = vpop.f32.mrf.mxu0
        %v665 = vadd.f32 %v469, %v664
        %666 = vmatmul.bf16.gmra.mxu0 %v446
        %v667 = vpop.f32.mrf.mxu0
        %v668 = vadd.f32 %v469, %v667
        %v669 = vpop.f32.mrf.mxu0
        %v670 = vadd.f32 %v469, %v669
        %671 = vmatmul.bf16.gmra.mxu0 %v448
        %v672 = vpop.f32.mrf.mxu0
        %v673 = vadd.f32 %v469, %v672
        %v674 = vpop.f32.mrf.mxu0
        %v675 = vadd.f32 %v469, %v674
        %676 = vmatmul.bf16.gmra.mxu0 %v450
        %v677 = vpop.f32.mrf.mxu0
        %v678 = vadd.f32 %v469, %v677
        %v679 = vpop.f32.mrf.mxu0
        %v680 = vadd.f32 %v469, %v679
        %681 = vmatmul.bf16.gmra.mxu0 %v452
        %v682 = vpop.f32.mrf.mxu0
        %v683 = vadd.f32 %v469, %v682
        %v684 = vpop.f32.mrf.mxu0
        %v685 = vadd.f32 %v469, %v684
        %686 = vmatmul.bf16.gmra.mxu0 %v454
        %v687 = vpop.f32.mrf.mxu0
        %v688 = vadd.f32 %v469, %v687
        %v689 = vpop.f32.mrf.mxu0
        %v690 = vadd.f32 %v469, %v689
        %691 = vmatmul.bf16.gmra.mxu0 %v456
        %v692 = vpop.f32.mrf.mxu0
        %v693 = vadd.f32 %v469, %v692
        %v694 = vpop.f32.mrf.mxu0
        %v695 = vadd.f32 %v469, %v694
        %696 = vmatmul.bf16.gmra.mxu0 %v458
        %v697 = vpop.f32.mrf.mxu0
        %v698 = vadd.f32 %v469, %v697
        %v699 = vpop.f32.mrf.mxu0
        %v700 = vadd.f32 %v469, %v699
        %701 = vmatmul.bf16.gmra.mxu0 %v460
        %v702 = vpop.f32.mrf.mxu0
        %v703 = vadd.f32 %v469, %v702
        %v704 = vpop.f32.mrf.mxu0
        %v705 = vadd.f32 %v469, %v704
        %706 = vmatmul.bf16.gmra.mxu0 %v462
        %v707 = vpop.f32.mrf.mxu0
        %v708 = vadd.f32 %v469, %v707
        %v709 = vpop.f32.mrf.mxu0
        %v710 = vadd.f32 %v469, %v709
        %711 = vmatmul.bf16.gmra.mxu0 %v464
        %v712 = vpop.f32.mrf.mxu0
        %v713 = vadd.f32 %v469, %v712
        %v714 = vpop.f32.mrf.mxu0
        %v715 = vadd.f32 %v469, %v714
        %716 = vmatmul.bf16.gmra.mxu0 %v466
        %v717 = vpop.f32.mrf.mxu0
        %v718 = vadd.f32 %v469, %v717
        %v719 = vpop.f32.mrf.mxu0
        %v720 = vadd.f32 %v469, %v719
        %721 = vdwg.mxu0
        %722 = vmatpush.bf16.msra.mxu0 %v599
        %723 = vmatpush.bf16.msra.mxu0 %v597
        %724 = vmatpush.bf16.msra.mxu0 %v595
        %725 = vmatpush.bf16.msra.mxu0 %v593
        %726 = vmatpush.bf16.msra.mxu0 %v591
        %727 = vmatpush.bf16.msra.mxu0 %v589
        %728 = vmatpush.bf16.msra.mxu0 %v587
        %729 = vmatpush.bf16.msra.mxu0 %v585
        %730 = vmatmul.bf16.gmra.mxu0 %v437
        %v731 = vpop.f32.mrf.mxu0
        %v732 = vadd.f32 %v643, %v731
        %v733 = vpop.f32.mrf.mxu0
        %v734 = vadd.f32 %v645, %v733
        %735 = vmatmul.bf16.gmra.mxu0 %v439
        %v736 = vpop.f32.mrf.mxu0
        %v737 = vadd.f32 %v648, %v736
        %v738 = vpop.f32.mrf.mxu0
        %v739 = vadd.f32 %v650, %v738
        %740 = vmatmul.bf16.gmra.mxu0 %v441
        %v741 = vpop.f32.mrf.mxu0
        %v742 = vadd.f32 %v653, %v741
        %v743 = vpop.f32.mrf.mxu0
        %v744 = vadd.f32 %v655, %v743
        %745 = vmatmul.bf16.gmra.mxu0 %v443
        %v746 = vpop.f32.mrf.mxu0
        %v747 = vadd.f32 %v658, %v746
        %v748 = vpop.f32.mrf.mxu0
        %v749 = vadd.f32 %v660, %v748
        %750 = vmatmul.bf16.gmra.mxu0 %v445
        %v751 = vpop.f32.mrf.mxu0
        %v752 = vadd.f32 %v663, %v751
        %v753 = vpop.f32.mrf.mxu0
        %v754 = vadd.f32 %v665, %v753
        %755 = vmatmul.bf16.gmra.mxu0 %v447
        %v756 = vpop.f32.mrf.mxu0
        %v757 = vadd.f32 %v668, %v756
        %v758 = vpop.f32.mrf.mxu0
        %v759 = vadd.f32 %v670, %v758
        %760 = vmatmul.bf16.gmra.mxu0 %v449
        %v761 = vpop.f32.mrf.mxu0
        %v762 = vadd.f32 %v673, %v761
        %v763 = vpop.f32.mrf.mxu0
        %v764 = vadd.f32 %v675, %v763
        %765 = vmatmul.bf16.gmra.mxu0 %v451
        %v766 = vpop.f32.mrf.mxu0
        %v767 = vadd.f32 %v678, %v766
        %v768 = vpop.f32.mrf.mxu0
        %v769 = vadd.f32 %v680, %v768
        %770 = vmatmul.bf16.gmra.mxu0 %v453
        %v771 = vpop.f32.mrf.mxu0
        %v772 = vadd.f32 %v683, %v771
        %v773 = vpop.f32.mrf.mxu0
        %v774 = vadd.f32 %v685, %v773
        %775 = vmatmul.bf16.gmra.mxu0 %v455
        %v776 = vpop.f32.mrf.mxu0
        %v777 = vadd.f32 %v688, %v776
        %v778 = vpop.f32.mrf.mxu0
        %v779 = vadd.f32 %v690, %v778
        %780 = vmatmul.bf16.gmra.mxu0 %v457
        %v781 = vpop.f32.mrf.mxu0
        %v782 = vadd.f32 %v693, %v781
        %v783 = vpop.f32.mrf.mxu0
        %v784 = vadd.f32 %v695, %v783
        %785 = vmatmul.bf16.gmra.mxu0 %v459
        %v786 = vpop.f32.mrf.mxu0
        %v787 = vadd.f32 %v698, %v786
        %v788 = vpop.f32.mrf.mxu0
        %v789 = vadd.f32 %v700, %v788
        %790 = vmatmul.bf16.gmra.mxu0 %v461
        %v791 = vpop.f32.mrf.mxu0
        %v792 = vadd.f32 %v703, %v791
        %v793 = vpop.f32.mrf.mxu0
        %v794 = vadd.f32 %v705, %v793
        %795 = vmatmul.bf16.gmra.mxu0 %v463
        %v796 = vpop.f32.mrf.mxu0
        %v797 = vadd.f32 %v708, %v796
        %v798 = vpop.f32.mrf.mxu0
        %v799 = vadd.f32 %v710, %v798
        %800 = vmatmul.bf16.gmra.mxu0 %v465
        %v801 = vpop.f32.mrf.mxu0
        %v802 = vadd.f32 %v713, %v801
        %v803 = vpop.f32.mrf.mxu0
        %v804 = vadd.f32 %v715, %v803
        %805 = vmatmul.bf16.gmra.mxu0 %v467
        %v806 = vpop.f32.mrf.mxu0
        %v807 = vadd.f32 %v718, %v806
        %v808 = vpop.f32.mrf.mxu0
        %v809 = vadd.f32 %v720, %v808
        %810 = vdwg.mxu0
        %811 = vmatpush.bf16.msra.mxu0 %v584
        %812 = vmatpush.bf16.msra.mxu0 %v582
        %813 = vmatpush.bf16.msra.mxu0 %v580
        %814 = vmatpush.bf16.msra.mxu0 %v578
        %815 = vmatpush.bf16.msra.mxu0 %v576
        %816 = vmatpush.bf16.msra.mxu0 %v574
        %817 = vmatpush.bf16.msra.mxu0 %v572
        %818 = vmatpush.bf16.msra.mxu0 %v570
        %819 = vmatmul.bf16.gmra.mxu0 %v436
        %v820 = vpop.f32.mrf.mxu0
        %v821 = vadd.f32 %v470, %v820
        %v822 = vpop.f32.mrf.mxu0
        %v823 = vadd.f32 %v470, %v822
        %824 = vmatmul.bf16.gmra.mxu0 %v438
        %v825 = vpop.f32.mrf.mxu0
        %v826 = vadd.f32 %v470, %v825
        %v827 = vpop.f32.mrf.mxu0
        %v828 = vadd.f32 %v470, %v827
        %829 = vmatmul.bf16.gmra.mxu0 %v440
        %v830 = vpop.f32.mrf.mxu0
        %v831 = vadd.f32 %v470, %v830
        %v832 = vpop.f32.mrf.mxu0
        %v833 = vadd.f32 %v470, %v832
        %834 = vmatmul.bf16.gmra.mxu0 %v442
        %v835 = vpop.f32.mrf.mxu0
        %v836 = vadd.f32 %v470, %v835
        %v837 = vpop.f32.mrf.mxu0
        %v838 = vadd.f32 %v470, %v837
        %839 = vmatmul.bf16.gmra.mxu0 %v444
        %v840 = vpop.f32.mrf.mxu0
        %v841 = vadd.f32 %v470, %v840
        %v842 = vpop.f32.mrf.mxu0
        %v843 = vadd.f32 %v470, %v842
        %844 = vmatmul.bf16.gmra.mxu0 %v446
        %v845 = vpop.f32.mrf.mxu0
        %v846 = vadd.f32 %v470, %v845
        %v847 = vpop.f32.mrf.mxu0
        %v848 = vadd.f32 %v470, %v847
        %849 = vmatmul.bf16.gmra.mxu0 %v448
        %v850 = vpop.f32.mrf.mxu0
        %v851 = vadd.f32 %v470, %v850
        %v852 = vpop.f32.mrf.mxu0
        %v853 = vadd.f32 %v470, %v852
        %854 = vmatmul.bf16.gmra.mxu0 %v450
        %v855 = vpop.f32.mrf.mxu0
        %v856 = vadd.f32 %v470, %v855
        %v857 = vpop.f32.mrf.mxu0
        %v858 = vadd.f32 %v470, %v857
        %859 = vmatmul.bf16.gmra.mxu0 %v452
        %v860 = vpop.f32.mrf.mxu0
        %v861 = vadd.f32 %v470, %v860
        %v862 = vpop.f32.mrf.mxu0
        %v863 = vadd.f32 %v470, %v862
        %864 = vmatmul.bf16.gmra.mxu0 %v454
        %v865 = vpop.f32.mrf.mxu0
        %v866 = vadd.f32 %v470, %v865
        %v867 = vpop.f32.mrf.mxu0
        %v868 = vadd.f32 %v470, %v867
        %869 = vmatmul.bf16.gmra.mxu0 %v456
        %v870 = vpop.f32.mrf.mxu0
        %v871 = vadd.f32 %v470, %v870
        %v872 = vpop.f32.mrf.mxu0
        %v873 = vadd.f32 %v470, %v872
        %874 = vmatmul.bf16.gmra.mxu0 %v458
        %v875 = vpop.f32.mrf.mxu0
        %v876 = vadd.f32 %v470, %v875
        %v877 = vpop.f32.mrf.mxu0
        %v878 = vadd.f32 %v470, %v877
        %879 = vmatmul.bf16.gmra.mxu0 %v460
        %v880 = vpop.f32.mrf.mxu0
        %v881 = vadd.f32 %v470, %v880
        %v882 = vpop.f32.mrf.mxu0
        %v883 = vadd.f32 %v470, %v882
        %884 = vmatmul.bf16.gmra.mxu0 %v462
        %v885 = vpop.f32.mrf.mxu0
        %v886 = vadd.f32 %v470, %v885
        %v887 = vpop.f32.mrf.mxu0
        %v888 = vadd.f32 %v470, %v887
        %889 = vmatmul.bf16.gmra.mxu0 %v464
        %v890 = vpop.f32.mrf.mxu0
        %v891 = vadd.f32 %v470, %v890
        %v892 = vpop.f32.mrf.mxu0
        %v893 = vadd.f32 %v470, %v892
        %894 = vmatmul.bf16.gmra.mxu0 %v466
        %v895 = vpop.f32.mrf.mxu0
        %v896 = vadd.f32 %v470, %v895
        %v897 = vpop.f32.mrf.mxu0
        %v898 = vadd.f32 %v470, %v897
        %899 = vdwg.mxu0
        %900 = vmatpush.bf16.msra.mxu0 %v600
        %901 = vmatpush.bf16.msra.mxu0 %v598
        %902 = vmatpush.bf16.msra.mxu0 %v596
        %903 = vmatpush.bf16.msra.mxu0 %v594
        %904 = vmatpush.bf16.msra.mxu0 %v592
        %905 = vmatpush.bf16.msra.mxu0 %v590
        %906 = vmatpush.bf16.msra.mxu0 %v588
        %907 = vmatpush.bf16.msra.mxu0 %v586
        %908 = vmatmul.bf16.gmra.mxu0 %v437
        %v909 = vpop.f32.mrf.mxu0
        %v910 = vadd.f32 %v821, %v909
        %v911 = vpop.f32.mrf.mxu0
        %v912 = vadd.f32 %v823, %v911
        %913 = vmatmul.bf16.gmra.mxu0 %v439
        %v914 = vpop.f32.mrf.mxu0
        %v915 = vadd.f32 %v826, %v914
        %v916 = vpop.f32.mrf.mxu0
        %v917 = vadd.f32 %v828, %v916
        %918 = vmatmul.bf16.gmra.mxu0 %v441
        %v919 = vpop.f32.mrf.mxu0
        %v920 = vadd.f32 %v831, %v919
        %v921 = vpop.f32.mrf.mxu0
        %v922 = vadd.f32 %v833, %v921
        %923 = vmatmul.bf16.gmra.mxu0 %v443
        %v924 = vpop.f32.mrf.mxu0
        %v925 = vadd.f32 %v836, %v924
        %v926 = vpop.f32.mrf.mxu0
        %v927 = vadd.f32 %v838, %v926
        %928 = vmatmul.bf16.gmra.mxu0 %v445
        %v929 = vpop.f32.mrf.mxu0
        %v930 = vadd.f32 %v841, %v929
        %v931 = vpop.f32.mrf.mxu0
        %v932 = vadd.f32 %v843, %v931
        %933 = vmatmul.bf16.gmra.mxu0 %v447
        %v934 = vpop.f32.mrf.mxu0
        %v935 = vadd.f32 %v846, %v934
        %v936 = vpop.f32.mrf.mxu0
        %v937 = vadd.f32 %v848, %v936
        %938 = vmatmul.bf16.gmra.mxu0 %v449
        %v939 = vpop.f32.mrf.mxu0
        %v940 = vadd.f32 %v851, %v939
        %v941 = vpop.f32.mrf.mxu0
        %v942 = vadd.f32 %v853, %v941
        %943 = vmatmul.bf16.gmra.mxu0 %v451
        %v944 = vpop.f32.mrf.mxu0
        %v945 = vadd.f32 %v856, %v944
        %v946 = vpop.f32.mrf.mxu0
        %v947 = vadd.f32 %v858, %v946
        %948 = vmatmul.bf16.gmra.mxu0 %v453
        %v949 = vpop.f32.mrf.mxu0
        %v950 = vadd.f32 %v861, %v949
        %v951 = vpop.f32.mrf.mxu0
        %v952 = vadd.f32 %v863, %v951
        %953 = vmatmul.bf16.gmra.mxu0 %v455
        %v954 = vpop.f32.mrf.mxu0
        %v955 = vadd.f32 %v866, %v954
        %v956 = vpop.f32.mrf.mxu0
        %v957 = vadd.f32 %v868, %v956
        %958 = vmatmul.bf16.gmra.mxu0 %v457
        %v959 = vpop.f32.mrf.mxu0
        %v960 = vadd.f32 %v871, %v959
        %v961 = vpop.f32.mrf.mxu0
        %v962 = vadd.f32 %v873, %v961
        %963 = vmatmul.bf16.gmra.mxu0 %v459
        %v964 = vpop.f32.mrf.mxu0
        %v965 = vadd.f32 %v876, %v964
        %v966 = vpop.f32.mrf.mxu0
        %v967 = vadd.f32 %v878, %v966
        %968 = vmatmul.bf16.gmra.mxu0 %v461
        %v969 = vpop.f32.mrf.mxu0
        %v970 = vadd.f32 %v881, %v969
        %v971 = vpop.f32.mrf.mxu0
        %v972 = vadd.f32 %v883, %v971
        %973 = vmatmul.bf16.gmra.mxu0 %v463
        %v974 = vpop.f32.mrf.mxu0
        %v975 = vadd.f32 %v886, %v974
        %v976 = vpop.f32.mrf.mxu0
        %v977 = vadd.f32 %v888, %v976
        %978 = vmatmul.bf16.gmra.mxu0 %v465
        %v979 = vpop.f32.mrf.mxu0
        %v980 = vadd.f32 %v891, %v979
        %v981 = vpop.f32.mrf.mxu0
        %v982 = vadd.f32 %v893, %v981
        %983 = vmatmul.bf16.gmra.mxu0 %v467
        %v984 = vpop.f32.mrf.mxu0
        %v985 = vadd.f32 %v896, %v984
        %v986 = vpop.f32.mrf.mxu0
        %v987 = vadd.f32 %v898, %v986
        %988 = vdwg.mxu0
        %v989 = vld [vmem:[#allocation7] sm:$0xff]
        %v990 = vld [vmem:[#allocation7 + $0x8] sm:$0xff]
        %v991 = vld [vmem:[#allocation7 + $0x10] sm:$0xff]
        %v992 = vld [vmem:[#allocation7 + $0x18] sm:$0xff]
        %v993 = vld [vmem:[#allocation7 + $0x20] sm:$0xff]
        %v994 = vld [vmem:[#allocation7 + $0x28] sm:$0xff]
        %v995 = vld [vmem:[#allocation7 + $0x30] sm:$0xff]
        %v996 = vld [vmem:[#allocation7 + $0x38] sm:$0xff]
        %v997 = vld [vmem:[#allocation7 + $0x40] sm:$0xff]
        %v998 = vld [vmem:[#allocation7 + $0x48] sm:$0xff]
        %v999 = vld [vmem:[#allocation7 + $0x50] sm:$0xff]
        %v1000 = vld [vmem:[#allocation7 + $0x58] sm:$0xff]
        %v1001 = vld [vmem:[#allocation7 + $0x60] sm:$0xff]
        %v1002 = vld [vmem:[#allocation7 + $0x68] sm:$0xff]
        %v1003 = vld [vmem:[#allocation7 + $0x70] sm:$0xff]
        %v1004 = vld [vmem:[#allocation7 + $0x78] sm:$0xff]
        %v1005 = vld [vmem:[#allocation7 + $0x80] sm:$0xff]
        %v1006 = vld [vmem:[#allocation7 + $0x88] sm:$0xff]
        %v1007 = vld [vmem:[#allocation7 + $0x90] sm:$0xff]
        %v1008 = vld [vmem:[#allocation7 + $0x98] sm:$0xff]
        %v1009 = vld [vmem:[#allocation7 + $0xa0] sm:$0xff]
        %v1010 = vld [vmem:[#allocation7 + $0xa8] sm:$0xff]
        %v1011 = vld [vmem:[#allocation7 + $0xb0] sm:$0xff]
        %v1012 = vld [vmem:[#allocation7 + $0xb8] sm:$0xff]
        %v1013 = vld [vmem:[#allocation7 + $0xc0] sm:$0xff]
        %v1014 = vld [vmem:[#allocation7 + $0xc8] sm:$0xff]
        %v1015 = vld [vmem:[#allocation7 + $0xd0] sm:$0xff]
        %v1016 = vld [vmem:[#allocation7 + $0xd8] sm:$0xff]
        %v1017 = vld [vmem:[#allocation7 + $0xe0] sm:$0xff]
        %v1018 = vld [vmem:[#allocation7 + $0xe8] sm:$0xff]
        %v1019 = vld [vmem:[#allocation7 + $0xf0] sm:$0xff]
        %v1020 = vld [vmem:[#allocation7 + $0xf8] sm:$0xff]
        %v1021 = vld [vmem:[%s4] sm:$0x3]
        %v1022 = vpack.c.bf16 %v734, %v732
        %v1023 = vpack.c.bf16 %v912, %v910
        %v1024 = vpack.c.bf16 %v739, %v737
        %v1025 = vpack.c.bf16 %v917, %v915
        %v1026 = vpack.c.bf16 %v744, %v742
        %v1027 = vpack.c.bf16 %v922, %v920
        %v1028 = vpack.c.bf16 %v749, %v747
        %v1029 = vpack.c.bf16 %v927, %v925
        %v1030 = vpack.c.bf16 %v754, %v752
        %v1031 = vpack.c.bf16 %v932, %v930
        %v1032 = vpack.c.bf16 %v759, %v757
        %v1033 = vpack.c.bf16 %v937, %v935
        %v1034 = vpack.c.bf16 %v764, %v762
        %v1035 = vpack.c.bf16 %v942, %v940
        %v1036 = vpack.c.bf16 %v769, %v767
        %v1037 = vpack.c.bf16 %v947, %v945
        %v1038 = vpack.c.bf16 %v774, %v772
        %v1039 = vpack.c.bf16 %v952, %v950
        %v1040 = vpack.c.bf16 %v779, %v777
        %v1041 = vpack.c.bf16 %v957, %v955
        %v1042 = vpack.c.bf16 %v784, %v782
        %v1043 = vpack.c.bf16 %v962, %v960
        %v1044 = vpack.c.bf16 %v789, %v787
        %v1045 = vpack.c.bf16 %v967, %v965
        %v1046 = vpack.c.bf16 %v794, %v792
        %v1047 = vpack.c.bf16 %v972, %v970
        %v1048 = vpack.c.bf16 %v799, %v797
        %v1049 = vpack.c.bf16 %v977, %v975
        %v1050 = vpack.c.bf16 %v804, %v802
        %v1051 = vpack.c.bf16 %v982, %v980
        %v1052 = vpack.c.bf16 %v809, %v807
        %v1053 = vpack.c.bf16 %v987, %v985
        %v1055 = vperm.slane %v1021, 0
        %v1056 = vperm.slane %v1021, 1
        %v1091 = vunpack.c.l.b16 %v989
        %v1092 = vunpack.c.h.b16 %v989
        %v1093 = vunpack.c.l.b16 %v990
        %v1094 = vunpack.c.h.b16 %v990
        %v1095 = vunpack.c.l.b16 %v991
        %v1096 = vunpack.c.h.b16 %v991
        %v1097 = vunpack.c.l.b16 %v992
        %v1098 = vunpack.c.h.b16 %v992
        %v1099 = vunpack.c.l.b16 %v993
        %v1100 = vunpack.c.h.b16 %v993
        %v1101 = vunpack.c.l.b16 %v994
        %v1102 = vunpack.c.h.b16 %v994
        %v1103 = vunpack.c.l.b16 %v995
        %v1104 = vunpack.c.h.b16 %v995
        %v1105 = vunpack.c.l.b16 %v996
        %v1106 = vunpack.c.h.b16 %v996
        %v1107 = vunpack.c.l.b16 %v997
        %v1108 = vunpack.c.h.b16 %v997
        %v1109 = vunpack.c.l.b16 %v998
        %v1110 = vunpack.c.h.b16 %v998
        %v1111 = vunpack.c.l.b16 %v999
        %v1112 = vunpack.c.h.b16 %v999
        %v1113 = vunpack.c.l.b16 %v1000
        %v1114 = vunpack.c.h.b16 %v1000
        %v1115 = vunpack.c.l.b16 %v1001
        %v1116 = vunpack.c.h.b16 %v1001
        %v1117 = vunpack.c.l.b16 %v1002
        %v1118 = vunpack.c.h.b16 %v1002
        %v1119 = vunpack.c.l.b16 %v1003
        %v1120 = vunpack.c.h.b16 %v1003
        %v1121 = vunpack.c.l.b16 %v1004
        %v1122 = vunpack.c.h.b16 %v1004
        %v1123 = vunpack.c.l.b16 %v1005
        %v1124 = vunpack.c.h.b16 %v1005
        %v1125 = vunpack.c.l.b16 %v1006
        %v1126 = vunpack.c.h.b16 %v1006
        %v1127 = vunpack.c.l.b16 %v1007
        %v1128 = vunpack.c.h.b16 %v1007
        %v1129 = vunpack.c.l.b16 %v1008
        %v1130 = vunpack.c.h.b16 %v1008
        %v1131 = vunpack.c.l.b16 %v1009
        %v1132 = vunpack.c.h.b16 %v1009
        %v1133 = vunpack.c.l.b16 %v1010
        %v1134 = vunpack.c.h.b16 %v1010
        %v1135 = vunpack.c.l.b16 %v1011
        %v1136 = vunpack.c.h.b16 %v1011
        %v1137 = vunpack.c.l.b16 %v1012
        %v1138 = vunpack.c.h.b16 %v1012
        %v1139 = vunpack.c.l.b16 %v1013
        %v1140 = vunpack.c.h.b16 %v1013
        %v1141 = vunpack.c.l.b16 %v1014
        %v1142 = vunpack.c.h.b16 %v1014
        %v1143 = vunpack.c.l.b16 %v1015
        %v1144 = vunpack.c.h.b16 %v1015
        %v1145 = vunpack.c.l.b16 %v1016
        %v1146 = vunpack.c.h.b16 %v1016
        %v1147 = vunpack.c.l.b16 %v1017
        %v1148 = vunpack.c.h.b16 %v1017
        %v1149 = vunpack.c.l.b16 %v1018
        %v1150 = vunpack.c.h.b16 %v1018
        %v1151 = vunpack.c.l.b16 %v1019
        %v1152 = vunpack.c.h.b16 %v1019
        %v1153 = vunpack.c.l.b16 %v1020
        %v1154 = vunpack.c.h.b16 %v1020
        %v1155 = vpack.c.b16 %v1093, %v1091
        %v1156 = vpack.c.b16 %v1094, %v1092
        %v1157 = vpack.c.b16 %v1097, %v1095
        %v1158 = vpack.c.b16 %v1098, %v1096
        %v1159 = vpack.c.b16 %v1101, %v1099
        %v1160 = vpack.c.b16 %v1102, %v1100
        %v1161 = vpack.c.b16 %v1105, %v1103
        %v1162 = vpack.c.b16 %v1106, %v1104
        %v1163 = vpack.c.b16 %v1109, %v1107
        %v1164 = vpack.c.b16 %v1110, %v1108
        %v1165 = vpack.c.b16 %v1113, %v1111
        %v1166 = vpack.c.b16 %v1114, %v1112
        %v1167 = vpack.c.b16 %v1117, %v1115
        %v1168 = vpack.c.b16 %v1118, %v1116
        %v1169 = vpack.c.b16 %v1121, %v1119
        %v1170 = vpack.c.b16 %v1122, %v1120
        %v1171 = vpack.c.b16 %v1125, %v1123
        %v1172 = vpack.c.b16 %v1126, %v1124
        %v1173 = vpack.c.b16 %v1129, %v1127
        %v1174 = vpack.c.b16 %v1130, %v1128
        %v1175 = vpack.c.b16 %v1133, %v1131
        %v1176 = vpack.c.b16 %v1134, %v1132
        %v1177 = vpack.c.b16 %v1137, %v1135
        %v1178 = vpack.c.b16 %v1138, %v1136
        %v1179 = vpack.c.b16 %v1141, %v1139
        %v1180 = vpack.c.b16 %v1142, %v1140
        %v1181 = vpack.c.b16 %v1145, %v1143
        %v1182 = vpack.c.b16 %v1146, %v1144
        %v1183 = vpack.c.b16 %v1149, %v1147
        %v1184 = vpack.c.b16 %v1150, %v1148
        %v1185 = vpack.c.b16 %v1153, %v1151
        %v1186 = vpack.c.b16 %v1154, %v1152
        %1219 = vmatpush.bf16.msra.mxu0 %v1169
        %1220 = vmatpush.bf16.msra.mxu0 %v1167
        %1221 = vmatpush.bf16.msra.mxu0 %v1165
        %1222 = vmatpush.bf16.msra.mxu0 %v1163
        %1223 = vmatpush.bf16.msra.mxu0 %v1161
        %1224 = vmatpush.bf16.msra.mxu0 %v1159
        %1225 = vmatpush.bf16.msra.mxu0 %v1157
        %1226 = vmatpush.bf16.msra.mxu0 %v1155
        %1227 = vmatmul.bf16.gmra.mxu0 %v1022
        %v1228 = vpop.f32.mrf.mxu0
        %v1229 = vadd.f32 %v1055, %v1228
        %v1230 = vpop.f32.mrf.mxu0
        %v1231 = vadd.f32 %v1055, %v1230
        %1232 = vmatmul.bf16.gmra.mxu0 %v1024
        %v1233 = vpop.f32.mrf.mxu0
        %v1234 = vadd.f32 %v1055, %v1233
        %v1235 = vpop.f32.mrf.mxu0
        %v1236 = vadd.f32 %v1055, %v1235
        %1237 = vmatmul.bf16.gmra.mxu0 %v1026
        %v1238 = vpop.f32.mrf.mxu0
        %v1239 = vadd.f32 %v1055, %v1238
        %v1240 = vpop.f32.mrf.mxu0
        %v1241 = vadd.f32 %v1055, %v1240
        %1242 = vmatmul.bf16.gmra.mxu0 %v1028
        %v1243 = vpop.f32.mrf.mxu0
        %v1244 = vadd.f32 %v1055, %v1243
        %v1245 = vpop.f32.mrf.mxu0
        %v1246 = vadd.f32 %v1055, %v1245
        %1247 = vmatmul.bf16.gmra.mxu0 %v1030
        %v1248 = vpop.f32.mrf.mxu0
        %v1249 = vadd.f32 %v1055, %v1248
        %v1250 = vpop.f32.mrf.mxu0
        %v1251 = vadd.f32 %v1055, %v1250
        %1252 = vmatmul.bf16.gmra.mxu0 %v1032
        %v1253 = vpop.f32.mrf.mxu0
        %v1254 = vadd.f32 %v1055, %v1253
        %v1255 = vpop.f32.mrf.mxu0
        %v1256 = vadd.f32 %v1055, %v1255
        %1257 = vmatmul.bf16.gmra.mxu0 %v1034
        %v1258 = vpop.f32.mrf.mxu0
        %v1259 = vadd.f32 %v1055, %v1258
        %v1260 = vpop.f32.mrf.mxu0
        %v1261 = vadd.f32 %v1055, %v1260
        %1262 = vmatmul.bf16.gmra.mxu0 %v1036
        %v1263 = vpop.f32.mrf.mxu0
        %v1264 = vadd.f32 %v1055, %v1263
        %v1265 = vpop.f32.mrf.mxu0
        %v1266 = vadd.f32 %v1055, %v1265
        %1267 = vmatmul.bf16.gmra.mxu0 %v1038
        %v1268 = vpop.f32.mrf.mxu0
        %v1269 = vadd.f32 %v1055, %v1268
        %v1270 = vpop.f32.mrf.mxu0
        %v1271 = vadd.f32 %v1055, %v1270
        %1272 = vmatmul.bf16.gmra.mxu0 %v1040
        %v1273 = vpop.f32.mrf.mxu0
        %v1274 = vadd.f32 %v1055, %v1273
        %v1275 = vpop.f32.mrf.mxu0
        %v1276 = vadd.f32 %v1055, %v1275
        %1277 = vmatmul.bf16.gmra.mxu0 %v1042
        %v1278 = vpop.f32.mrf.mxu0
        %v1279 = vadd.f32 %v1055, %v1278
        %v1280 = vpop.f32.mrf.mxu0
        %v1281 = vadd.f32 %v1055, %v1280
        %1282 = vmatmul.bf16.gmra.mxu0 %v1044
        %v1283 = vpop.f32.mrf.mxu0
        %v1284 = vadd.f32 %v1055, %v1283
        %v1285 = vpop.f32.mrf.mxu0
        %v1286 = vadd.f32 %v1055, %v1285
        %1287 = vmatmul.bf16.gmra.mxu0 %v1046
        %v1288 = vpop.f32.mrf.mxu0
        %v1289 = vadd.f32 %v1055, %v1288
        %v1290 = vpop.f32.mrf.mxu0
        %v1291 = vadd.f32 %v1055, %v1290
        %1292 = vmatmul.bf16.gmra.mxu0 %v1048
        %v1293 = vpop.f32.mrf.mxu0
        %v1294 = vadd.f32 %v1055, %v1293
        %v1295 = vpop.f32.mrf.mxu0
        %v1296 = vadd.f32 %v1055, %v1295
        %1297 = vmatmul.bf16.gmra.mxu0 %v1050
        %v1298 = vpop.f32.mrf.mxu0
        %v1299 = vadd.f32 %v1055, %v1298
        %v1300 = vpop.f32.mrf.mxu0
        %v1301 = vadd.f32 %v1055, %v1300
        %1302 = vmatmul.bf16.gmra.mxu0 %v1052
        %v1303 = vpop.f32.mrf.mxu0
        %v1304 = vadd.f32 %v1055, %v1303
        %v1305 = vpop.f32.mrf.mxu0
        %v1306 = vadd.f32 %v1055, %v1305
        %1307 = vdwg.mxu0
        %1308 = vmatpush.bf16.msra.mxu0 %v1185
        %1309 = vmatpush.bf16.msra.mxu0 %v1183
        %1310 = vmatpush.bf16.msra.mxu0 %v1181
        %1311 = vmatpush.bf16.msra.mxu0 %v1179
        %1312 = vmatpush.bf16.msra.mxu0 %v1177
        %1313 = vmatpush.bf16.msra.mxu0 %v1175
        %1314 = vmatpush.bf16.msra.mxu0 %v1173
        %1315 = vmatpush.bf16.msra.mxu0 %v1171
        %1316 = vmatmul.bf16.gmra.mxu0 %v1023
        %v1317 = vpop.f32.mrf.mxu0
        %v1318 = vadd.f32 %v1229, %v1317
        %v1319 = vpop.f32.mrf.mxu0
        %v1320 = vadd.f32 %v1231, %v1319
        %1321 = vmatmul.bf16.gmra.mxu0 %v1025
        %v1322 = vpop.f32.mrf.mxu0
        %v1323 = vadd.f32 %v1234, %v1322
        %v1324 = vpop.f32.mrf.mxu0
        %v1325 = vadd.f32 %v1236, %v1324
        %1326 = vmatmul.bf16.gmra.mxu0 %v1027
        %v1327 = vpop.f32.mrf.mxu0
        %v1328 = vadd.f32 %v1239, %v1327
        %v1329 = vpop.f32.mrf.mxu0
        %v1330 = vadd.f32 %v1241, %v1329
        %1331 = vmatmul.bf16.gmra.mxu0 %v1029
        %v1332 = vpop.f32.mrf.mxu0
        %v1333 = vadd.f32 %v1244, %v1332
        %v1334 = vpop.f32.mrf.mxu0
        %v1335 = vadd.f32 %v1246, %v1334
        %1336 = vmatmul.bf16.gmra.mxu0 %v1031
        %v1337 = vpop.f32.mrf.mxu0
        %v1338 = vadd.f32 %v1249, %v1337
        %v1339 = vpop.f32.mrf.mxu0
        %v1340 = vadd.f32 %v1251, %v1339
        %1341 = vmatmul.bf16.gmra.mxu0 %v1033
        %v1342 = vpop.f32.mrf.mxu0
        %v1343 = vadd.f32 %v1254, %v1342
        %v1344 = vpop.f32.mrf.mxu0
        %v1345 = vadd.f32 %v1256, %v1344
        %1346 = vmatmul.bf16.gmra.mxu0 %v1035
        %v1347 = vpop.f32.mrf.mxu0
        %v1348 = vadd.f32 %v1259, %v1347
        %v1349 = vpop.f32.mrf.mxu0
        %v1350 = vadd.f32 %v1261, %v1349
        %1351 = vmatmul.bf16.gmra.mxu0 %v1037
        %v1352 = vpop.f32.mrf.mxu0
        %v1353 = vadd.f32 %v1264, %v1352
        %v1354 = vpop.f32.mrf.mxu0
        %v1355 = vadd.f32 %v1266, %v1354
        %1356 = vmatmul.bf16.gmra.mxu0 %v1039
        %v1357 = vpop.f32.mrf.mxu0
        %v1358 = vadd.f32 %v1269, %v1357
        %v1359 = vpop.f32.mrf.mxu0
        %v1360 = vadd.f32 %v1271, %v1359
        %1361 = vmatmul.bf16.gmra.mxu0 %v1041
        %v1362 = vpop.f32.mrf.mxu0
        %v1363 = vadd.f32 %v1274, %v1362
        %v1364 = vpop.f32.mrf.mxu0
        %v1365 = vadd.f32 %v1276, %v1364
        %1366 = vmatmul.bf16.gmra.mxu0 %v1043
        %v1367 = vpop.f32.mrf.mxu0
        %v1368 = vadd.f32 %v1279, %v1367
        %v1369 = vpop.f32.mrf.mxu0
        %v1370 = vadd.f32 %v1281, %v1369
        %1371 = vmatmul.bf16.gmra.mxu0 %v1045
        %v1372 = vpop.f32.mrf.mxu0
        %v1373 = vadd.f32 %v1284, %v1372
        %v1374 = vpop.f32.mrf.mxu0
        %v1375 = vadd.f32 %v1286, %v1374
        %1376 = vmatmul.bf16.gmra.mxu0 %v1047
        %v1377 = vpop.f32.mrf.mxu0
        %v1378 = vadd.f32 %v1289, %v1377
        %v1379 = vpop.f32.mrf.mxu0
        %v1380 = vadd.f32 %v1291, %v1379
        %1381 = vmatmul.bf16.gmra.mxu0 %v1049
        %v1382 = vpop.f32.mrf.mxu0
        %v1383 = vadd.f32 %v1294, %v1382
        %v1384 = vpop.f32.mrf.mxu0
        %v1385 = vadd.f32 %v1296, %v1384
        %1386 = vmatmul.bf16.gmra.mxu0 %v1051
        %v1387 = vpop.f32.mrf.mxu0
        %v1388 = vadd.f32 %v1299, %v1387
        %v1389 = vpop.f32.mrf.mxu0
        %v1390 = vadd.f32 %v1301, %v1389
        %1391 = vmatmul.bf16.gmra.mxu0 %v1053
        %v1392 = vpop.f32.mrf.mxu0
        %v1393 = vadd.f32 %v1304, %v1392
        %v1394 = vpop.f32.mrf.mxu0
        %v1395 = vadd.f32 %v1306, %v1394
        %1396 = vdwg.mxu0
        %1397 = vmatpush.bf16.msra.mxu0 %v1170
        %1398 = vmatpush.bf16.msra.mxu0 %v1168
        %1399 = vmatpush.bf16.msra.mxu0 %v1166
        %1400 = vmatpush.bf16.msra.mxu0 %v1164
        %1401 = vmatpush.bf16.msra.mxu0 %v1162
        %1402 = vmatpush.bf16.msra.mxu0 %v1160
        %1403 = vmatpush.bf16.msra.mxu0 %v1158
        %1404 = vmatpush.bf16.msra.mxu0 %v1156
        %1405 = vmatmul.bf16.gmra.mxu0 %v1022
        %v1406 = vpop.f32.mrf.mxu0
        %v1407 = vadd.f32 %v1056, %v1406
        %v1408 = vpop.f32.mrf.mxu0
        %v1409 = vadd.f32 %v1056, %v1408
        %1410 = vmatmul.bf16.gmra.mxu0 %v1024
        %v1411 = vpop.f32.mrf.mxu0
        %v1412 = vadd.f32 %v1056, %v1411
        %v1413 = vpop.f32.mrf.mxu0
        %v1414 = vadd.f32 %v1056, %v1413
        %1415 = vmatmul.bf16.gmra.mxu0 %v1026
        %v1416 = vpop.f32.mrf.mxu0
        %v1417 = vadd.f32 %v1056, %v1416
        %v1418 = vpop.f32.mrf.mxu0
        %v1419 = vadd.f32 %v1056, %v1418
        %1420 = vmatmul.bf16.gmra.mxu0 %v1028
        %v1421 = vpop.f32.mrf.mxu0
        %v1422 = vadd.f32 %v1056, %v1421
        %v1423 = vpop.f32.mrf.mxu0
        %v1424 = vadd.f32 %v1056, %v1423
        %1425 = vmatmul.bf16.gmra.mxu0 %v1030
        %v1426 = vpop.f32.mrf.mxu0
        %v1427 = vadd.f32 %v1056, %v1426
        %v1428 = vpop.f32.mrf.mxu0
        %v1429 = vadd.f32 %v1056, %v1428
        %1430 = vmatmul.bf16.gmra.mxu0 %v1032
        %v1431 = vpop.f32.mrf.mxu0
        %v1432 = vadd.f32 %v1056, %v1431
        %v1433 = vpop.f32.mrf.mxu0
        %v1434 = vadd.f32 %v1056, %v1433
        %1435 = vmatmul.bf16.gmra.mxu0 %v1034
        %v1436 = vpop.f32.mrf.mxu0
        %v1437 = vadd.f32 %v1056, %v1436
        %v1438 = vpop.f32.mrf.mxu0
        %v1439 = vadd.f32 %v1056, %v1438
        %1440 = vmatmul.bf16.gmra.mxu0 %v1036
        %v1441 = vpop.f32.mrf.mxu0
        %v1442 = vadd.f32 %v1056, %v1441
        %v1443 = vpop.f32.mrf.mxu0
        %v1444 = vadd.f32 %v1056, %v1443
        %1445 = vmatmul.bf16.gmra.mxu0 %v1038
        %v1446 = vpop.f32.mrf.mxu0
        %v1447 = vadd.f32 %v1056, %v1446
        %v1448 = vpop.f32.mrf.mxu0
        %v1449 = vadd.f32 %v1056, %v1448
        %1450 = vmatmul.bf16.gmra.mxu0 %v1040
        %v1451 = vpop.f32.mrf.mxu0
        %v1452 = vadd.f32 %v1056, %v1451
        %v1453 = vpop.f32.mrf.mxu0
        %v1454 = vadd.f32 %v1056, %v1453
        %1455 = vmatmul.bf16.gmra.mxu0 %v1042
        %v1456 = vpop.f32.mrf.mxu0
        %v1457 = vadd.f32 %v1056, %v1456
        %v1458 = vpop.f32.mrf.mxu0
        %v1459 = vadd.f32 %v1056, %v1458
        %1460 = vmatmul.bf16.gmra.mxu0 %v1044
        %v1461 = vpop.f32.mrf.mxu0
        %v1462 = vadd.f32 %v1056, %v1461
        %v1463 = vpop.f32.mrf.mxu0
        %v1464 = vadd.f32 %v1056, %v1463
        %1465 = vmatmul.bf16.gmra.mxu0 %v1046
        %v1466 = vpop.f32.mrf.mxu0
        %v1467 = vadd.f32 %v1056, %v1466
        %v1468 = vpop.f32.mrf.mxu0
        %v1469 = vadd.f32 %v1056, %v1468
        %1470 = vmatmul.bf16.gmra.mxu0 %v1048
        %v1471 = vpop.f32.mrf.mxu0
        %v1472 = vadd.f32 %v1056, %v1471
        %v1473 = vpop.f32.mrf.mxu0
        %v1474 = vadd.f32 %v1056, %v1473
        %1475 = vmatmul.bf16.gmra.mxu0 %v1050
        %v1476 = vpop.f32.mrf.mxu0
        %v1477 = vadd.f32 %v1056, %v1476
        %v1478 = vpop.f32.mrf.mxu0
        %v1479 = vadd.f32 %v1056, %v1478
        %1480 = vmatmul.bf16.gmra.mxu0 %v1052
        %v1481 = vpop.f32.mrf.mxu0
        %v1482 = vadd.f32 %v1056, %v1481
        %v1483 = vpop.f32.mrf.mxu0
        %v1484 = vadd.f32 %v1056, %v1483
        %1485 = vdwg.mxu0
        %1486 = vmatpush.bf16.msra.mxu0 %v1186
        %1487 = vmatpush.bf16.msra.mxu0 %v1184
        %1488 = vmatpush.bf16.msra.mxu0 %v1182
        %1489 = vmatpush.bf16.msra.mxu0 %v1180
        %1490 = vmatpush.bf16.msra.mxu0 %v1178
        %1491 = vmatpush.bf16.msra.mxu0 %v1176
        %1492 = vmatpush.bf16.msra.mxu0 %v1174
        %1493 = vmatpush.bf16.msra.mxu0 %v1172
        %1494 = vmatmul.bf16.gmra.mxu0 %v1023
        %v1495 = vpop.f32.mrf.mxu0
        %v1496 = vadd.f32 %v1407, %v1495
        %v1497 = vpop.f32.mrf.mxu0
        %v1498 = vadd.f32 %v1409, %v1497
        %1499 = vmatmul.bf16.gmra.mxu0 %v1025
        %v1500 = vpop.f32.mrf.mxu0
        %v1501 = vadd.f32 %v1412, %v1500
        %v1502 = vpop.f32.mrf.mxu0
        %v1503 = vadd.f32 %v1414, %v1502
        %1504 = vmatmul.bf16.gmra.mxu0 %v1027
        %v1505 = vpop.f32.mrf.mxu0
        %v1506 = vadd.f32 %v1417, %v1505
        %v1507 = vpop.f32.mrf.mxu0
        %v1508 = vadd.f32 %v1419, %v1507
        %1509 = vmatmul.bf16.gmra.mxu0 %v1029
        %v1510 = vpop.f32.mrf.mxu0
        %v1511 = vadd.f32 %v1422, %v1510
        %v1512 = vpop.f32.mrf.mxu0
        %v1513 = vadd.f32 %v1424, %v1512
        %1514 = vmatmul.bf16.gmra.mxu0 %v1031
        %v1515 = vpop.f32.mrf.mxu0
        %v1516 = vadd.f32 %v1427, %v1515
        %v1517 = vpop.f32.mrf.mxu0
        %v1518 = vadd.f32 %v1429, %v1517
        %1519 = vmatmul.bf16.gmra.mxu0 %v1033
        %v1520 = vpop.f32.mrf.mxu0
        %v1521 = vadd.f32 %v1432, %v1520
        %v1522 = vpop.f32.mrf.mxu0
        %v1523 = vadd.f32 %v1434, %v1522
        %1524 = vmatmul.bf16.gmra.mxu0 %v1035
        %v1525 = vpop.f32.mrf.mxu0
        %v1526 = vadd.f32 %v1437, %v1525
        %v1527 = vpop.f32.mrf.mxu0
        %v1528 = vadd.f32 %v1439, %v1527
        %1529 = vmatmul.bf16.gmra.mxu0 %v1037
        %v1530 = vpop.f32.mrf.mxu0
        %v1531 = vadd.f32 %v1442, %v1530
        %v1532 = vpop.f32.mrf.mxu0
        %v1533 = vadd.f32 %v1444, %v1532
        %1534 = vmatmul.bf16.gmra.mxu0 %v1039
        %v1535 = vpop.f32.mrf.mxu0
        %v1536 = vadd.f32 %v1447, %v1535
        %v1537 = vpop.f32.mrf.mxu0
        %v1538 = vadd.f32 %v1449, %v1537
        %1539 = vmatmul.bf16.gmra.mxu0 %v1041
        %v1540 = vpop.f32.mrf.mxu0
        %v1541 = vadd.f32 %v1452, %v1540
        %v1542 = vpop.f32.mrf.mxu0
        %v1543 = vadd.f32 %v1454, %v1542
        %1544 = vmatmul.bf16.gmra.mxu0 %v1043
        %v1545 = vpop.f32.mrf.mxu0
        %v1546 = vadd.f32 %v1457, %v1545
        %v1547 = vpop.f32.mrf.mxu0
        %v1548 = vadd.f32 %v1459, %v1547
        %1549 = vmatmul.bf16.gmra.mxu0 %v1045
        %v1550 = vpop.f32.mrf.mxu0
        %v1551 = vadd.f32 %v1462, %v1550
        %v1552 = vpop.f32.mrf.mxu0
        %v1553 = vadd.f32 %v1464, %v1552
        %1554 = vmatmul.bf16.gmra.mxu0 %v1047
        %v1555 = vpop.f32.mrf.mxu0
        %v1556 = vadd.f32 %v1467, %v1555
        %v1557 = vpop.f32.mrf.mxu0
        %v1558 = vadd.f32 %v1469, %v1557
        %1559 = vmatmul.bf16.gmra.mxu0 %v1049
        %v1560 = vpop.f32.mrf.mxu0
        %v1561 = vadd.f32 %v1472, %v1560
        %v1562 = vpop.f32.mrf.mxu0
        %v1563 = vadd.f32 %v1474, %v1562
        %1564 = vmatmul.bf16.gmra.mxu0 %v1051
        %v1565 = vpop.f32.mrf.mxu0
        %v1566 = vadd.f32 %v1477, %v1565
        %v1567 = vpop.f32.mrf.mxu0
        %v1568 = vadd.f32 %v1479, %v1567
        %1569 = vmatmul.bf16.gmra.mxu0 %v1053
        %v1570 = vpop.f32.mrf.mxu0
        %v1571 = vadd.f32 %v1482, %v1570
        %v1572 = vpop.f32.mrf.mxu0
        %v1573 = vadd.f32 %v1484, %v1572
        %1574 = vdwg.mxu0
        %v1575 = vld [vmem:[%s5] sm:$0x3]
        %v1576 = vld [vmem:[#allocation2] sm:$0x1]
        %v1578 = vperm.slane %v1575, 0
        %v1579 = vperm.slane %v1575, 1
        %v1582 = vmul.f32 %v1318, %v1578
        %v1583 = vmul.f32 %v1496, %v1579
        %v1584 = vmul.f32 %v1320, %v1578
        %v1585 = vmul.f32 %v1498, %v1579
        %v1586 = vmul.f32 %v1323, %v1578
        %v1587 = vmul.f32 %v1501, %v1579
        %v1588 = vmul.f32 %v1325, %v1578
        %v1589 = vmul.f32 %v1503, %v1579
        %v1590 = vmul.f32 %v1328, %v1578
        %v1591 = vmul.f32 %v1506, %v1579
        %v1592 = vmul.f32 %v1330, %v1578
        %v1593 = vmul.f32 %v1508, %v1579
        %v1594 = vmul.f32 %v1333, %v1578
        %v1595 = vmul.f32 %v1511, %v1579
        %v1596 = vmul.f32 %v1335, %v1578
        %v1597 = vmul.f32 %v1513, %v1579
        %v1598 = vmul.f32 %v1338, %v1578
        %v1599 = vmul.f32 %v1516, %v1579
        %v1600 = vmul.f32 %v1340, %v1578
        %v1601 = vmul.f32 %v1518, %v1579
        %v1602 = vmul.f32 %v1343, %v1578
        %v1603 = vmul.f32 %v1521, %v1579
        %v1604 = vmul.f32 %v1345, %v1578
        %v1605 = vmul.f32 %v1523, %v1579
        %v1606 = vmul.f32 %v1348, %v1578
        %v1607 = vmul.f32 %v1526, %v1579
        %v1608 = vmul.f32 %v1350, %v1578
        %v1609 = vmul.f32 %v1528, %v1579
        %v1610 = vmul.f32 %v1353, %v1578
        %v1611 = vmul.f32 %v1531, %v1579
        %v1612 = vmul.f32 %v1355, %v1578
        %v1613 = vmul.f32 %v1533, %v1579
        %v1614 = vmul.f32 %v1358, %v1578
        %v1615 = vmul.f32 %v1536, %v1579
        %v1616 = vmul.f32 %v1360, %v1578
        %v1617 = vmul.f32 %v1538, %v1579
        %v1618 = vmul.f32 %v1363, %v1578
        %v1619 = vmul.f32 %v1541, %v1579
        %v1620 = vmul.f32 %v1365, %v1578
        %v1621 = vmul.f32 %v1543, %v1579
        %v1622 = vmul.f32 %v1368, %v1578
        %v1623 = vmul.f32 %v1546, %v1579
        %v1624 = vmul.f32 %v1370, %v1578
        %v1625 = vmul.f32 %v1548, %v1579
        %v1626 = vmul.f32 %v1373, %v1578
        %v1627 = vmul.f32 %v1551, %v1579
        %v1628 = vmul.f32 %v1375, %v1578
        %v1629 = vmul.f32 %v1553, %v1579
        %v1630 = vmul.f32 %v1378, %v1578
        %v1631 = vmul.f32 %v1556, %v1579
        %v1632 = vmul.f32 %v1380, %v1578
        %v1633 = vmul.f32 %v1558, %v1579
        %v1634 = vmul.f32 %v1383, %v1578
        %v1635 = vmul.f32 %v1561, %v1579
        %v1636 = vmul.f32 %v1385, %v1578
        %v1637 = vmul.f32 %v1563, %v1579
        %v1638 = vmul.f32 %v1388, %v1578
        %v1639 = vmul.f32 %v1566, %v1579
        %v1640 = vmul.f32 %v1390, %v1578
        %v1641 = vmul.f32 %v1568, %v1579
        %v1642 = vmul.f32 %v1393, %v1578
        %v1643 = vmul.f32 %v1571, %v1579
        %v1644 = vmul.f32 %v1395, %v1578
        %v1645 = vmul.f32 %v1573, %v1579
        %v1646 = vadd.f32 %v1582, %v1583
        %1647 = vadd.xlane.f32.xlu0 %v1646
        %v1648 = vpop.xlane.xlu0 %1647
        %v1649 = vadd.f32 %v1584, %v1585
        %1650 = vadd.xlane.f32.xlu0 %v1649
        %v1651 = vpop.xlane.xlu0 %1650
        %v1652 = vadd.f32 %v1586, %v1587
        %1653 = vadd.xlane.f32.xlu0 %v1652
        %v1654 = vpop.xlane.xlu0 %1653
        %v1655 = vadd.f32 %v1588, %v1589
        %1656 = vadd.xlane.f32.xlu0 %v1655
        %v1657 = vpop.xlane.xlu0 %1656
        %v1658 = vadd.f32 %v1590, %v1591
        %1659 = vadd.xlane.f32.xlu0 %v1658
        %v1660 = vpop.xlane.xlu0 %1659
        %v1661 = vadd.f32 %v1592, %v1593
        %1662 = vadd.xlane.f32.xlu0 %v1661
        %v1663 = vpop.xlane.xlu0 %1662
        %v1664 = vadd.f32 %v1594, %v1595
        %1665 = vadd.xlane.f32.xlu0 %v1664
        %v1666 = vpop.xlane.xlu0 %1665
        %v1667 = vadd.f32 %v1596, %v1597
        %1668 = vadd.xlane.f32.xlu0 %v1667
        %v1669 = vpop.xlane.xlu0 %1668
        %v1670 = vadd.f32 %v1598, %v1599
        %1671 = vadd.xlane.f32.xlu0 %v1670
        %v1672 = vpop.xlane.xlu0 %1671
        %v1673 = vadd.f32 %v1600, %v1601
        %1674 = vadd.xlane.f32.xlu0 %v1673
        %v1675 = vpop.xlane.xlu0 %1674
        %v1676 = vadd.f32 %v1602, %v1603
        %1677 = vadd.xlane.f32.xlu0 %v1676
        %v1678 = vpop.xlane.xlu0 %1677
        %v1679 = vadd.f32 %v1604, %v1605
        %1680 = vadd.xlane.f32.xlu0 %v1679
        %v1681 = vpop.xlane.xlu0 %1680
        %v1682 = vadd.f32 %v1606, %v1607
        %1683 = vadd.xlane.f32.xlu0 %v1682
        %v1684 = vpop.xlane.xlu0 %1683
        %v1685 = vadd.f32 %v1608, %v1609
        %1686 = vadd.xlane.f32.xlu0 %v1685
        %v1687 = vpop.xlane.xlu0 %1686
        %v1688 = vadd.f32 %v1610, %v1611
        %1689 = vadd.xlane.f32.xlu0 %v1688
        %v1690 = vpop.xlane.xlu0 %1689
        %v1691 = vadd.f32 %v1612, %v1613
        %1692 = vadd.xlane.f32.xlu0 %v1691
        %v1693 = vpop.xlane.xlu0 %1692
        %v1694 = vadd.f32 %v1614, %v1615
        %1695 = vadd.xlane.f32.xlu0 %v1694
        %v1696 = vpop.xlane.xlu0 %1695
        %v1697 = vadd.f32 %v1616, %v1617
        %1698 = vadd.xlane.f32.xlu0 %v1697
        %v1699 = vpop.xlane.xlu0 %1698
        %v1700 = vadd.f32 %v1618, %v1619
        %1701 = vadd.xlane.f32.xlu0 %v1700
        %v1702 = vpop.xlane.xlu0 %1701
        %v1703 = vadd.f32 %v1620, %v1621
        %1704 = vadd.xlane.f32.xlu0 %v1703
        %v1705 = vpop.xlane.xlu0 %1704
        %v1706 = vadd.f32 %v1622, %v1623
        %1707 = vadd.xlane.f32.xlu0 %v1706
        %v1708 = vpop.xlane.xlu0 %1707
        %v1709 = vadd.f32 %v1624, %v1625
        %1710 = vadd.xlane.f32.xlu0 %v1709
        %v1711 = vpop.xlane.xlu0 %1710
        %v1712 = vadd.f32 %v1626, %v1627
        %1713 = vadd.xlane.f32.xlu0 %v1712
        %v1714 = vpop.xlane.xlu0 %1713
        %v1715 = vadd.f32 %v1628, %v1629
        %1716 = vadd.xlane.f32.xlu0 %v1715
        %v1717 = vpop.xlane.xlu0 %1716
        %v1718 = vadd.f32 %v1630, %v1631
        %1719 = vadd.xlane.f32.xlu0 %v1718
        %v1720 = vpop.xlane.xlu0 %1719
        %v1721 = vadd.f32 %v1632, %v1633
        %1722 = vadd.xlane.f32.xlu0 %v1721
        %v1723 = vpop.xlane.xlu0 %1722
        %v1724 = vadd.f32 %v1634, %v1635
        %1725 = vadd.xlane.f32.xlu0 %v1724
        %v1726 = vpop.xlane.xlu0 %1725
        %v1727 = vadd.f32 %v1636, %v1637
        %1728 = vadd.xlane.f32.xlu0 %v1727
        %v1729 = vpop.xlane.xlu0 %1728
        %v1730 = vadd.f32 %v1638, %v1639
        %1731 = vadd.xlane.f32.xlu0 %v1730
        %v1732 = vpop.xlane.xlu0 %1731
        %v1733 = vadd.f32 %v1640, %v1641
        %1734 = vadd.xlane.f32.xlu0 %v1733
        %v1735 = vpop.xlane.xlu0 %1734
        %v1736 = vadd.f32 %v1642, %v1643
        %1737 = vadd.xlane.f32.xlu0 %v1736
        %v1738 = vpop.xlane.xlu0 %1737
        %v1739 = vadd.f32 %v1644, %v1645
        %1740 = vadd.xlane.f32.xlu0 %v1739
        %v1741 = vpop.xlane.xlu0 %1740
        %v1743 = vperm.slane %v1576, 0
        %v1745 = vadd.f32 %v1648, %v1743
        %v1746 = vadd.f32 %v1651, %v1743
        %v1747 = vadd.f32 %v1654, %v1743
        %v1748 = vadd.f32 %v1657, %v1743
        %v1749 = vadd.f32 %v1660, %v1743
        %v1750 = vadd.f32 %v1663, %v1743
        %v1751 = vadd.f32 %v1666, %v1743
        %v1752 = vadd.f32 %v1669, %v1743
        %v1753 = vadd.f32 %v1672, %v1743
        %v1754 = vadd.f32 %v1675, %v1743
        %v1755 = vadd.f32 %v1678, %v1743
        %v1756 = vadd.f32 %v1681, %v1743
        %v1757 = vadd.f32 %v1684, %v1743
        %v1758 = vadd.f32 %v1687, %v1743
        %v1759 = vadd.f32 %v1690, %v1743
        %v1760 = vadd.f32 %v1693, %v1743
        %v1761 = vadd.f32 %v1696, %v1743
        %v1762 = vadd.f32 %v1699, %v1743
        %v1763 = vadd.f32 %v1702, %v1743
        %v1764 = vadd.f32 %v1705, %v1743
        %v1765 = vadd.f32 %v1708, %v1743
        %v1766 = vadd.f32 %v1711, %v1743
        %v1767 = vadd.f32 %v1714, %v1743
        %v1768 = vadd.f32 %v1717, %v1743
        %v1769 = vadd.f32 %v1720, %v1743
        %v1770 = vadd.f32 %v1723, %v1743
        %v1771 = vadd.f32 %v1726, %v1743
        %v1772 = vadd.f32 %v1729, %v1743
        %v1773 = vadd.f32 %v1732, %v1743
        %v1774 = vadd.f32 %v1735, %v1743
        %v1775 = vadd.f32 %v1738, %v1743
        %v1776 = vadd.f32 %v1741, %v1743
        %vm1777 = vcmask 7168
        %1778 = vst.msk [vmem:[%s337] sm:$0xff] %vm1777, %v1745
        %1779 = vst.msk [vmem:[%s337 + $0x8] sm:$0xff] %vm1777, %v1746
        %1780 = vst.msk [vmem:[%s337 + $0x10] sm:$0xff] %vm1777, %v1747
        %1781 = vst.msk [vmem:[%s337 + $0x18] sm:$0xff] %vm1777, %v1748
        %1782 = vst.msk [vmem:[%s337 + $0x20] sm:$0xff] %vm1777, %v1749
        %1783 = vst.msk [vmem:[%s337 + $0x28] sm:$0xff] %vm1777, %v1750
        %1784 = vst.msk [vmem:[%s337 + $0x30] sm:$0xff] %vm1777, %v1751
        %1785 = vst.msk [vmem:[%s337 + $0x38] sm:$0xff] %vm1777, %v1752
        %1786 = vst.msk [vmem:[%s337 + $0x40] sm:$0xff] %vm1777, %v1753
        %1787 = vst.msk [vmem:[%s337 + $0x48] sm:$0xff] %vm1777, %v1754
        %1788 = vst.msk [vmem:[%s337 + $0x50] sm:$0xff] %vm1777, %v1755
        %1789 = vst.msk [vmem:[%s337 + $0x58] sm:$0xff] %vm1777, %v1756
        %1790 = vst.msk [vmem:[%s337 + $0x60] sm:$0xff] %vm1777, %v1757
        %1791 = vst.msk [vmem:[%s337 + $0x68] sm:$0xff] %vm1777, %v1758
        %1792 = vst.msk [vmem:[%s337 + $0x70] sm:$0xff] %vm1777, %v1759
        %1793 = vst.msk [vmem:[%s337 + $0x78] sm:$0xff] %vm1777, %v1760
        %1794 = vst.msk [vmem:[%s337 + $0x80] sm:$0xff] %vm1777, %v1761
        %1795 = vst.msk [vmem:[%s337 + $0x88] sm:$0xff] %vm1777, %v1762
        %1796 = vst.msk [vmem:[%s337 + $0x90] sm:$0xff] %vm1777, %v1763
        %1797 = vst.msk [vmem:[%s337 + $0x98] sm:$0xff] %vm1777, %v1764
        %1798 = vst.msk [vmem:[%s337 + $0xa0] sm:$0xff] %vm1777, %v1765
        %1799 = vst.msk [vmem:[%s337 + $0xa8] sm:$0xff] %vm1777, %v1766
        %1800 = vst.msk [vmem:[%s337 + $0xb0] sm:$0xff] %vm1777, %v1767
        %1801 = vst.msk [vmem:[%s337 + $0xb8] sm:$0xff] %vm1777, %v1768
        %1802 = vst.msk [vmem:[%s337 + $0xc0] sm:$0xff] %vm1777, %v1769
        %1803 = vst.msk [vmem:[%s337 + $0xc8] sm:$0xff] %vm1777, %v1770
        %1804 = vst.msk [vmem:[%s337 + $0xd0] sm:$0xff] %vm1777, %v1771
        %1805 = vst.msk [vmem:[%s337 + $0xd8] sm:$0xff] %vm1777, %v1772
        %1806 = vst.msk [vmem:[%s337 + $0xe0] sm:$0xff] %vm1777, %v1773
        %1807 = vst.msk [vmem:[%s337 + $0xe8] sm:$0xff] %vm1777, %v1774
        %1808 = vst.msk [vmem:[%s337 + $0xf0] sm:$0xff] %vm1777, %v1775
        %1809 = vst.msk [vmem:[%s337 + $0xf8] sm:$0xff] %vm1777, %v1776
        %s1810 = smul.u32 32, %s24
        %p1811 = scmp.lt.s32.totalorder %s1810, 63
        %s1812 = scalar_select %p1811, %s1810, 63
        %s1813 = smul.addr %s1812, 8
        %s1814 = scalar_lea.vmem %s7, %s1813
        // Predicated region
        $region61: #{tpu_custom_call.1} parent=47 // pred_check
          %p1815 = pneg %p194
        $region62: #{tpu_custom_call.1} parent=47 // pred_check_branch
          %1817 = sbr.rel (%p1815) target = $region64
        $region63: #{tpu_custom_call.1} parent=47 // pred_region
          %s1818 = smul.u32 32, %s24
        $region64: #{tpu_custom_call.1} parent=47 // pred_fallthru
          _
      $region48: #{tpu_custom_call.1} parent=5 // pred_fallthru
        _
      %p1819 = scmp.le.s32.totalorder 2, %s19
      // Predicated region
      $region65: #{tpu_custom_call.1} parent=5 // pred_check
        %p1820 = pneg %p1819
      $region66: #{tpu_custom_call.1} parent=5 // pred_check_branch
        %1822 = sbr.rel (%p1820) target = $region68
      $region67: #{tpu_custom_call.1} parent=5 // pred_region
        %s1823 = ssub.s32 %s19, 2
        // Predicated region
        $region69: #{tpu_custom_call.1} parent=67 // pred_check
          %p1824 = pneg %p200
        $region70: #{tpu_custom_call.1} parent=67 // pred_check_branch
          %1826 = sbr.rel (%p1824) target = $region72
        $region71: #{tpu_custom_call.1} parent=67 // pred_region
          %s1827 = smul.u32 32, %s25
          %p1828 = scmp.lt.s32.totalorder %s1827, 63
          %s1829 = scalar_select %p1828, %s1827, 63
          %s1830 = smul.addr %s1829, 8
          %s1831 = scalar_lea.vmem %s7, %s1830
        $region72: #{tpu_custom_call.1} parent=67 // pred_fallthru
          _
      $region68: #{tpu_custom_call.1} parent=5 // pred_fallthru
        _
    $region6: #{tpu_custom_call.1} parent=1 // loop_footer
      %s23 = sadd.s32 1, %s19
    $region7: #{tpu_custom_call.1} parent=1 // loop_footer_branch
      %18 = sbr.rel target = $region3
    $region8: #{tpu_custom_call.1} parent=1 // loop_exit
      _
    %1832 = vsyncpa [#allocation4], 1
    %s1833 = scalar_lea.sflag [#allocation4], 1
    %1834 = vsyncpa %s1833, 1
    %1835 = vsyncpa [#allocation6], 1

</llo_original>
